<compile_context>
chip_gen: v6e
topology: v6e:2x2x1
jax: 0.10.0
libtpu: 0.0.40
codegen_flags: <defaults>
</compile_context>

<pallas_src>
import functools

import numpy as np
import jax
import jax.numpy as jnp
from jax import lax
from jax.experimental import pallas as pl
from jax.experimental.pallas import tpu as pltpu

# Model hyper-parameters (from the PyTorch module __init__).
C1, K1, S1, P1 = 4, 12, 6, 3      # Conv1d(1 -> 4, k=12, s=6, p=3)
C2, K2, S2, P2 = 8, 9, 5, 2       # Conv1d(4 -> 8, k=9,  s=5, p=2)
HID = 8                            # LSTM hidden size (bidirectional -> 16)
G = 4 * HID                        # gates per direction
BN_EPS = 1e-5


def _conv_out_len(L, k, s, p):
    return (L + 2 * p - k) // s + 1


def _round_up(x, m):
    return ((x + m - 1) // m) * m


def _sig(v):
    # sigmoid(v) == 0.5*(tanh(v/2)+1): one EUP op, no VALU divide, no overflow.
    return 0.5 * (jnp.tanh(0.5 * v) + 1.0)


# ----------------------------------------------------------------------------
# Kernel.
# ----------------------------------------------------------------------------
def _eda_lstm_kernel(b_real, tb, l1, l2,
                     x1_ref, x2_ref,
                     w1bt_ref, b1t_ref, gamma_ref, beta_ref, sel_ref, selt_ref,
                     w2bt_ref, b2t_ref, wproj_ref, biasall_ref,
                     whh_ref, wfcf_ref, wfcb_ref, bfc_ref,
                     out_ref,
                     sum_ref, sq_ref):
    p = pl.program_id(0)            # 0: BN-statistics pass, 1: full forward
    tile = pl.program_id(1)         # batch tile index

    x = x1_ref[...] + x2_ref[...]                              # (tb, L)

    # Conv1d(1->4) + ReLU as ONE banded matmul, produced directly in
    # (feature, batch) layout (batch on the lane axis).  Zero padding of the
    # conv is folded into the banded weight (padded taps simply have 0 rows).
    y1 = jnp.maximum(
        lax.dot_general(w1bt_ref[...], x, (((1,), (1,)), ((), ())),
                        preferred_element_type=jnp.float32) + b1t_ref[...],
        0.0)                                                   # (l1*C1, tb)

    @pl.when((p == 0) & (tile == 0))
    def _init_acc():
        sum_ref[...] = jnp.zeros_like(sum_ref)
        sq_ref[...] = jnp.zeros_like(sq_ref)

    @pl.when(p == 0)
    def _bn_stats():
        # Accumulate per-(position, channel) sums over the REAL batch only.
        lane = lax.broadcasted_iota(jnp.int32, (1, tb), 1) + tile * tb
        ym = jnp.where(lane < b_real, y1, 0.0)
        sum_ref[...] += jnp.sum(ym, axis=1, keepdims=True)
        sq_ref[...] += jnp.sum(ym * ym, axis=1, keepdims=True)
        out_ref[...] = jnp.zeros((1, 1, tb), jnp.float32)      # dummy plane 0

    @pl.when(p == 1)
    def _forward():
        # ---- BatchNorm1d(4): training-mode full-batch stats, biased variance.
        inv_n = 1.0 / float(b_real * l1)
        ch_sum = jnp.dot(selt_ref[...], sum_ref[...],
                         preferred_element_type=jnp.float32)   # (C1, 1)
        ch_sq = jnp.dot(selt_ref[...], sq_ref[...],
                        preferred_element_type=jnp.float32)    # (C1, 1)
        mean = ch_sum * inv_n
        var = jnp.maximum(ch_sq * inv_n - mean * mean, 0.0)
        scale = gamma_ref[...] * lax.rsqrt(var + BN_EPS)       # (C1, 1)
        shift = beta_ref[...] - mean * scale
        scale_f = jnp.dot(sel_ref[...], scale,
                          preferred_element_type=jnp.float32)  # (l1*C1, 1)
        shift_f = jnp.dot(sel_ref[...], shift,
                          preferred_element_type=jnp.float32)
        y1n = y1 * scale_f + shift_f                           # (l1*C1, tb)

        # ---- Conv1d(4->8) + ReLU as one banded matmul.
        h2 = jnp.maximum(
            jnp.dot(w2bt_ref[...], y1n, preferred_element_type=jnp.float32)
            + b2t_ref[...], 0.0)                               # (l2*C2, tb)

        # ---- LSTM input projection for all forward steps + the backward last
        # step, hoisted out of the recurrence (block-diagonal weight, biases
        # folded in once).
        xp = (jnp.dot(wproj_ref[...], h2, preferred_element_type=jnp.float32)
              + biasall_ref[...])                              # (l2*G + G, tb)

        whh = whh_ref[...]                                     # (G, HID)
        hf = jnp.zeros((HID, tb), jnp.float32)
        cf = jnp.zeros((HID, tb), jnp.float32)
        for t in range(l2):                                    # unrolled, small
            gates = xp[t * G:(t + 1) * G, :] + jnp.dot(
                whh, hf, preferred_element_type=jnp.float32)   # (G, tb)
            ig = _sig(gates[0 * HID:1 * HID])
            fg = _sig(gates[1 * HID:2 * HID])
            gg = jnp.tanh(gates[2 * HID:3 * HID])
            og = _sig(gates[3 * HID:4 * HID])
            cf = fg * cf + ig * gg
            hf = og * jnp.tanh(cf)

        # Backward direction: fc only consumes output[:, -1, :], i.e. the
        # backward direction's first step from a zero state.
        gb = xp[l2 * G:(l2 + 1) * G, :]
        ib = _sig(gb[0 * HID:1 * HID])
        ggb = jnp.tanh(gb[2 * HID:3 * HID])
        ob = _sig(gb[3 * HID:4 * HID])
        hb = ob * jnp.tanh(ib * ggb)                           # (HID, tb)

        # ---- fc: Linear(16, 1) + Sigmoid (lane-dense (1, tb) output).
        logits = (jnp.dot(wfcf_ref[...], hf, preferred_element_type=jnp.float32)
                  + jnp.dot(wfcb_ref[...], hb, preferred_element_type=jnp.float32)
                  + bfc_ref[...])                              # (1, tb)
        out_ref[...] = _sig(logits).reshape(1, 1, tb)


# ----------------------------------------------------------------------------
# Wrapper.
# ----------------------------------------------------------------------------
def eda_lstm_forward(x1, x2, packed_params, tb=None):
    B, L = x1.shape
    L1 = _conv_out_len(L, K1, S1, P1)
    L2 = _conv_out_len(L1, K2, S2, P2)
    assert L2 >= 1

    # Batch tile: multiple of 8 sublanes; tb=1024 keeps double-buffered input
    # DMA at ~4 MiB -> safe under v5e(16)/v6e(32)/v7x(32) MiB scoped VMEM.
    if tb is None:
        tb = min(1024, _round_up(B, 8))
    tb = _round_up(max(tb, 8), 8)
    B_pad = _round_up(B, tb)
    num_tiles = B_pad // tb
    if num_tiles > 1 and tb % 128 != 0:
        raise ValueError("with more than one batch tile, tb must be a "
                         "multiple of 128 (lane-dense output blocks)")

    if B_pad != B:
        pad = ((0, B_pad - B), (0, 0))
        x1 = jnp.pad(x1, pad)
        x2 = jnp.pad(x2, pad)

    kern = functools.partial(_eda_lstm_kernel, B, tb, L1, L2)

    x_spec = pl.BlockSpec((tb, L), lambda p, i: (i, 0))
    w_specs = [pl.BlockSpec(w.shape, lambda p, i: (0, 0))     # resident weights
               for w in packed_params]

    out = pl.pallas_call(
        kern,
        out_shape=jax.ShapeDtypeStruct((2, 1, B_pad), jnp.float32),
        grid=(2, num_tiles),                 # pass (BN stats / forward), tile
        in_specs=[x_spec, x_spec] + w_specs,
        out_specs=pl.BlockSpec((1, 1, tb), lambda p, i: (p, 0, i)),
        scratch_shapes=[pltpu.VMEM((L1 * C1, 1), jnp.float32),   # BN sum
                        pltpu.VMEM((L1 * C1, 1), jnp.float32)],  # BN sum of sq
        compiler_params=pltpu.CompilerParams(
            # Both axes sequential: pass 1 depends on pass-0 accumulation over
            # ALL tiles (full-batch BatchNorm statistics).
            dimension_semantics=("arbitrary", "arbitrary")),
    )(x1, x2, *packed_params)
    return out[1, 0, :B]                     # plane 1 = forward pass results


# ----------------------------------------------------------------------------
# Parameter construction (PyTorch layout, deterministic) and host-side packing
# into banded / block-diagonal kernel weights.
# ----------------------------------------------------------------------------
def init_params(key):
    ks = jax.random.split(key, 12)
    p = {}
    p['w1'] = jax.random.normal(ks[0], (C1, 1, K1), jnp.float32) * (2.0 / (1 * K1)) ** 0.5
    p['b1'] = jnp.zeros((C1,), jnp.float32)
    p['gamma'] = jnp.ones((C1,), jnp.float32)
    p['beta'] = jnp.zeros((C1,), jnp.float32)
    p['w2'] = jax.random.normal(ks[1], (C2, C1, K2), jnp.float32) * (2.0 / (C1 * K2)) ** 0.5
    p['b2'] = jnp.zeros((C2,), jnp.float32)
    stdv = 1.0 / (HID ** 0.5)

    def u(k, shape):
        return jax.random.uniform(k, shape, jnp.float32, -stdv, stdv)

    p['wih_f'] = u(ks[2], (G, C2))
    p['whh_f'] = u(ks[3], (G, HID))
    p['bih_f'] = u(ks[4], (G,))
    p['bhh_f'] = u(ks[5], (G,))
    p['wih_b'] = u(ks[6], (G, C2))
    p['whh_b'] = u(ks[7], (G, HID))
    p['bih_b'] = u(ks[8], (G,))
    p['bhh_b'] = u(ks[9], (G,))
    p['wfc'] = jax.random.normal(ks[10], (1, 2 * HID), jnp.float32) * (2.0 / (2 * HID + 1)) ** 0.5
    p['bfc'] = jnp.zeros((1,), jnp.float32)
    return p


def pack_params(p, L):
    """Fold the convs / LSTM input projection into banded matmul weights."""
    L1 = _conv_out_len(L, K1, S1, P1)
    L2 = _conv_out_len(L1, K2, S2, P2)

    # Conv1: (L1*C1, L) banded weight; row t*C1+c, column = input position.
    w1 = np.asarray(p['w1'], np.float32)                       # (C1, 1, K1)
    w1bt = np.zeros((L1 * C1, L), np.float32)
    for t in range(L1):
        s = t * S1 - P1
        for k in range(K1):
            l = s + k
            if 0 <= l < L:
                for c in range(C1):
                    w1bt[t * C1 + c, l] = w1[c, 0, k]
    b1t = np.tile(np.asarray(p['b1'], np.float32), L1).reshape(L1 * C1, 1)

    gamma = np.asarray(p['gamma'], np.float32).reshape(C1, 1)
    beta = np.asarray(p['beta'], np.float32).reshape(C1, 1)

    # Channel gather/scatter matrices for BN statistics in the fused layout.
    sel = np.zeros((L1 * C1, C1), np.float32)
    for t in range(L1):
        for c in range(C1):
            sel[t * C1 + c, c] = 1.0
    selt = np.ascontiguousarray(sel.T)

    # Conv2: (L2*C2, L1*C1) banded weight.
    w2 = np.asarray(p['w2'], np.float32)                       # (C2, C1, K2)
    w2bt = np.zeros((L2 * C2, L1 * C1), np.float32)
    for t in range(L2):
        s = t * S2 - P2
        for k in range(K2):
            ti = s + k
            if 0 <= ti < L1:
                for co in range(C2):
                    for ci in range(C1):
                        w2bt[t * C2 + co, ti * C1 + ci] = w2[co, ci, k]
    b2t = np.tile(np.asarray(p['b2'], np.float32), L2).reshape(L2 * C2, 1)

    # LSTM input projection: block-diagonal forward steps + backward last step.
    wih_f = np.asarray(p['wih_f'], np.float32)                 # (G, C2)
    wih_b = np.asarray(p['wih_b'], np.float32)
    wproj = np.zeros((L2 * G + G, L2 * C2), np.float32)
    for t in range(L2):
        wproj[t * G:(t + 1) * G, t * C2:(t + 1) * C2] = wih_f
    wproj[L2 * G:, (L2 - 1) * C2:] = wih_b
    bias_f = np.asarray(p['bih_f'], np.float32) + np.asarray(p['bhh_f'], np.float32)
    bias_b = np.asarray(p['bih_b'], np.float32) + np.asarray(p['bhh_b'], np.float32)
    bias_all = np.concatenate([np.tile(bias_f, L2), bias_b]).reshape(L2 * G + G, 1)

    whh_f = np.asarray(p['whh_f'], np.float32)                 # (G, HID)
    wfc = np.asarray(p['wfc'], np.float32)                     # (1, 2*HID)
    wfc_f = np.ascontiguousarray(wfc[:, :HID])                 # (1, HID)
    wfc_b = np.ascontiguousarray(wfc[:, HID:])
    bfc = np.asarray(p['bfc'], np.float32).reshape(1, 1)

    arrs = (w1bt, b1t, gamma, beta, sel, selt, w2bt, b2t, wproj, bias_all,
            whh_f, wfc_f, wfc_b, bfc)
    return tuple(jnp.asarray(a) for a in arrs)


# ----------------------------------------------------------------------------
# Pure-JAX reference (independent of the kernel) for a sanity check.
# ----------------------------------------------------------------------------
def reference_forward(x1, x2, p):
    x = (x1 + x2)[:, None, :]                                  # (B, 1, L)
    dn = ('NCH', 'OIH', 'NCH')
    y = lax.conv_general_dilated(x, p['w1'], (S1,), [(P1, P1)],
                                 dimension_numbers=dn)
    y = jnp.maximum(y + p['b1'][None, :, None], 0.0)
    mean = jnp.mean(y, axis=(0, 2), keepdims=True)
    var = jnp.mean((y - mean) ** 2, axis=(0, 2), keepdims=True)
    y = ((y - mean) / jnp.sqrt(var + BN_EPS)
         * p['gamma'][None, :, None] + p['beta'][None, :, None])
    y = lax.conv_general_dilated(y, p['w2'], (S2,), [(P2, P2)],
                                 dimension_numbers=dn)
    y = jnp.maximum(y + p['b2'][None, :, None], 0.0)
    xs = jnp.transpose(y, (0, 2, 1))                           # (B, T, C2)

    def run_dir(seq, wih, whh, bih, bhh):
        B, T, _ = seq.shape
        h = jnp.zeros((B, HID), jnp.float32)
        c = jnp.zeros((B, HID), jnp.float32)
        outs = []
        for t in range(T):
            g = seq[:, t, :] @ wih.T + bih + h @ whh.T + bhh
            i = _sig(g[:, :HID])
            f = _sig(g[:, HID:2 * HID])
            gg = jnp.tanh(g[:, 2 * HID:3 * HID])
            o = _sig(g[:, 3 * HID:])
            c = f * c + i * gg
            h = o * jnp.tanh(c)
            outs.append(h)
        return jnp.stack(outs, axis=1)                         # (B, T, HID)

    out_f = run_dir(xs, p['wih_f'], p['whh_f'], p['bih_f'], p['bhh_f'])
    out_b = run_dir(xs[:, ::-1, :], p['wih_b'], p['whh_b'],
                    p['bih_b'], p['bhh_b'])[:, ::-1, :]
    last = jnp.concatenate([out_f[:, -1, :], out_b[:, -1, :]], axis=-1)
    logits = last @ p['wfc'].T + p['bfc']
    return _sig(logits)[:, 0]


if __name__ == "__main__":
    key = jax.random.PRNGKey(0)
    k1, k2, k3, k4, kp = jax.random.split(key, 5)
    params = init_params(kp)

    L = 120                                                    # -> L1=20, T=4
    packed = pack_params(params, L)

    # Small demo (single batch tile): B=2.
    x1 = jax.random.normal(k1, (2, L), jnp.float32)
    x2 = jax.random.normal(k2, (2, L), jnp.float32)
    out = jax.block_until_ready(eda_lstm_forward(x1, x2, packed))
    assert out.shape == (2,)
    ref = reference_forward(x1, x2, params)
    # Tolerance covers XLA-vs-MXU default f32 matmul precision; typical
    # deviation observed is ~1e-4.
    if not jnp.allclose(out, ref, atol=5e-3, rtol=5e-3):
        raise AssertionError(f"kernel {out} != reference {ref}")

    # Multi-tile path: exercises the pipelined batch grid, cross-tile BN
    # statistics accumulation and padded-row masking (B=300, tile=128 -> 3
    # tiles, last tile only partially valid).
    xb1 = jax.random.normal(k3, (300, L), jnp.float32)
    xb2 = jax.random.normal(k4, (300, L), jnp.float32)
    out2 = jax.block_until_ready(eda_lstm_forward(xb1, xb2, packed, tb=128))
    ref2 = reference_forward(xb1, xb2, params)
    if not jnp.allclose(out2, ref2, atol=5e-3, rtol=5e-3):
        diff = float(jnp.max(jnp.abs(out2 - ref2)))
        raise AssertionError(f"multi-tile kernel mismatch, max|diff|={diff}")

    print("KERNEL_OK")
</pallas_src>

<mosaic_0001>
module attributes {stable_mosaic.version = 11 : i64} {
  func.func @_eda_lstm_kernel(%arg0: i32, %arg1: i32, %arg2: memref<8x120xf32, #tpu.memory_space<vmem>>, %arg3: memref<8x120xf32, #tpu.memory_space<vmem>>, %arg4: memref<80x120xf32, #tpu.memory_space<vmem>>, %arg5: memref<80x1xf32, #tpu.memory_space<vmem>>, %arg6: memref<4x1xf32, #tpu.memory_space<vmem>>, %arg7: memref<4x1xf32, #tpu.memory_space<vmem>>, %arg8: memref<80x4xf32, #tpu.memory_space<vmem>>, %arg9: memref<4x80xf32, #tpu.memory_space<vmem>>, %arg10: memref<32x80xf32, #tpu.memory_space<vmem>>, %arg11: memref<32x1xf32, #tpu.memory_space<vmem>>, %arg12: memref<160x32xf32, #tpu.memory_space<vmem>>, %arg13: memref<160x1xf32, #tpu.memory_space<vmem>>, %arg14: memref<32x8xf32, #tpu.memory_space<vmem>>, %arg15: memref<1x8xf32, #tpu.memory_space<vmem>>, %arg16: memref<1x8xf32, #tpu.memory_space<vmem>>, %arg17: memref<1x1xf32, #tpu.memory_space<vmem>>, %arg18: memref<1x1x8xf32, #tpu.memory_space<vmem>>, %arg19: memref<80x1xf32, #tpu.memory_space<vmem>>, %arg20: memref<80x1xf32, #tpu.memory_space<vmem>>) attributes {dimension_semantics = [#tpu.dimension_semantics<arbitrary>, #tpu.dimension_semantics<arbitrary>], iteration_bounds = array<i64: 2, 1>, scalar_prefetch = 0 : i64, scratch_operands = 2 : i64, tpu.core_type = #tpu.core_type<tc>, window_params = [{transform_indices = @transform_0, window_bounds = array<i64: 8, 120>}, {transform_indices = @transform_1, window_bounds = array<i64: 8, 120>}, {pipeline_mode = #tpu.pipeline_mode<synchronous>, transform_indices = @transform_2, window_bounds = array<i64: 80, 120>}, {pipeline_mode = #tpu.pipeline_mode<synchronous>, transform_indices = @transform_3, window_bounds = array<i64: 80, 1>}, {pipeline_mode = #tpu.pipeline_mode<synchronous>, transform_indices = @transform_4, window_bounds = array<i64: 4, 1>}, {pipeline_mode = #tpu.pipeline_mode<synchronous>, transform_indices = @transform_5, window_bounds = array<i64: 4, 1>}, {pipeline_mode = #tpu.pipeline_mode<synchronous>, transform_indices = @transform_6, window_bounds = array<i64: 80, 4>}, {pipeline_mode = #tpu.pipeline_mode<synchronous>, transform_indices = @transform_7, window_bounds = array<i64: 4, 80>}, {pipeline_mode = #tpu.pipeline_mode<synchronous>, transform_indices = @transform_8, window_bounds = array<i64: 32, 80>}, {pipeline_mode = #tpu.pipeline_mode<synchronous>, transform_indices = @transform_9, window_bounds = array<i64: 32, 1>}, {pipeline_mode = #tpu.pipeline_mode<synchronous>, transform_indices = @transform_10, window_bounds = array<i64: 160, 32>}, {pipeline_mode = #tpu.pipeline_mode<synchronous>, transform_indices = @transform_11, window_bounds = array<i64: 160, 1>}, {pipeline_mode = #tpu.pipeline_mode<synchronous>, transform_indices = @transform_12, window_bounds = array<i64: 32, 8>}, {pipeline_mode = #tpu.pipeline_mode<synchronous>, transform_indices = @transform_13, window_bounds = array<i64: 1, 8>}, {pipeline_mode = #tpu.pipeline_mode<synchronous>, transform_indices = @transform_14, window_bounds = array<i64: 1, 8>}, {pipeline_mode = #tpu.pipeline_mode<synchronous>, transform_indices = @transform_15, window_bounds = array<i64: 1, 1>}, {transform_indices = @transform_16, window_bounds = array<i64: 1, 1, 8>}]} {
    %c0 = arith.constant 0 : index
    %c0_0 = arith.constant 0 : index
    %0 = vector.load %arg2[%c0, %c0_0] : memref<8x120xf32, #tpu.memory_space<vmem>>, vector<8x120xf32>
    %c0_1 = arith.constant 0 : index
    %c0_2 = arith.constant 0 : index
    %1 = vector.load %arg3[%c0_1, %c0_2] : memref<8x120xf32, #tpu.memory_space<vmem>>, vector<8x120xf32>
    %2 = arith.addf %0, %1 : vector<8x120xf32>
    %c0_3 = arith.constant 0 : index
    %c0_4 = arith.constant 0 : index
    %3 = vector.load %arg4[%c0_3, %c0_4] : memref<80x120xf32, #tpu.memory_space<vmem>>, vector<80x120xf32>
    %cst = arith.constant dense<0.000000e+00> : vector<80x8xf32>
    %4 = tpu.matmul %3, %2, %cst {dimension_numbers = #tpu.dot_dimension_numbers<[1], [1], [0], [0], [0, 0, 1, 0], [], []>} : vector<80x120xf32>, vector<8x120xf32>, vector<80x8xf32> -> vector<80x8xf32>
    %c0_5 = arith.constant 0 : index
    %c0_6 = arith.constant 0 : index
    %5 = vector.load %arg5[%c0_5, %c0_6] : memref<80x1xf32, #tpu.memory_space<vmem>>, vector<80x1xf32>
    %6 = vector.broadcast %5 : vector<80x1xf32> to vector<80x8xf32>
    %7 = arith.addf %4, %6 : vector<80x8xf32>
    %cst_7 = arith.constant 0.000000e+00 : f32
    %8 = vector.broadcast %cst_7 : f32 to vector<80x8xf32>
    %9 = arith.maximumf %7, %8 : vector<80x8xf32>
    %c0_i32 = arith.constant 0 : i32
    %10 = arith.cmpi eq, %arg0, %c0_i32 : i32
    %c0_i32_8 = arith.constant 0 : i32
    %11 = arith.cmpi eq, %arg1, %c0_i32_8 : i32
    %12 = arith.andi %10, %11 : i1
    %13 = arith.extui %12 : i1 to i32
    %c0_i32_9 = arith.constant 0 : i32
    %14 = arith.cmpi ne, %13, %c0_i32_9 : i32
    scf.if %14 {
      %cst_13 = arith.constant 0.000000e+00 : f32
      %21 = vector.broadcast %cst_13 : f32 to vector<80x1xf32>
      %c0_14 = arith.constant 0 : index
      %c0_15 = arith.constant 0 : index
      %22 = vector.load %arg19[%c0_14, %c0_15] : memref<80x1xf32, #tpu.memory_space<vmem>>, vector<80x1xf32>
      tpu.vector_store %arg19[%c0_14, %c0_15], %21 {strides = array<i32>} : memref<80x1xf32, #tpu.memory_space<vmem>>, vector<80x1xf32>,
      %cst_16 = arith.constant 0.000000e+00 : f32
      %23 = vector.broadcast %cst_16 : f32 to vector<80x1xf32>
      %c0_17 = arith.constant 0 : index
      %c0_18 = arith.constant 0 : index
      %24 = vector.load %arg20[%c0_17, %c0_18] : memref<80x1xf32, #tpu.memory_space<vmem>>, vector<80x1xf32>
      tpu.vector_store %arg20[%c0_17, %c0_18], %23 {strides = array<i32>} : memref<80x1xf32, #tpu.memory_space<vmem>>, vector<80x1xf32>,
    } else {
    }
    %c0_i32_10 = arith.constant 0 : i32
    %15 = arith.cmpi eq, %arg0, %c0_i32_10 : i32
    %16 = arith.extui %15 : i1 to i32
    %c0_i32_11 = arith.constant 0 : i32
    %17 = arith.cmpi ne, %16, %c0_i32_11 : i32
    scf.if %17 {
      %21 = tpu.iota {dimensions = array<i32: 1>} : vector<1x8xi32>
      %c8_i32 = arith.constant 8 : i32
      %22 = arith.muli %arg1, %c8_i32 : i32
      %23 = vector.broadcast %22 : i32 to vector<1x8xi32>
      %24 = arith.addi %21, %23 : vector<1x8xi32>
      %c2_i32 = arith.constant 2 : i32
      %25 = vector.broadcast %c2_i32 : i32 to vector<1x8xi32>
      %26 = arith.cmpi slt, %24, %25 : vector<1x8xi32>
      %cst_13 = arith.constant 0.000000e+00 : f32
      %27 = vector.shape_cast %26 : vector<1x8xi1> to vector<1x8xi1>
      %28 = vector.broadcast %27 : vector<1x8xi1> to vector<80x8xi1>
      %29 = vector.broadcast %cst_13 : f32 to vector<80x8xf32>
      %30 = arith.select %28, %9, %29 : vector<80x8xi1>, vector<80x8xf32>
      %c0_14 = arith.constant 0 : index
      %c0_15 = arith.constant 0 : index
      %31 = vector.load %arg19[%c0_14, %c0_15] : memref<80x1xf32, #tpu.memory_space<vmem>>, vector<80x1xf32>
      %cst_16 = arith.constant dense<0.000000e+00> : vector<80xf32>
      %32 = vector.multi_reduction <add>, %30, %cst_16 [1] : vector<80x8xf32> to vector<80xf32>
      %33 = vector.shape_cast %32 : vector<80xf32> to vector<80x1xf32>
      %34 = arith.addf %31, %33 : vector<80x1xf32>
      %c0_17 = arith.constant 0 : index
      %c0_18 = arith.constant 0 : index
      %35 = vector.load %arg19[%c0_17, %c0_18] : memref<80x1xf32, #tpu.memory_space<vmem>>, vector<80x1xf32>
      tpu.vector_store %arg19[%c0_17, %c0_18], %34 {strides = array<i32>} : memref<80x1xf32, #tpu.memory_space<vmem>>, vector<80x1xf32>,
      %c0_19 = arith.constant 0 : index
      %c0_20 = arith.constant 0 : index
      %36 = vector.load %arg20[%c0_19, %c0_20] : memref<80x1xf32, #tpu.memory_space<vmem>>, vector<80x1xf32>
      %37 = arith.mulf %30, %30 : vector<80x8xf32>
      %cst_21 = arith.constant dense<0.000000e+00> : vector<80xf32>
      %38 = vector.multi_reduction <add>, %37, %cst_21 [1] : vector<80x8xf32> to vector<80xf32>
      %39 = vector.shape_cast %38 : vector<80xf32> to vector<80x1xf32>
      %40 = arith.addf %36, %39 : vector<80x1xf32>
      %c0_22 = arith.constant 0 : index
      %c0_23 = arith.constant 0 : index
      %41 = vector.load %arg20[%c0_22, %c0_23] : memref<80x1xf32, #tpu.memory_space<vmem>>, vector<80x1xf32>
      tpu.vector_store %arg20[%c0_22, %c0_23], %40 {strides = array<i32>} : memref<80x1xf32, #tpu.memory_space<vmem>>, vector<80x1xf32>,
      %cst_24 = arith.constant 0.000000e+00 : f32
      %42 = vector.broadcast %cst_24 : f32 to vector<1x1x8xf32>
      %c0_25 = arith.constant 0 : index
      %c0_26 = arith.constant 0 : index
      %c0_27 = arith.constant 0 : index
      %43 = vector.load %arg18[%c0_25, %c0_26, %c0_27] : memref<1x1x8xf32, #tpu.memory_space<vmem>>, vector<1x1x8xf32>
      tpu.vector_store %arg18[%c0_25, %c0_26, %c0_27], %42 {strides = array<i32>} : memref<1x1x8xf32, #tpu.memory_space<vmem>>, vector<1x1x8xf32>,
    } else {
    }
    %c1_i32 = arith.constant 1 : i32
    %18 = arith.cmpi eq, %arg0, %c1_i32 : i32
    %19 = arith.extui %18 : i1 to i32
    %c0_i32_12 = arith.constant 0 : i32
    %20 = arith.cmpi ne, %19, %c0_i32_12 : i32
    scf.if %20 {
      %c0_13 = arith.constant 0 : index
      %c0_14 = arith.constant 0 : index
      %21 = vector.load %arg9[%c0_13, %c0_14] : memref<4x80xf32, #tpu.memory_space<vmem>>, vector<4x80xf32>
      %c0_15 = arith.constant 0 : index
      %c0_16 = arith.constant 0 : index
      %22 = vector.load %arg19[%c0_15, %c0_16] : memref<80x1xf32, #tpu.memory_space<vmem>>, vector<80x1xf32>
      %cst_17 = arith.constant dense<0.000000e+00> : vector<4x1xf32>
      %23 = tpu.matmul %21, %22, %cst_17 {dimension_numbers = #tpu.dot_dimension_numbers<[1], [0], [0], [1], [0, 0, 1, 1], [], []>} : vector<4x80xf32>, vector<80x1xf32>, vector<4x1xf32> -> vector<4x1xf32>
      %c0_18 = arith.constant 0 : index
      %c0_19 = arith.constant 0 : index
      %24 = vector.load %arg9[%c0_18, %c0_19] : memref<4x80xf32, #tpu.memory_space<vmem>>, vector<4x80xf32>
      %c0_20 = arith.constant 0 : index
      %c0_21 = arith.constant 0 : index
      %25 = vector.load %arg20[%c0_20, %c0_21] : memref<80x1xf32, #tpu.memory_space<vmem>>, vector<80x1xf32>
      %cst_22 = arith.constant dense<0.000000e+00> : vector<4x1xf32>
      %26 = tpu.matmul %24, %25, %cst_22 {dimension_numbers = #tpu.dot_dimension_numbers<[1], [0], [0], [1], [0, 0, 1, 1], [], []>} : vector<4x80xf32>, vector<80x1xf32>, vector<4x1xf32> -> vector<4x1xf32>
      %cst_23 = arith.constant 2.500000e-02 : f32
      %27 = vector.broadcast %cst_23 : f32 to vector<4x1xf32>
      %28 = arith.mulf %23, %27 : vector<4x1xf32>
      %cst_24 = arith.constant 2.500000e-02 : f32
      %29 = vector.broadcast %cst_24 : f32 to vector<4x1xf32>
      %30 = arith.mulf %26, %29 : vector<4x1xf32>
      %31 = arith.mulf %28, %28 : vector<4x1xf32>
      %32 = arith.subf %30, %31 : vector<4x1xf32>
      %cst_25 = arith.constant 0.000000e+00 : f32
      %33 = vector.broadcast %cst_25 : f32 to vector<4x1xf32>
      %34 = arith.maximumf %32, %33 : vector<4x1xf32>
      %c0_26 = arith.constant 0 : index
      %c0_27 = arith.constant 0 : index
      %35 = vector.load %arg6[%c0_26, %c0_27] : memref<4x1xf32, #tpu.memory_space<vmem>>, vector<4x1xf32>
      %cst_28 = arith.constant 9.99999974E-6 : f32
      %36 = vector.broadcast %cst_28 : f32 to vector<4x1xf32>
      %37 = arith.addf %34, %36 : vector<4x1xf32>
      %38 = math.rsqrt %37 : vector<4x1xf32>
      %39 = arith.mulf %35, %38 : vector<4x1xf32>
      %c0_29 = arith.constant 0 : index
      %c0_30 = arith.constant 0 : index
      %40 = vector.load %arg7[%c0_29, %c0_30] : memref<4x1xf32, #tpu.memory_space<vmem>>, vector<4x1xf32>
      %41 = arith.mulf %28, %39 : vector<4x1xf32>
      %42 = arith.subf %40, %41 : vector<4x1xf32>
      %c0_31 = arith.constant 0 : index
      %c0_32 = arith.constant 0 : index
      %43 = vector.load %arg8[%c0_31, %c0_32] : memref<80x4xf32, #tpu.memory_space<vmem>>, vector<80x4xf32>
      %cst_33 = arith.constant dense<0.000000e+00> : vector<80x1xf32>
      %44 = tpu.matmul %43, %39, %cst_33 {dimension_numbers = #tpu.dot_dimension_numbers<[1], [0], [0], [1], [0, 0, 1, 1], [], []>} : vector<80x4xf32>, vector<4x1xf32>, vector<80x1xf32> -> vector<80x1xf32>
      %c0_34 = arith.constant 0 : index
      %c0_35 = arith.constant 0 : index
      %45 = vector.load %arg8[%c0_34, %c0_35] : memref<80x4xf32, #tpu.memory_space<vmem>>, vector<80x4xf32>
      %cst_36 = arith.constant dense<0.000000e+00> : vector<80x1xf32>
      %46 = tpu.matmul %45, %42, %cst_36 {dimension_numbers = #tpu.dot_dimension_numbers<[1], [0], [0], [1], [0, 0, 1, 1], [], []>} : vector<80x4xf32>, vector<4x1xf32>, vector<80x1xf32> -> vector<80x1xf32>
      %47 = vector.broadcast %44 : vector<80x1xf32> to vector<80x8xf32>
      %48 = arith.mulf %9, %47 : vector<80x8xf32>
      %49 = vector.broadcast %46 : vector<80x1xf32> to vector<80x8xf32>
      %50 = arith.addf %48, %49 : vector<80x8xf32>
      %c0_37 = arith.constant 0 : index
      %c0_38 = arith.constant 0 : index
      %51 = vector.load %arg10[%c0_37, %c0_38] : memref<32x80xf32, #tpu.memory_space<vmem>>, vector<32x80xf32>
      %cst_39 = arith.constant dense<0.000000e+00> : vector<32x8xf32>
      %52 = tpu.matmul %51, %50, %cst_39 {dimension_numbers = #tpu.dot_dimension_numbers<[1], [0], [0], [1], [0, 0, 1, 1], [], []>} : vector<32x80xf32>, vector<80x8xf32>, vector<32x8xf32> -> vector<32x8xf32>
      %c0_40 = arith.constant 0 : index
      %c0_41 = arith.constant 0 : index
      %53 = vector.load %arg11[%c0_40, %c0_41] : memref<32x1xf32, #tpu.memory_space<vmem>>, vector<32x1xf32>
      %54 = vector.broadcast %53 : vector<32x1xf32> to vector<32x8xf32>
      %55 = arith.addf %52, %54 : vector<32x8xf32>
      %cst_42 = arith.constant 0.000000e+00 : f32
      %56 = vector.broadcast %cst_42 : f32 to vector<32x8xf32>
      %57 = arith.maximumf %55, %56 : vector<32x8xf32>
      %c0_43 = arith.constant 0 : index
      %c0_44 = arith.constant 0 : index
      %58 = vector.load %arg12[%c0_43, %c0_44] : memref<160x32xf32, #tpu.memory_space<vmem>>, vector<160x32xf32>
      %cst_45 = arith.constant dense<0.000000e+00> : vector<160x8xf32>
      %59 = tpu.matmul %58, %57, %cst_45 {dimension_numbers = #tpu.dot_dimension_numbers<[1], [0], [0], [1], [0, 0, 1, 1], [], []>} : vector<160x32xf32>, vector<32x8xf32>, vector<160x8xf32> -> vector<160x8xf32>
      %c0_46 = arith.constant 0 : index
      %c0_47 = arith.constant 0 : index
      %60 = vector.load %arg13[%c0_46, %c0_47] : memref<160x1xf32, #tpu.memory_space<vmem>>, vector<160x1xf32>
      %61 = vector.broadcast %60 : vector<160x1xf32> to vector<160x8xf32>
      %62 = arith.addf %59, %61 : vector<160x8xf32>
      %c0_48 = arith.constant 0 : index
      %c0_49 = arith.constant 0 : index
      %63 = vector.load %arg14[%c0_48, %c0_49] : memref<32x8xf32, #tpu.memory_space<vmem>>, vector<32x8xf32>
      %cst_50 = arith.constant 0.000000e+00 : f32
      %64 = vector.broadcast %cst_50 : f32 to vector<8x8xf32>
      %cst_51 = arith.constant 0.000000e+00 : f32
      %65 = vector.broadcast %cst_51 : f32 to vector<8x8xf32>
      %66 = vector.extract_strided_slice %62 {offsets = [0, 0], sizes = [32, 8], strides = [1, 1]} : vector<160x8xf32> to vector<32x8xf32>
      %cst_52 = arith.constant dense<0.000000e+00> : vector<32x8xf32>
      %67 = tpu.matmul %63, %64, %cst_52 {dimension_numbers = #tpu.dot_dimension_numbers<[1], [0], [0], [1], [0, 0, 1, 1], [], []>} : vector<32x8xf32>, vector<8x8xf32>, vector<32x8xf32> -> vector<32x8xf32>
      %68 = arith.addf %66, %67 : vector<32x8xf32>
      %69 = vector.extract_strided_slice %68 {offsets = [0, 0], sizes = [8, 8], strides = [1, 1]} : vector<32x8xf32> to vector<8x8xf32>
      %cst_53 = arith.constant 5.000000e-01 : f32
      %70 = vector.broadcast %cst_53 : f32 to vector<8x8xf32>
      %71 = arith.mulf %70, %69 : vector<8x8xf32>
      %72 = math.tanh %71 : vector<8x8xf32>
      %cst_54 = arith.constant 1.000000e+00 : f32
      %73 = vector.broadcast %cst_54 : f32 to vector<8x8xf32>
      %74 = arith.addf %72, %73 : vector<8x8xf32>
      %cst_55 = arith.constant 5.000000e-01 : f32
      %75 = vector.broadcast %cst_55 : f32 to vector<8x8xf32>
      %76 = arith.mulf %75, %74 : vector<8x8xf32>
      %77 = vector.extract_strided_slice %68 {offsets = [8, 0], sizes = [8, 8], strides = [1, 1]} : vector<32x8xf32> to vector<8x8xf32>
      %cst_56 = arith.constant 5.000000e-01 : f32
      %78 = vector.broadcast %cst_56 : f32 to vector<8x8xf32>
      %79 = arith.mulf %78, %77 : vector<8x8xf32>
      %80 = math.tanh %79 : vector<8x8xf32>
      %cst_57 = arith.constant 1.000000e+00 : f32
      %81 = vector.broadcast %cst_57 : f32 to vector<8x8xf32>
      %82 = arith.addf %80, %81 : vector<8x8xf32>
      %cst_58 = arith.constant 5.000000e-01 : f32
      %83 = vector.broadcast %cst_58 : f32 to vector<8x8xf32>
      %84 = arith.mulf %83, %82 : vector<8x8xf32>
      %85 = vector.extract_strided_slice %68 {offsets = [16, 0], sizes = [8, 8], strides = [1, 1]} : vector<32x8xf32> to vector<8x8xf32>
      %86 = math.tanh %85 : vector<8x8xf32>
      %87 = vector.extract_strided_slice %68 {offsets = [24, 0], sizes = [8, 8], strides = [1, 1]} : vector<32x8xf32> to vector<8x8xf32>
      %cst_59 = arith.constant 5.000000e-01 : f32
      %88 = vector.broadcast %cst_59 : f32 to vector<8x8xf32>
      %89 = arith.mulf %88, %87 : vector<8x8xf32>
      %90 = math.tanh %89 : vector<8x8xf32>
      %cst_60 = arith.constant 1.000000e+00 : f32
      %91 = vector.broadcast %cst_60 : f32 to vector<8x8xf32>
      %92 = arith.addf %90, %91 : vector<8x8xf32>
      %cst_61 = arith.constant 5.000000e-01 : f32
      %93 = vector.broadcast %cst_61 : f32 to vector<8x8xf32>
      %94 = arith.mulf %93, %92 : vector<8x8xf32>
      %95 = arith.mulf %84, %65 : vector<8x8xf32>
      %96 = arith.mulf %76, %86 : vector<8x8xf32>
      %97 = arith.addf %95, %96 : vector<8x8xf32>
      %98 = math.tanh %97 : vector<8x8xf32>
      %99 = arith.mulf %94, %98 : vector<8x8xf32>
      %100 = vector.extract_strided_slice %62 {offsets = [32, 0], sizes = [32, 8], strides = [1, 1]} : vector<160x8xf32> to vector<32x8xf32>
      %cst_62 = arith.constant dense<0.000000e+00> : vector<32x8xf32>
      %101 = tpu.matmul %63, %99, %cst_62 {dimension_numbers = #tpu.dot_dimension_numbers<[1], [0], [0], [1], [0, 0, 1, 1], [], []>} : vector<32x8xf32>, vector<8x8xf32>, vector<32x8xf32> -> vector<32x8xf32>
      %102 = arith.addf %100, %101 : vector<32x8xf32>
      %103 = vector.extract_strided_slice %102 {offsets = [0, 0], sizes = [8, 8], strides = [1, 1]} : vector<32x8xf32> to vector<8x8xf32>
      %cst_63 = arith.constant 5.000000e-01 : f32
      %104 = vector.broadcast %cst_63 : f32 to vector<8x8xf32>
      %105 = arith.mulf %104, %103 : vector<8x8xf32>
      %106 = math.tanh %105 : vector<8x8xf32>
      %cst_64 = arith.constant 1.000000e+00 : f32
      %107 = vector.broadcast %cst_64 : f32 to vector<8x8xf32>
      %108 = arith.addf %106, %107 : vector<8x8xf32>
      %cst_65 = arith.constant 5.000000e-01 : f32
      %109 = vector.broadcast %cst_65 : f32 to vector<8x8xf32>
      %110 = arith.mulf %109, %108 : vector<8x8xf32>
      %111 = vector.extract_strided_slice %102 {offsets = [8, 0], sizes = [8, 8], strides = [1, 1]} : vector<32x8xf32> to vector<8x8xf32>
      %cst_66 = arith.constant 5.000000e-01 : f32
      %112 = vector.broadcast %cst_66 : f32 to vector<8x8xf32>
      %113 = arith.mulf %112, %111 : vector<8x8xf32>
      %114 = math.tanh %113 : vector<8x8xf32>
      %cst_67 = arith.constant 1.000000e+00 : f32
      %115 = vector.broadcast %cst_67 : f32 to vector<8x8xf32>
      %116 = arith.addf %114, %115 : vector<8x8xf32>
      %cst_68 = arith.constant 5.000000e-01 : f32
      %117 = vector.broadcast %cst_68 : f32 to vector<8x8xf32>
      %118 = arith.mulf %117, %116 : vector<8x8xf32>
      %119 = vector.extract_strided_slice %102 {offsets = [16, 0], sizes = [8, 8], strides = [1, 1]} : vector<32x8xf32> to vector<8x8xf32>
      %120 = math.tanh %119 : vector<8x8xf32>
      %121 = vector.extract_strided_slice %102 {offsets = [24, 0], sizes = [8, 8], strides = [1, 1]} : vector<32x8xf32> to vector<8x8xf32>
      %cst_69 = arith.constant 5.000000e-01 : f32
      %122 = vector.broadcast %cst_69 : f32 to vector<8x8xf32>
      %123 = arith.mulf %122, %121 : vector<8x8xf32>
      %124 = math.tanh %123 : vector<8x8xf32>
      %cst_70 = arith.constant 1.000000e+00 : f32
      %125 = vector.broadcast %cst_70 : f32 to vector<8x8xf32>
      %126 = arith.addf %124, %125 : vector<8x8xf32>
      %cst_71 = arith.constant 5.000000e-01 : f32
      %127 = vector.broadcast %cst_71 : f32 to vector<8x8xf32>
      %128 = arith.mulf %127, %126 : vector<8x8xf32>
      %129 = arith.mulf %118, %97 : vector<8x8xf32>
      %130 = arith.mulf %110, %120 : vector<8x8xf32>
      %131 = arith.addf %129, %130 : vector<8x8xf32>
      %132 = math.tanh %131 : vector<8x8xf32>
      %133 = arith.mulf %128, %132 : vector<8x8xf32>
      %134 = vector.extract_strided_slice %62 {offsets = [64, 0], sizes = [32, 8], strides = [1, 1]} : vector<160x8xf32> to vector<32x8xf32>
      %cst_72 = arith.constant dense<0.000000e+00> : vector<32x8xf32>
      %135 = tpu.matmul %63, %133, %cst_72 {dimension_numbers = #tpu.dot_dimension_numbers<[1], [0], [0], [1], [0, 0, 1, 1], [], []>} : vector<32x8xf32>, vector<8x8xf32>, vector<32x8xf32> -> vector<32x8xf32>
      %136 = arith.addf %134, %135 : vector<32x8xf32>
      %137 = vector.extract_strided_slice %136 {offsets = [0, 0], sizes = [8, 8], strides = [1, 1]} : vector<32x8xf32> to vector<8x8xf32>
      %cst_73 = arith.constant 5.000000e-01 : f32
      %138 = vector.broadcast %cst_73 : f32 to vector<8x8xf32>
      %139 = arith.mulf %138, %137 : vector<8x8xf32>
      %140 = math.tanh %139 : vector<8x8xf32>
      %cst_74 = arith.constant 1.000000e+00 : f32
      %141 = vector.broadcast %cst_74 : f32 to vector<8x8xf32>
      %142 = arith.addf %140, %141 : vector<8x8xf32>
      %cst_75 = arith.constant 5.000000e-01 : f32
      %143 = vector.broadcast %cst_75 : f32 to vector<8x8xf32>
      %144 = arith.mulf %143, %142 : vector<8x8xf32>
      %145 = vector.extract_strided_slice %136 {offsets = [8, 0], sizes = [8, 8], strides = [1, 1]} : vector<32x8xf32> to vector<8x8xf32>
      %cst_76 = arith.constant 5.000000e-01 : f32
      %146 = vector.broadcast %cst_76 : f32 to vector<8x8xf32>
      %147 = arith.mulf %146, %145 : vector<8x8xf32>
      %148 = math.tanh %147 : vector<8x8xf32>
      %cst_77 = arith.constant 1.000000e+00 : f32
      %149 = vector.broadcast %cst_77 : f32 to vector<8x8xf32>
      %150 = arith.addf %148, %149 : vector<8x8xf32>
      %cst_78 = arith.constant 5.000000e-01 : f32
      %151 = vector.broadcast %cst_78 : f32 to vector<8x8xf32>
      %152 = arith.mulf %151, %150 : vector<8x8xf32>
      %153 = vector.extract_strided_slice %136 {offsets = [16, 0], sizes = [8, 8], strides = [1, 1]} : vector<32x8xf32> to vector<8x8xf32>
      %154 = math.tanh %153 : vector<8x8xf32>
      %155 = vector.extract_strided_slice %136 {offsets = [24, 0], sizes = [8, 8], strides = [1, 1]} : vector<32x8xf32> to vector<8x8xf32>
      %cst_79 = arith.constant 5.000000e-01 : f32
      %156 = vector.broadcast %cst_79 : f32 to vector<8x8xf32>
      %157 = arith.mulf %156, %155 : vector<8x8xf32>
      %158 = math.tanh %157 : vector<8x8xf32>
      %cst_80 = arith.constant 1.000000e+00 : f32
      %159 = vector.broadcast %cst_80 : f32 to vector<8x8xf32>
      %160 = arith.addf %158, %159 : vector<8x8xf32>
      %cst_81 = arith.constant 5.000000e-01 : f32
      %161 = vector.broadcast %cst_81 : f32 to vector<8x8xf32>
      %162 = arith.mulf %161, %160 : vector<8x8xf32>
      %163 = arith.mulf %152, %131 : vector<8x8xf32>
      %164 = arith.mulf %144, %154 : vector<8x8xf32>
      %165 = arith.addf %163, %164 : vector<8x8xf32>
      %166 = math.tanh %165 : vector<8x8xf32>
      %167 = arith.mulf %162, %166 : vector<8x8xf32>
      %168 = vector.extract_strided_slice %62 {offsets = [96, 0], sizes = [32, 8], strides = [1, 1]} : vector<160x8xf32> to vector<32x8xf32>
      %cst_82 = arith.constant dense<0.000000e+00> : vector<32x8xf32>
      %169 = tpu.matmul %63, %167, %cst_82 {dimension_numbers = #tpu.dot_dimension_numbers<[1], [0], [0], [1], [0, 0, 1, 1], [], []>} : vector<32x8xf32>, vector<8x8xf32>, vector<32x8xf32> -> vector<32x8xf32>
      %170 = arith.addf %168, %169 : vector<32x8xf32>
      %171 = vector.extract_strided_slice %170 {offsets = [0, 0], sizes = [8, 8], strides = [1, 1]} : vector<32x8xf32> to vector<8x8xf32>
      %cst_83 = arith.constant 5.000000e-01 : f32
      %172 = vector.broadcast %cst_83 : f32 to vector<8x8xf32>
      %173 = arith.mulf %172, %171 : vector<8x8xf32>
      %174 = math.tanh %173 : vector<8x8xf32>
      %cst_84 = arith.constant 1.000000e+00 : f32
      %175 = vector.broadcast %cst_84 : f32 to vector<8x8xf32>
      %176 = arith.addf %174, %175 : vector<8x8xf32>
      %cst_85 = arith.constant 5.000000e-01 : f32
      %177 = vector.broadcast %cst_85 : f32 to vector<8x8xf32>
      %178 = arith.mulf %177, %176 : vector<8x8xf32>
      %179 = vector.extract_strided_slice %170 {offsets = [8, 0], sizes = [8, 8], strides = [1, 1]} : vector<32x8xf32> to vector<8x8xf32>
      %cst_86 = arith.constant 5.000000e-01 : f32
      %180 = vector.broadcast %cst_86 : f32 to vector<8x8xf32>
      %181 = arith.mulf %180, %179 : vector<8x8xf32>
      %182 = math.tanh %181 : vector<8x8xf32>
      %cst_87 = arith.constant 1.000000e+00 : f32
      %183 = vector.broadcast %cst_87 : f32 to vector<8x8xf32>
      %184 = arith.addf %182, %183 : vector<8x8xf32>
      %cst_88 = arith.constant 5.000000e-01 : f32
      %185 = vector.broadcast %cst_88 : f32 to vector<8x8xf32>
      %186 = arith.mulf %185, %184 : vector<8x8xf32>
      %187 = vector.extract_strided_slice %170 {offsets = [16, 0], sizes = [8, 8], strides = [1, 1]} : vector<32x8xf32> to vector<8x8xf32>
      %188 = math.tanh %187 : vector<8x8xf32>
      %189 = vector.extract_strided_slice %170 {offsets = [24, 0], sizes = [8, 8], strides = [1, 1]} : vector<32x8xf32> to vector<8x8xf32>
      %cst_89 = arith.constant 5.000000e-01 : f32
      %190 = vector.broadcast %cst_89 : f32 to vector<8x8xf32>
      %191 = arith.mulf %190, %189 : vector<8x8xf32>
      %192 = math.tanh %191 : vector<8x8xf32>
      %cst_90 = arith.constant 1.000000e+00 : f32
      %193 = vector.broadcast %cst_90 : f32 to vector<8x8xf32>
      %194 = arith.addf %192, %193 : vector<8x8xf32>
      %cst_91 = arith.constant 5.000000e-01 : f32
      %195 = vector.broadcast %cst_91 : f32 to vector<8x8xf32>
      %196 = arith.mulf %195, %194 : vector<8x8xf32>
      %197 = arith.mulf %186, %165 : vector<8x8xf32>
      %198 = arith.mulf %178, %188 : vector<8x8xf32>
      %199 = arith.addf %197, %198 : vector<8x8xf32>
      %200 = math.tanh %199 : vector<8x8xf32>
      %201 = arith.mulf %196, %200 : vector<8x8xf32>
      %202 = vector.extract_strided_slice %62 {offsets = [128, 0], sizes = [32, 8], strides = [1, 1]} : vector<160x8xf32> to vector<32x8xf32>
      %203 = vector.extract_strided_slice %202 {offsets = [0, 0], sizes = [8, 8], strides = [1, 1]} : vector<32x8xf32> to vector<8x8xf32>
      %cst_92 = arith.constant 5.000000e-01 : f32
      %204 = vector.broadcast %cst_92 : f32 to vector<8x8xf32>
      %205 = arith.mulf %204, %203 : vector<8x8xf32>
      %206 = math.tanh %205 : vector<8x8xf32>
      %cst_93 = arith.constant 1.000000e+00 : f32
      %207 = vector.broadcast %cst_93 : f32 to vector<8x8xf32>
      %208 = arith.addf %206, %207 : vector<8x8xf32>
      %cst_94 = arith.constant 5.000000e-01 : f32
      %209 = vector.broadcast %cst_94 : f32 to vector<8x8xf32>
      %210 = arith.mulf %209, %208 : vector<8x8xf32>
      %211 = vector.extract_strided_slice %202 {offsets = [16, 0], sizes = [8, 8], strides = [1, 1]} : vector<32x8xf32> to vector<8x8xf32>
      %212 = math.tanh %211 : vector<8x8xf32>
      %213 = vector.extract_strided_slice %202 {offsets = [24, 0], sizes = [8, 8], strides = [1, 1]} : vector<32x8xf32> to vector<8x8xf32>
      %cst_95 = arith.constant 5.000000e-01 : f32
      %214 = vector.broadcast %cst_95 : f32 to vector<8x8xf32>
      %215 = arith.mulf %214, %213 : vector<8x8xf32>
      %216 = math.tanh %215 : vector<8x8xf32>
      %cst_96 = arith.constant 1.000000e+00 : f32
      %217 = vector.broadcast %cst_96 : f32 to vector<8x8xf32>
      %218 = arith.addf %216, %217 : vector<8x8xf32>
      %cst_97 = arith.constant 5.000000e-01 : f32
      %219 = vector.broadcast %cst_97 : f32 to vector<8x8xf32>
      %220 = arith.mulf %219, %218 : vector<8x8xf32>
      %221 = arith.mulf %210, %212 : vector<8x8xf32>
      %222 = math.tanh %221 : vector<8x8xf32>
      %223 = arith.mulf %220, %222 : vector<8x8xf32>
      %c0_98 = arith.constant 0 : index
      %c0_99 = arith.constant 0 : index
      %224 = vector.load %arg15[%c0_98, %c0_99] : memref<1x8xf32, #tpu.memory_space<vmem>>, vector<1x8xf32>
      %cst_100 = arith.constant dense<0.000000e+00> : vector<1x8xf32>
      %225 = tpu.matmul %224, %201, %cst_100 {dimension_numbers = #tpu.dot_dimension_numbers<[1], [0], [0], [1], [0, 0, 1, 1], [], []>} : vector<1x8xf32>, vector<8x8xf32>, vector<1x8xf32> -> vector<1x8xf32>
      %c0_101 = arith.constant 0 : index
      %c0_102 = arith.constant 0 : index
      %226 = vector.load %arg16[%c0_101, %c0_102] : memref<1x8xf32, #tpu.memory_space<vmem>>, vector<1x8xf32>
      %cst_103 = arith.constant dense<0.000000e+00> : vector<1x8xf32>
      %227 = tpu.matmul %226, %223, %cst_103 {dimension_numbers = #tpu.dot_dimension_numbers<[1], [0], [0], [1], [0, 0, 1, 1], [], []>} : vector<1x8xf32>, vector<8x8xf32>, vector<1x8xf32> -> vector<1x8xf32>
      %228 = arith.addf %225, %227 : vector<1x8xf32>
      %c0_104 = arith.constant 0 : index
      %c0_105 = arith.constant 0 : index
      %229 = vector.load %arg17[%c0_104, %c0_105] : memref<1x1xf32, #tpu.memory_space<vmem>>, vector<1x1xf32>
      %230 = vector.broadcast %229 : vector<1x1xf32> to vector<1x8xf32>
      %231 = arith.addf %228, %230 : vector<1x8xf32>
      %cst_106 = arith.constant 5.000000e-01 : f32
      %232 = vector.broadcast %cst_106 : f32 to vector<1x8xf32>
      %233 = arith.mulf %232, %231 : vector<1x8xf32>
      %234 = math.tanh %233 : vector<1x8xf32>
      %cst_107 = arith.constant 1.000000e+00 : f32
      %235 = vector.broadcast %cst_107 : f32 to vector<1x8xf32>
      %236 = arith.addf %234, %235 : vector<1x8xf32>
      %cst_108 = arith.constant 5.000000e-01 : f32
      %237 = vector.broadcast %cst_108 : f32 to vector<1x8xf32>
      %238 = arith.mulf %237, %236 : vector<1x8xf32>
      %239 = vector.shape_cast %238 : vector<1x8xf32> to vector<1x1x8xf32>
      %c0_109 = arith.constant 0 : index
      %c0_110 = arith.constant 0 : index
      %c0_111 = arith.constant 0 : index
      %240 = vector.load %arg18[%c0_109, %c0_110, %c0_111] : memref<1x1x8xf32, #tpu.memory_space<vmem>>, vector<1x1x8xf32>
      tpu.vector_store %arg18[%c0_109, %c0_110, %c0_111], %239 {strides = array<i32>} : memref<1x1x8xf32, #tpu.memory_space<vmem>>, vector<1x1x8xf32>,
    } else {
    }
    return
  }
  func.func @transform_0(%arg0: i32, %arg1: i32) -> (i32, i32) {
    %c0_i32 = arith.constant 0 : i32
    %c0_i32_0 = arith.constant 0 : i32
    return %arg1, %c0_i32 : i32, i32
  }
  func.func @transform_1(%arg0: i32, %arg1: i32) -> (i32, i32) {
    %c0_i32 = arith.constant 0 : i32
    %c0_i32_0 = arith.constant 0 : i32
    return %arg1, %c0_i32 : i32, i32
  }
  func.func @transform_2(%arg0: i32, %arg1: i32) -> (i32, i32) {
    %c0_i32 = arith.constant 0 : i32
    %c0_i32_0 = arith.constant 0 : i32
    %c0_i32_1 = arith.constant 0 : i32
    return %c0_i32, %c0_i32_0 : i32, i32
  }
  func.func @transform_3(%arg0: i32, %arg1: i32) -> (i32, i32) {
    %c0_i32 = arith.constant 0 : i32
    %c0_i32_0 = arith.constant 0 : i32
    %c0_i32_1 = arith.constant 0 : i32
    return %c0_i32, %c0_i32_0 : i32, i32
  }
  func.func @transform_4(%arg0: i32, %arg1: i32) -> (i32, i32) {
    %c0_i32 = arith.constant 0 : i32
    %c0_i32_0 = arith.constant 0 : i32
    %c0_i32_1 = arith.constant 0 : i32
    return %c0_i32, %c0_i32_0 : i32, i32
  }
  func.func @transform_5(%arg0: i32, %arg1: i32) -> (i32, i32) {
    %c0_i32 = arith.constant 0 : i32
    %c0_i32_0 = arith.constant 0 : i32
    %c0_i32_1 = arith.constant 0 : i32
    return %c0_i32, %c0_i32_0 : i32, i32
  }
  func.func @transform_6(%arg0: i32, %arg1: i32) -> (i32, i32) {
    %c0_i32 = arith.constant 0 : i32
    %c0_i32_0 = arith.constant 0 : i32
    %c0_i32_1 = arith.constant 0 : i32
    return %c0_i32, %c0_i32_0 : i32, i32
  }
  func.func @transform_7(%arg0: i32, %arg1: i32) -> (i32, i32) {
    %c0_i32 = arith.constant 0 : i32
    %c0_i32_0 = arith.constant 0 : i32
    %c0_i32_1 = arith.constant 0 : i32
    return %c0_i32, %c0_i32_0 : i32, i32
  }
  func.func @transform_8(%arg0: i32, %arg1: i32) -> (i32, i32) {
    %c0_i32 = arith.constant 0 : i32
    %c0_i32_0 = arith.constant 0 : i32
    %c0_i32_1 = arith.constant 0 : i32
    return %c0_i32, %c0_i32_0 : i32, i32
  }
  func.func @transform_9(%arg0: i32, %arg1: i32) -> (i32, i32) {
    %c0_i32 = arith.constant 0 : i32
    %c0_i32_0 = arith.constant 0 : i32
    %c0_i32_1 = arith.constant 0 : i32
    return %c0_i32, %c0_i32_0 : i32, i32
  }
  func.func @transform_10(%arg0: i32, %arg1: i32) -> (i32, i32) {
    %c0_i32 = arith.constant 0 : i32
    %c0_i32_0 = arith.constant 0 : i32
    %c0_i32_1 = arith.constant 0 : i32
    return %c0_i32, %c0_i32_0 : i32, i32
  }
  func.func @transform_11(%arg0: i32, %arg1: i32) -> (i32, i32) {
    %c0_i32 = arith.constant 0 : i32
    %c0_i32_0 = arith.constant 0 : i32
    %c0_i32_1 = arith.constant 0 : i32
    return %c0_i32, %c0_i32_0 : i32, i32
  }
  func.func @transform_12(%arg0: i32, %arg1: i32) -> (i32, i32) {
    %c0_i32 = arith.constant 0 : i32
    %c0_i32_0 = arith.constant 0 : i32
    %c0_i32_1 = arith.constant 0 : i32
    return %c0_i32, %c0_i32_0 : i32, i32
  }
  func.func @transform_13(%arg0: i32, %arg1: i32) -> (i32, i32) {
    %c0_i32 = arith.constant 0 : i32
    %c0_i32_0 = arith.constant 0 : i32
    %c0_i32_1 = arith.constant 0 : i32
    return %c0_i32, %c0_i32_0 : i32, i32
  }
  func.func @transform_14(%arg0: i32, %arg1: i32) -> (i32, i32) {
    %c0_i32 = arith.constant 0 : i32
    %c0_i32_0 = arith.constant 0 : i32
    %c0_i32_1 = arith.constant 0 : i32
    return %c0_i32, %c0_i32_0 : i32, i32
  }
  func.func @transform_15(%arg0: i32, %arg1: i32) -> (i32, i32) {
    %c0_i32 = arith.constant 0 : i32
    %c0_i32_0 = arith.constant 0 : i32
    %c0_i32_1 = arith.constant 0 : i32
    return %c0_i32, %c0_i32_0 : i32, i32
  }
  func.func @transform_16(%arg0: i32, %arg1: i32) -> (i32, i32, i32) {
    %c0_i32 = arith.constant 0 : i32
    %c0_i32_0 = arith.constant 0 : i32
    return %arg0, %c0_i32, %arg1 : i32, i32, i32
  }
}

</mosaic_0001>

<llo_original>
// kernel: tpu_custom_call.1
$region0: #{tpu_custom_call.1}
  #allocation0 [shape = 'u32[]', space=smem, size = 0x4, offset = 0x4, fixed_abs, tag = 'smem constant byte address 0x4 - core index']
  #allocation1 [shape = 'u32[144,128]{1,0:T(1,128)}', space=vmem, size = 0x12000, scoped, tag = 'internal scratch']
  #allocation2 [shape = 'f32[80,1]{1,0:T(8,128)}', space=vmem, size = 0xa000, scoped, tag = 'scratch operand']
  #allocation3 [shape = 'f32[80,1]{1,0:T(8,128)}', space=vmem, size = 0xa000, scoped, tag = 'scratch operand']
  #allocation4 [shape = 'f32[1,1]{1,0:T(1,128)S(1)}', space=vmem, size = 0x200, scoped, tag = 'scoped memory for tpu_custom_call.1']
  %s0 = inlined_call_operand.vmem [shape: f32[8,120], index: 0, kind: input, shape index: {}]
  %s1 = inlined_call_operand.vmem [shape: f32[8,120], index: 1, kind: input, shape index: {}]
  %s2 = inlined_call_operand.vmem [shape: f32[80,120], index: 2, kind: input, shape index: {}]
  %s3 = inlined_call_operand.vmem [shape: f32[80,1], index: 3, kind: input, shape index: {}]
  %s4 = inlined_call_operand.vmem [shape: f32[4,1], index: 4, kind: input, shape index: {}]
  %s5 = inlined_call_operand.vmem [shape: f32[4,1], index: 5, kind: input, shape index: {}]
  %s6 = inlined_call_operand.vmem [shape: f32[80,4], index: 6, kind: input, shape index: {}]
  %s7 = inlined_call_operand.vmem [shape: f32[4,80], index: 7, kind: input, shape index: {}]
  %s8 = inlined_call_operand.vmem [shape: f32[32,80], index: 8, kind: input, shape index: {}]
  %s9 = inlined_call_operand.vmem [shape: f32[32,1], index: 9, kind: input, shape index: {}]
  %s10 = inlined_call_operand.vmem [shape: f32[160,32], index: 10, kind: input, shape index: {}]
  %s11 = inlined_call_operand.vmem [shape: f32[160,1], index: 11, kind: input, shape index: {}]
  %s12 = inlined_call_operand.vmem [shape: f32[32,8], index: 12, kind: input, shape index: {}]
  %s13 = inlined_call_operand.vmem [shape: f32[1,8], index: 13, kind: input, shape index: {}]
  %s14 = inlined_call_operand.vmem [shape: f32[1,8], index: 14, kind: input, shape index: {}]
  %s15 = inlined_call_operand.<no memory space> [shape: f32[1,1], index: 15, kind: input, shape index: {}]
  %s16 = inlined_call_operand.hbm [shape: f32[2,1,8], index: 16, kind: output, shape index: {}]
  %s17 = sld [smem:[#allocation0]]
  $region109: #{tpu_custom_call.1} parent=0
    _
  %s19 = ssub.s32 1, %s17
  %s20 = scalar_select 0, %s19, %s17
  %v21 = vstv %s15
  %22 = vst [vmem:[#allocation4] sm:$0x1] %v21
  $region1: #{tpu_custom_call.1} parent=0
    #allocation5 [shape = 'u8[1024]{0}', space=vmem, size = 0x400, scoped, tag = 'output window, operand 0']
    #allocation6 [shape = 's32[2]{0}', space=sflag, size = 0x8, scoped, tag = 'scoped memory for tpu_custom_call.1']
    %23 = vsyncpa [#allocation6], 0
    %s24 = scalar_lea.sflag [#allocation6], 1
    %25 = vsyncpa %s24, 0
    loop: start=0, step=1, limit=4
    $region2: #{tpu_custom_call.1} parent=1 // loop_pre_header
      _
    $region3: #{tpu_custom_call.1} parent=1 // loop_header
      %s27 = sphi 0, %s31
      %p28 = scmp.ge.s32.totalorder %s27, 4
      %s34 = sphi 0, %s46
      %s35 = sphi 0, %s42
      %s36 = sphi 0, %s34
      %s37 = sphi 0, %s35
      %s38 = sphi 0, %s36
      %s39 = sphi 0, %s37
      %s49 = sphi 0, %s51
      %s52 = sphi 0, %s49
      %s53 = sphi 0, %s52
      %s69 = sphi 0, %s53
      %s75 = sphi 0, %s77
      %s78 = sphi 0, %s75
      %s79 = sphi 0, %s78
      %s95 = sphi 0, %s79
      %s99 = sphi 0, %s99
      %s101 = sphi 0, %s99
      %s102 = sphi 0, %s101
      %s116 = sphi 0, %s102
      %s120 = sphi 0, %s120
      %s122 = sphi 0, %s120
      %s123 = sphi 0, %s122
      %s137 = sphi 0, %s123
      %s141 = sphi 0, %s141
      %s143 = sphi 0, %s141
      %s144 = sphi 0, %s143
      %s158 = sphi 0, %s144
      %s162 = sphi 0, %s162
      %s164 = sphi 0, %s162
      %s165 = sphi 0, %s164
      %s179 = sphi 0, %s165
      %s183 = sphi 0, %s183
      %s185 = sphi 0, %s183
      %s186 = sphi 0, %s185
      %s200 = sphi 0, %s186
      %s204 = sphi 0, %s204
      %s206 = sphi 0, %s204
      %s207 = sphi 0, %s206
      %s221 = sphi 0, %s207
      %s225 = sphi 0, %s225
      %s227 = sphi 0, %s225
      %s228 = sphi 0, %s227
      %s242 = sphi 0, %s228
      %s246 = sphi 0, %s246
      %s248 = sphi 0, %s246
      %s249 = sphi 0, %s248
      %s263 = sphi 0, %s249
      %s267 = sphi 0, %s267
      %s269 = sphi 0, %s267
      %s270 = sphi 0, %s269
      %s284 = sphi 0, %s270
      %s288 = sphi 0, %s288
      %s290 = sphi 0, %s288
      %s291 = sphi 0, %s290
      %s305 = sphi 0, %s291
      %s309 = sphi 0, %s309
      %s311 = sphi 0, %s309
      %s312 = sphi 0, %s311
      %s326 = sphi 0, %s312
      %s330 = sphi 0, %s330
      %s332 = sphi 0, %s330
      %s333 = sphi 0, %s332
      %s347 = sphi 0, %s333
      %s351 = sphi 0, %s351
      %s353 = sphi 0, %s351
      %s354 = sphi 0, %s353
      %s368 = sphi 0, %s354
      %s372 = sphi 0, %s372
      %s374 = sphi 0, %s372
      %s375 = sphi 0, %s374
      %s389 = sphi 0, %s375
      %s397 = sphi 0, %s399
      %s400 = sphi 0, %s397
      %s401 = sphi 0, %s400
      %s417 = sphi 0, %s401
    $region4: #{tpu_custom_call.1} parent=1 // loop_header_branch
      %30 = sbr.rel (%p28) target = $region8
    $region5: #{tpu_custom_call.1} parent=1 // loop_body
      %s32 = ssub.s32 %s27, 1
      %s33 = ssub.s32 %s27, 2
      %s40 = sadd.s32 1, %s35
      %p41 = scmp.ge.s32.totalorder %s40, 1
      %s42 = scalar_select %p41, 0, %s40
      %s43 = sadd.s32 1, %s34
      %s44 = scalar_select %p41, %s43, %s34
      %p45 = scmp.ge.s32.totalorder %s44, 2
      %s46 = scalar_select %p45, 0, %s44
      %s47 = ssub.s32 %s35, %s42
      %p48 = scmp.eq.s32.totalorder %s47, 0
      %s50 = sadd.s32 %s49, 1
      %s51 = scalar_select %p48, %s49, %s50
      %p54 = pneg %p48
      %p55 = scmp.eq.s32.totalorder %s27, 1
      %p56 = por %p54, %p55
      %p57 = scmp.ne.s32.totalorder %s49, %s52
      %p58 = scmp.eq.s32.totalorder %s27, 0
      %p59 = por %p57, %p58
      %p60 = scmp.ne.s32.totalorder %s49, %s52
      %p61 = scmp.eq.s32.totalorder %s32, 1
      %p62 = por %p60, %p61
      %p63 = scmp.ne.s32.totalorder %s52, %s53
      %p64 = scmp.eq.s32.totalorder %s32, 0
      %p65 = por %p63, %p64
      %p66 = scmp.ne.s32.totalorder %s52, %s53
      %p67 = scmp.eq.s32.totalorder %s33, 1
      %p68 = por %p66, %p67
      %p70 = scmp.ne.s32.totalorder %s53, %s69
      %p71 = scmp.eq.s32.totalorder %s33, 0
      %p72 = por %p70, %p71
      %s73 = ssub.s32 %s35, %s42
      %p74 = scmp.eq.s32.totalorder %s73, 0
      %s76 = sadd.s32 %s75, 1
      %s77 = scalar_select %p74, %s75, %s76
      %p80 = pneg %p74
      %p81 = scmp.eq.s32.totalorder %s27, 1
      %p82 = por %p80, %p81
      %p83 = scmp.ne.s32.totalorder %s75, %s78
      %p84 = scmp.eq.s32.totalorder %s27, 0
      %p85 = por %p83, %p84
      %p86 = scmp.ne.s32.totalorder %s75, %s78
      %p87 = scmp.eq.s32.totalorder %s32, 1
      %p88 = por %p86, %p87
      %p89 = scmp.ne.s32.totalorder %s78, %s79
      %p90 = scmp.eq.s32.totalorder %s32, 0
      %p91 = por %p89, %p90
      %p92 = scmp.ne.s32.totalorder %s78, %s79
      %p93 = scmp.eq.s32.totalorder %s33, 1
      %p94 = por %p92, %p93
      %p96 = scmp.ne.s32.totalorder %s79, %s95
      %p97 = scmp.eq.s32.totalorder %s33, 0
      %p98 = por %p96, %p97
      %s100 = sadd.s32 %s99, 1
      %p103 = scmp.eq.s32.totalorder %s27, 1
      %p104 = scmp.ne.s32.totalorder %s99, %s101
      %p105 = scmp.eq.s32.totalorder %s27, 0
      %p106 = por %p104, %p105
      %p107 = scmp.ne.s32.totalorder %s99, %s101
      %p108 = scmp.eq.s32.totalorder %s32, 1
      %p109 = por %p107, %p108
      %p110 = scmp.ne.s32.totalorder %s101, %s102
      %p111 = scmp.eq.s32.totalorder %s32, 0
      %p112 = por %p110, %p111
      %p113 = scmp.ne.s32.totalorder %s101, %s102
      %p114 = scmp.eq.s32.totalorder %s33, 1
      %p115 = por %p113, %p114
      %p117 = scmp.ne.s32.totalorder %s102, %s116
      %p118 = scmp.eq.s32.totalorder %s33, 0
      %p119 = por %p117, %p118
      %s121 = sadd.s32 %s120, 1
      %p124 = scmp.eq.s32.totalorder %s27, 1
      %p125 = scmp.ne.s32.totalorder %s120, %s122
      %p126 = scmp.eq.s32.totalorder %s27, 0
      %p127 = por %p125, %p126
      %p128 = scmp.ne.s32.totalorder %s120, %s122
      %p129 = scmp.eq.s32.totalorder %s32, 1
      %p130 = por %p128, %p129
      %p131 = scmp.ne.s32.totalorder %s122, %s123
      %p132 = scmp.eq.s32.totalorder %s32, 0
      %p133 = por %p131, %p132
      %p134 = scmp.ne.s32.totalorder %s122, %s123
      %p135 = scmp.eq.s32.totalorder %s33, 1
      %p136 = por %p134, %p135
      %p138 = scmp.ne.s32.totalorder %s123, %s137
      %p139 = scmp.eq.s32.totalorder %s33, 0
      %p140 = por %p138, %p139
      %s142 = sadd.s32 %s141, 1
      %p145 = scmp.eq.s32.totalorder %s27, 1
      %p146 = scmp.ne.s32.totalorder %s141, %s143
      %p147 = scmp.eq.s32.totalorder %s27, 0
      %p148 = por %p146, %p147
      %p149 = scmp.ne.s32.totalorder %s141, %s143
      %p150 = scmp.eq.s32.totalorder %s32, 1
      %p151 = por %p149, %p150
      %p152 = scmp.ne.s32.totalorder %s143, %s144
      %p153 = scmp.eq.s32.totalorder %s32, 0
      %p154 = por %p152, %p153
      %p155 = scmp.ne.s32.totalorder %s143, %s144
      %p156 = scmp.eq.s32.totalorder %s33, 1
      %p157 = por %p155, %p156
      %p159 = scmp.ne.s32.totalorder %s144, %s158
      %p160 = scmp.eq.s32.totalorder %s33, 0
      %p161 = por %p159, %p160
      %s163 = sadd.s32 %s162, 1
      %p166 = scmp.eq.s32.totalorder %s27, 1
      %p167 = scmp.ne.s32.totalorder %s162, %s164
      %p168 = scmp.eq.s32.totalorder %s27, 0
      %p169 = por %p167, %p168
      %p170 = scmp.ne.s32.totalorder %s162, %s164
      %p171 = scmp.eq.s32.totalorder %s32, 1
      %p172 = por %p170, %p171
      %p173 = scmp.ne.s32.totalorder %s164, %s165
      %p174 = scmp.eq.s32.totalorder %s32, 0
      %p175 = por %p173, %p174
      %p176 = scmp.ne.s32.totalorder %s164, %s165
      %p177 = scmp.eq.s32.totalorder %s33, 1
      %p178 = por %p176, %p177
      %p180 = scmp.ne.s32.totalorder %s165, %s179
      %p181 = scmp.eq.s32.totalorder %s33, 0
      %p182 = por %p180, %p181
      %s184 = sadd.s32 %s183, 1
      %p187 = scmp.eq.s32.totalorder %s27, 1
      %p188 = scmp.ne.s32.totalorder %s183, %s185
      %p189 = scmp.eq.s32.totalorder %s27, 0
      %p190 = por %p188, %p189
      %p191 = scmp.ne.s32.totalorder %s183, %s185
      %p192 = scmp.eq.s32.totalorder %s32, 1
      %p193 = por %p191, %p192
      %p194 = scmp.ne.s32.totalorder %s185, %s186
      %p195 = scmp.eq.s32.totalorder %s32, 0
      %p196 = por %p194, %p195
      %p197 = scmp.ne.s32.totalorder %s185, %s186
      %p198 = scmp.eq.s32.totalorder %s33, 1
      %p199 = por %p197, %p198
      %p201 = scmp.ne.s32.totalorder %s186, %s200
      %p202 = scmp.eq.s32.totalorder %s33, 0
      %p203 = por %p201, %p202
      %s205 = sadd.s32 %s204, 1
      %p208 = scmp.eq.s32.totalorder %s27, 1
      %p209 = scmp.ne.s32.totalorder %s204, %s206
      %p210 = scmp.eq.s32.totalorder %s27, 0
      %p211 = por %p209, %p210
      %p212 = scmp.ne.s32.totalorder %s204, %s206
      %p213 = scmp.eq.s32.totalorder %s32, 1
      %p214 = por %p212, %p213
      %p215 = scmp.ne.s32.totalorder %s206, %s207
      %p216 = scmp.eq.s32.totalorder %s32, 0
      %p217 = por %p215, %p216
      %p218 = scmp.ne.s32.totalorder %s206, %s207
      %p219 = scmp.eq.s32.totalorder %s33, 1
      %p220 = por %p218, %p219
      %p222 = scmp.ne.s32.totalorder %s207, %s221
      %p223 = scmp.eq.s32.totalorder %s33, 0
      %p224 = por %p222, %p223
      %s226 = sadd.s32 %s225, 1
      %p229 = scmp.eq.s32.totalorder %s27, 1
      %p230 = scmp.ne.s32.totalorder %s225, %s227
      %p231 = scmp.eq.s32.totalorder %s27, 0
      %p232 = por %p230, %p231
      %p233 = scmp.ne.s32.totalorder %s225, %s227
      %p234 = scmp.eq.s32.totalorder %s32, 1
      %p235 = por %p233, %p234
      %p236 = scmp.ne.s32.totalorder %s227, %s228
      %p237 = scmp.eq.s32.totalorder %s32, 0
      %p238 = por %p236, %p237
      %p239 = scmp.ne.s32.totalorder %s227, %s228
      %p240 = scmp.eq.s32.totalorder %s33, 1
      %p241 = por %p239, %p240
      %p243 = scmp.ne.s32.totalorder %s228, %s242
      %p244 = scmp.eq.s32.totalorder %s33, 0
      %p245 = por %p243, %p244
      %s247 = sadd.s32 %s246, 1
      %p250 = scmp.eq.s32.totalorder %s27, 1
      %p251 = scmp.ne.s32.totalorder %s246, %s248
      %p252 = scmp.eq.s32.totalorder %s27, 0
      %p253 = por %p251, %p252
      %p254 = scmp.ne.s32.totalorder %s246, %s248
      %p255 = scmp.eq.s32.totalorder %s32, 1
      %p256 = por %p254, %p255
      %p257 = scmp.ne.s32.totalorder %s248, %s249
      %p258 = scmp.eq.s32.totalorder %s32, 0
      %p259 = por %p257, %p258
      %p260 = scmp.ne.s32.totalorder %s248, %s249
      %p261 = scmp.eq.s32.totalorder %s33, 1
      %p262 = por %p260, %p261
      %p264 = scmp.ne.s32.totalorder %s249, %s263
      %p265 = scmp.eq.s32.totalorder %s33, 0
      %p266 = por %p264, %p265
      %s268 = sadd.s32 %s267, 1
      %p271 = scmp.eq.s32.totalorder %s27, 1
      %p272 = scmp.ne.s32.totalorder %s267, %s269
      %p273 = scmp.eq.s32.totalorder %s27, 0
      %p274 = por %p272, %p273
      %p275 = scmp.ne.s32.totalorder %s267, %s269
      %p276 = scmp.eq.s32.totalorder %s32, 1
      %p277 = por %p275, %p276
      %p278 = scmp.ne.s32.totalorder %s269, %s270
      %p279 = scmp.eq.s32.totalorder %s32, 0
      %p280 = por %p278, %p279
      %p281 = scmp.ne.s32.totalorder %s269, %s270
      %p282 = scmp.eq.s32.totalorder %s33, 1
      %p283 = por %p281, %p282
      %p285 = scmp.ne.s32.totalorder %s270, %s284
      %p286 = scmp.eq.s32.totalorder %s33, 0
      %p287 = por %p285, %p286
      %s289 = sadd.s32 %s288, 1
      %p292 = scmp.eq.s32.totalorder %s27, 1
      %p293 = scmp.ne.s32.totalorder %s288, %s290
      %p294 = scmp.eq.s32.totalorder %s27, 0
      %p295 = por %p293, %p294
      %p296 = scmp.ne.s32.totalorder %s288, %s290
      %p297 = scmp.eq.s32.totalorder %s32, 1
      %p298 = por %p296, %p297
      %p299 = scmp.ne.s32.totalorder %s290, %s291
      %p300 = scmp.eq.s32.totalorder %s32, 0
      %p301 = por %p299, %p300
      %p302 = scmp.ne.s32.totalorder %s290, %s291
      %p303 = scmp.eq.s32.totalorder %s33, 1
      %p304 = por %p302, %p303
      %p306 = scmp.ne.s32.totalorder %s291, %s305
      %p307 = scmp.eq.s32.totalorder %s33, 0
      %p308 = por %p306, %p307
      %s310 = sadd.s32 %s309, 1
      %p313 = scmp.eq.s32.totalorder %s27, 1
      %p314 = scmp.ne.s32.totalorder %s309, %s311
      %p315 = scmp.eq.s32.totalorder %s27, 0
      %p316 = por %p314, %p315
      %p317 = scmp.ne.s32.totalorder %s309, %s311
      %p318 = scmp.eq.s32.totalorder %s32, 1
      %p319 = por %p317, %p318
      %p320 = scmp.ne.s32.totalorder %s311, %s312
      %p321 = scmp.eq.s32.totalorder %s32, 0
      %p322 = por %p320, %p321
      %p323 = scmp.ne.s32.totalorder %s311, %s312
      %p324 = scmp.eq.s32.totalorder %s33, 1
      %p325 = por %p323, %p324
      %p327 = scmp.ne.s32.totalorder %s312, %s326
      %p328 = scmp.eq.s32.totalorder %s33, 0
      %p329 = por %p327, %p328
      %s331 = sadd.s32 %s330, 1
      %p334 = scmp.eq.s32.totalorder %s27, 1
      %p335 = scmp.ne.s32.totalorder %s330, %s332
      %p336 = scmp.eq.s32.totalorder %s27, 0
      %p337 = por %p335, %p336
      %p338 = scmp.ne.s32.totalorder %s330, %s332
      %p339 = scmp.eq.s32.totalorder %s32, 1
      %p340 = por %p338, %p339
      %p341 = scmp.ne.s32.totalorder %s332, %s333
      %p342 = scmp.eq.s32.totalorder %s32, 0
      %p343 = por %p341, %p342
      %p344 = scmp.ne.s32.totalorder %s332, %s333
      %p345 = scmp.eq.s32.totalorder %s33, 1
      %p346 = por %p344, %p345
      %p348 = scmp.ne.s32.totalorder %s333, %s347
      %p349 = scmp.eq.s32.totalorder %s33, 0
      %p350 = por %p348, %p349
      %s352 = sadd.s32 %s351, 1
      %p355 = scmp.eq.s32.totalorder %s27, 1
      %p356 = scmp.ne.s32.totalorder %s351, %s353
      %p357 = scmp.eq.s32.totalorder %s27, 0
      %p358 = por %p356, %p357
      %p359 = scmp.ne.s32.totalorder %s351, %s353
      %p360 = scmp.eq.s32.totalorder %s32, 1
      %p361 = por %p359, %p360
      %p362 = scmp.ne.s32.totalorder %s353, %s354
      %p363 = scmp.eq.s32.totalorder %s32, 0
      %p364 = por %p362, %p363
      %p365 = scmp.ne.s32.totalorder %s353, %s354
      %p366 = scmp.eq.s32.totalorder %s33, 1
      %p367 = por %p365, %p366
      %p369 = scmp.ne.s32.totalorder %s354, %s368
      %p370 = scmp.eq.s32.totalorder %s33, 0
      %p371 = por %p369, %p370
      %s373 = sadd.s32 %s372, 1
      %p376 = scmp.eq.s32.totalorder %s27, 1
      %p377 = scmp.ne.s32.totalorder %s372, %s374
      %p378 = scmp.eq.s32.totalorder %s27, 0
      %p379 = por %p377, %p378
      %p380 = scmp.ne.s32.totalorder %s372, %s374
      %p381 = scmp.eq.s32.totalorder %s32, 1
      %p382 = por %p380, %p381
      %p383 = scmp.ne.s32.totalorder %s374, %s375
      %p384 = scmp.eq.s32.totalorder %s32, 0
      %p385 = por %p383, %p384
      %p386 = scmp.ne.s32.totalorder %s374, %s375
      %p387 = scmp.eq.s32.totalorder %s33, 1
      %p388 = por %p386, %p387
      %p390 = scmp.ne.s32.totalorder %s375, %s389
      %p391 = scmp.eq.s32.totalorder %s33, 0
      %p392 = por %p390, %p391
      %s393 = ssub.s32 %s34, %s46
      %s394 = ssub.s32 %s35, %s42
      %s395 = sor.u32 %s393, %s394
      %p396 = scmp.eq.s32.totalorder %s395, 0
      %s398 = sadd.s32 %s397, 1
      %s399 = scalar_select %p396, %s397, %s398
      %p402 = pneg %p396
      %p403 = scmp.eq.s32.totalorder %s27, 1
      %p404 = por %p402, %p403
      %p405 = scmp.ne.s32.totalorder %s397, %s400
      %p406 = scmp.eq.s32.totalorder %s27, 0
      %p407 = por %p405, %p406
      %p408 = scmp.ne.s32.totalorder %s397, %s400
      %p409 = scmp.eq.s32.totalorder %s32, 1
      %p410 = por %p408, %p409
      %p411 = scmp.ne.s32.totalorder %s400, %s401
      %p412 = scmp.eq.s32.totalorder %s32, 0
      %p413 = por %p411, %p412
      %p414 = scmp.ne.s32.totalorder %s400, %s401
      %p415 = scmp.eq.s32.totalorder %s33, 1
      %p416 = por %p414, %p415
      %p418 = scmp.ne.s32.totalorder %s401, %s417
      %p419 = scmp.eq.s32.totalorder %s33, 0
      %p420 = por %p418, %p419
      %p421 = scmp.le.s32.totalorder 1, %s27
      %p422 = scmp.lt.s32.totalorder %s27, 3
      %p423 = pnand %p421, %p422
      %p424 = pneg %p423
      // Predicated region
      $region9: #{tpu_custom_call.1} parent=5 // pred_check
        _
      $region10: #{tpu_custom_call.1} parent=5 // pred_check_branch
        %426 = sbr.rel (%p423) target = $region12
      $region11: #{tpu_custom_call.1} parent=5 // pred_region
        %s427 = ssub.s32 %s27, 1
        // Predicated region
        $region13: #{tpu_custom_call.1} parent=11 // pred_check
          %p428 = pneg %p65
        $region14: #{tpu_custom_call.1} parent=11 // pred_check_branch
          %430 = sbr.rel (%p428) target = $region16
        $region15: #{tpu_custom_call.1} parent=11 // pred_region
          %p431 = scmp.lt.s32.totalorder %s37, 0
          %s432 = scalar_select %p431, %s37, 0
          %s433 = smul.addr %s432, 8
          %s434 = scalar_lea.vmem %s0, %s433
        $region16: #{tpu_custom_call.1} parent=11 // pred_fallthru
          _
        // Predicated region
        $region17: #{tpu_custom_call.1} parent=11 // pred_check
          %p435 = pneg %p91
        $region18: #{tpu_custom_call.1} parent=11 // pred_check_branch
          %437 = sbr.rel (%p435) target = $region20
        $region19: #{tpu_custom_call.1} parent=11 // pred_region
          %p438 = scmp.lt.s32.totalorder %s37, 0
          %s439 = scalar_select %p438, %s37, 0
          %s440 = smul.addr %s439, 8
          %s441 = scalar_lea.vmem %s1, %s440
        $region20: #{tpu_custom_call.1} parent=11 // pred_fallthru
          _
        // Predicated region
        $region21: #{tpu_custom_call.1} parent=11 // pred_check
          %p442 = pneg %p112
        $region22: #{tpu_custom_call.1} parent=11 // pred_check_branch
          %444 = sbr.rel (%p442) target = $region24
        $region23: #{tpu_custom_call.1} parent=11 // pred_region
          _
        $region24: #{tpu_custom_call.1} parent=11 // pred_fallthru
          _
        // Predicated region
        $region25: #{tpu_custom_call.1} parent=11 // pred_check
          %p445 = pneg %p133
        $region26: #{tpu_custom_call.1} parent=11 // pred_check_branch
          %447 = sbr.rel (%p445) target = $region28
        $region27: #{tpu_custom_call.1} parent=11 // pred_region
          _
        $region28: #{tpu_custom_call.1} parent=11 // pred_fallthru
          _
        // Predicated region
        $region29: #{tpu_custom_call.1} parent=11 // pred_check
          %p448 = pneg %p154
        $region30: #{tpu_custom_call.1} parent=11 // pred_check_branch
          %450 = sbr.rel (%p448) target = $region32
        $region31: #{tpu_custom_call.1} parent=11 // pred_region
          _
        $region32: #{tpu_custom_call.1} parent=11 // pred_fallthru
          _
        // Predicated region
        $region33: #{tpu_custom_call.1} parent=11 // pred_check
          %p451 = pneg %p175
        $region34: #{tpu_custom_call.1} parent=11 // pred_check_branch
          %453 = sbr.rel (%p451) target = $region36
        $region35: #{tpu_custom_call.1} parent=11 // pred_region
          _
        $region36: #{tpu_custom_call.1} parent=11 // pred_fallthru
          _
        // Predicated region
        $region37: #{tpu_custom_call.1} parent=11 // pred_check
          %p454 = pneg %p196
        $region38: #{tpu_custom_call.1} parent=11 // pred_check_branch
          %456 = sbr.rel (%p454) target = $region40
        $region39: #{tpu_custom_call.1} parent=11 // pred_region
          _
        $region40: #{tpu_custom_call.1} parent=11 // pred_fallthru
          _
        // Predicated region
        $region41: #{tpu_custom_call.1} parent=11 // pred_check
          %p457 = pneg %p217
        $region42: #{tpu_custom_call.1} parent=11 // pred_check_branch
          %459 = sbr.rel (%p457) target = $region44
        $region43: #{tpu_custom_call.1} parent=11 // pred_region
          _
        $region44: #{tpu_custom_call.1} parent=11 // pred_fallthru
          _
        // Predicated region
        $region45: #{tpu_custom_call.1} parent=11 // pred_check
          %p460 = pneg %p238
        $region46: #{tpu_custom_call.1} parent=11 // pred_check_branch
          %462 = sbr.rel (%p460) target = $region48
        $region47: #{tpu_custom_call.1} parent=11 // pred_region
          _
        $region48: #{tpu_custom_call.1} parent=11 // pred_fallthru
          _
        // Predicated region
        $region49: #{tpu_custom_call.1} parent=11 // pred_check
          %p463 = pneg %p259
        $region50: #{tpu_custom_call.1} parent=11 // pred_check_branch
          %465 = sbr.rel (%p463) target = $region52
        $region51: #{tpu_custom_call.1} parent=11 // pred_region
          _
        $region52: #{tpu_custom_call.1} parent=11 // pred_fallthru
          _
        // Predicated region
        $region53: #{tpu_custom_call.1} parent=11 // pred_check
          %p466 = pneg %p280
        $region54: #{tpu_custom_call.1} parent=11 // pred_check_branch
          %468 = sbr.rel (%p466) target = $region56
        $region55: #{tpu_custom_call.1} parent=11 // pred_region
          _
        $region56: #{tpu_custom_call.1} parent=11 // pred_fallthru
          _
        // Predicated region
        $region57: #{tpu_custom_call.1} parent=11 // pred_check
          %p469 = pneg %p301
        $region58: #{tpu_custom_call.1} parent=11 // pred_check_branch
          %471 = sbr.rel (%p469) target = $region60
        $region59: #{tpu_custom_call.1} parent=11 // pred_region
          _
        $region60: #{tpu_custom_call.1} parent=11 // pred_fallthru
          _
        // Predicated region
        $region61: #{tpu_custom_call.1} parent=11 // pred_check
          %p472 = pneg %p322
        $region62: #{tpu_custom_call.1} parent=11 // pred_check_branch
          %474 = sbr.rel (%p472) target = $region64
        $region63: #{tpu_custom_call.1} parent=11 // pred_region
          _
        $region64: #{tpu_custom_call.1} parent=11 // pred_fallthru
          _
        // Predicated region
        $region65: #{tpu_custom_call.1} parent=11 // pred_check
          %p475 = pneg %p343
        $region66: #{tpu_custom_call.1} parent=11 // pred_check_branch
          %477 = sbr.rel (%p475) target = $region68
        $region67: #{tpu_custom_call.1} parent=11 // pred_region
          _
        $region68: #{tpu_custom_call.1} parent=11 // pred_fallthru
          _
        // Predicated region
        $region69: #{tpu_custom_call.1} parent=11 // pred_check
          %p478 = pneg %p364
        $region70: #{tpu_custom_call.1} parent=11 // pred_check_branch
          %480 = sbr.rel (%p478) target = $region72
        $region71: #{tpu_custom_call.1} parent=11 // pred_region
          _
        $region72: #{tpu_custom_call.1} parent=11 // pred_fallthru
          _
        // Predicated region
        $region73: #{tpu_custom_call.1} parent=11 // pred_check
          %p481 = pneg %p385
        $region74: #{tpu_custom_call.1} parent=11 // pred_check_branch
          %483 = sbr.rel (%p481) target = $region76
        $region75: #{tpu_custom_call.1} parent=11 // pred_region
          _
        $region76: #{tpu_custom_call.1} parent=11 // pred_fallthru
          _
      $region12: #{tpu_custom_call.1} parent=5 // pred_fallthru
        _
      %p484 = scmp.lt.s32.totalorder %s27, 2
      // Predicated region
      $region77: #{tpu_custom_call.1} parent=5 // pred_check
        %p485 = pneg %p484
      $region78: #{tpu_custom_call.1} parent=5 // pred_check_branch
        %487 = sbr.rel (%p485) target = $region80
      $region79: #{tpu_custom_call.1} parent=5 // pred_region
        _
      $region80: #{tpu_custom_call.1} parent=5 // pred_fallthru
        _
      %p488 = scmp.le.s32.totalorder 1, %s27
      %p489 = scmp.lt.s32.totalorder %s27, 3
      %p490 = pnand %p488, %p489
      %p491 = pneg %p490
      // Predicated region
      $region81: #{tpu_custom_call.1} parent=5 // pred_check
        _
      $region82: #{tpu_custom_call.1} parent=5 // pred_check_branch
        %493 = sbr.rel (%p490) target = $region84
      $region83: #{tpu_custom_call.1} parent=5 // pred_region
        %s494 = ssub.s32 %s27, 1
        %p495 = scmp.lt.s32.totalorder %s37, 0
        %s496 = scalar_select %p495, %s37, 0
        %s497 = smul.addr %s496, 8
        %s498 = scalar_lea.vmem %s0, %s497
        %p499 = pneg %p65
        %p500 = pneg %p62
        %p501 = scmp.lt.s32.totalorder %s37, 0
        %s502 = scalar_select %p501, %s37, 0
        %s503 = smul.addr %s502, 8
        %s504 = scalar_lea.vmem %s1, %s503
        %p505 = pneg %p91
        %p506 = pneg %p88
        %p507 = pneg %p112
        %p508 = pneg %p109
        %p509 = pneg %p133
        %p510 = pneg %p130
        %p511 = pneg %p154
        %p512 = pneg %p151
        %p513 = pneg %p175
        %p514 = pneg %p172
        %p515 = pneg %p196
        %p516 = pneg %p193
        %p517 = pneg %p217
        %p518 = pneg %p214
        %p519 = pneg %p238
        %p520 = pneg %p235
        %p521 = pneg %p259
        %p522 = pneg %p256
        %p523 = pneg %p280
        %p524 = pneg %p277
        %p525 = pneg %p301
        %p526 = pneg %p298
        %p527 = pneg %p322
        %p528 = pneg %p319
        %p529 = pneg %p343
        %p530 = pneg %p340
        %p531 = pneg %p364
        %p532 = pneg %p361
        %p533 = pneg %p385
        %p534 = pneg %p382
        %p535 = pneg %p413
        %p536 = pneg %p410
        %s537 = sand.u32 %s400, 1
        %s538 = scalar_lea.sflag [#allocation6], %s537
        %s539 = sand.u32 %s400, 1
        %s540 = scalar_lea.vmem [#allocation5], %s539
        %p541 = scmp.lt.s32.totalorder %s37, 0
        %s542 = scalar_select %p541, %s37, 0
        %s543 = smul.addr %s542, 8
        %s544 = scalar_lea.vmem %s0, %s543
        %p545 = scmp.lt.s32.totalorder %s37, 0
        %s546 = scalar_select %p545, %s37, 0
        %s547 = smul.addr %s546, 8
        %s548 = scalar_lea.vmem %s1, %s547
        %v549 = vld [vmem:[%s544] sm:$0xff]
        %v550 = vld [vmem:[%s548] sm:$0xff]
        %v551 = vadd.f32 %v549, %v550
        %v552 = vld [vmem:[%s2] sm:$0xff]
        %v553 = vld [vmem:[%s2 + $0x8] sm:$0xff]
        %v554 = vld [vmem:[%s2 + $0x10] sm:$0xff]
        %v555 = vld [vmem:[%s2 + $0x18] sm:$0xff]
        %v556 = vld [vmem:[%s2 + $0x20] sm:$0xff]
        %v557 = vld [vmem:[%s2 + $0x28] sm:$0xff]
        %v558 = vld [vmem:[%s2 + $0x30] sm:$0xff]
        %v559 = vld [vmem:[%s2 + $0x38] sm:$0xff]
        %v560 = vld [vmem:[%s2 + $0x40] sm:$0xff]
        %v561 = vld [vmem:[%s2 + $0x48] sm:$0xff]
        %v562 = vld [vmem:[%s3] sm:$0xff]
        %v563 = vld [vmem:[%s3 + $0x8] sm:$0xff]
        %v564 = vld [vmem:[%s3 + $0x10] sm:$0xff]
        %v565 = vld [vmem:[%s3 + $0x18] sm:$0xff]
        %v566 = vld [vmem:[%s3 + $0x20] sm:$0xff]
        %v567 = vld [vmem:[%s3 + $0x28] sm:$0xff]
        %v568 = vld [vmem:[%s3 + $0x30] sm:$0xff]
        %v569 = vld [vmem:[%s3 + $0x38] sm:$0xff]
        %v570 = vld [vmem:[%s3 + $0x40] sm:$0xff]
        %v571 = vld [vmem:[%s3 + $0x48] sm:$0xff]
        %573 = vset.pattern.permute.xlu0 0
        %574 = vperm.xlu0 %573, %v562
        %v575 = vpop.permute.xlu0 %574
        %578 = vset.pattern.permute.xlu0 0
        %579 = vperm.xlu0 %578, %v563
        %v580 = vpop.permute.xlu0 %579
        %583 = vset.pattern.permute.xlu0 0
        %584 = vperm.xlu0 %583, %v564
        %v585 = vpop.permute.xlu0 %584
        %588 = vset.pattern.permute.xlu0 0
        %589 = vperm.xlu0 %588, %v565
        %v590 = vpop.permute.xlu0 %589
        %593 = vset.pattern.permute.xlu0 0
        %594 = vperm.xlu0 %593, %v566
        %v595 = vpop.permute.xlu0 %594
        %598 = vset.pattern.permute.xlu0 0
        %599 = vperm.xlu0 %598, %v567
        %v600 = vpop.permute.xlu0 %599
        %603 = vset.pattern.permute.xlu0 0
        %604 = vperm.xlu0 %603, %v568
        %v605 = vpop.permute.xlu0 %604
        %608 = vset.pattern.permute.xlu0 0
        %609 = vperm.xlu0 %608, %v569
        %v610 = vpop.permute.xlu0 %609
        %613 = vset.pattern.permute.xlu0 0
        %614 = vperm.xlu0 %613, %v570
        %v615 = vpop.permute.xlu0 %614
        %618 = vset.pattern.permute.xlu0 0
        %619 = vperm.xlu0 %618, %v571
        %v620 = vpop.permute.xlu0 %619
        %vm622 = vcmask 982016
        %v624 = vsel %vm622, %v552, 0
        %v627 = vsel %vm622, %v553, 0
        %v630 = vsel %vm622, %v554, 0
        %v633 = vsel %vm622, %v555, 0
        %v636 = vsel %vm622, %v556, 0
        %v639 = vsel %vm622, %v557, 0
        %v642 = vsel %vm622, %v558, 0
        %v645 = vsel %vm622, %v559, 0
        %v648 = vsel %vm622, %v560, 0
        %v651 = vsel %vm622, %v561, 0
        %v654 = vsel %vm622, %v551, 0
        %656 = vmatprep.subr.mxu0 0.0
        %657 = vmatpush1.xpose.msra.mxu0 0.0
        %658 = vmatprep.subr.mxu0 0.0
        %659 = vmatpush1.xpose.msra.mxu0 0.0
        %660 = vmatprep.subr.mxu0 0.0
        %661 = vmatpush1.xpose.msra.mxu0 0.0
        %662 = vmatprep.subr.mxu0 0.0
        %663 = vmatpush1.xpose.msra.mxu0 0.0
        %664 = vmatprep.subr.mxu0 0.0
        %665 = vmatpush1.xpose.msra.mxu0 0.0
        %666 = vmatprep.subr.mxu0 0.0
        %667 = vmatpush1.xpose.msra.mxu0 0.0
        %668 = vmatprep.subr.mxu0 0.0
        %669 = vmatpush1.xpose.msra.mxu0 0.0
        %670 = vmatprep.subr.mxu0 0.0
        %671 = vmatpush1.xpose.msra.mxu0 0.0
        %672 = vmatprep.subr.mxu0 0.0
        %673 = vmatpush1.xpose.msra.mxu0 0.0
        %674 = vmatprep.subr.mxu0 0.0
        %675 = vmatpush1.xpose.msra.mxu0 0.0
        %676 = vmatprep.subr.mxu0 0.0
        %677 = vmatpush1.xpose.msra.mxu0 0.0
        %678 = vmatprep.subr.mxu0 0.0
        %679 = vmatpush1.xpose.msra.mxu0 0.0
        %680 = vmatprep.subr.mxu0 0.0
        %681 = vmatpush1.xpose.msra.mxu0 0.0
        %682 = vmatprep.subr.mxu0 0.0
        %683 = vmatpush1.xpose.msra.mxu0 0.0
        %684 = vmatprep.subr.mxu0 0.0
        %685 = vmatpush1.xpose.msra.mxu0 0.0
        %686 = vmatprep.subr.mxu0 0.0
        %687 = vmatpush1.xpose.msra.mxu0 %v654
        %688 = vmatprep.subr.mxu0 0.0
        %689 = vmatpush2.xpose.msra.mxu0 0.0
        %690 = vmatprep.subr.mxu0 0.0
        %691 = vmatpush2.xpose.msra.mxu0 0.0
        %692 = vmatprep.subr.mxu0 0.0
        %693 = vmatpush2.xpose.msra.mxu0 0.0
        %694 = vmatprep.subr.mxu0 0.0
        %695 = vmatpush2.xpose.msra.mxu0 0.0
        %696 = vmatprep.subr.mxu0 0.0
        %697 = vmatpush2.xpose.msra.mxu0 0.0
        %698 = vmatprep.subr.mxu0 0.0
        %699 = vmatpush2.xpose.msra.mxu0 0.0
        %700 = vmatprep.subr.mxu0 0.0
        %701 = vmatpush2.xpose.msra.mxu0 0.0
        %702 = vmatprep.subr.mxu0 0.0
        %703 = vmatpush2.xpose.msra.mxu0 0.0
        %704 = vmatprep.subr.mxu0 0.0
        %705 = vmatpush2.xpose.msra.mxu0 0.0
        %706 = vmatprep.subr.mxu0 0.0
        %707 = vmatpush2.xpose.msra.mxu0 0.0
        %708 = vmatprep.subr.mxu0 0.0
        %709 = vmatpush2.xpose.msra.mxu0 0.0
        %710 = vmatprep.subr.mxu0 0.0
        %711 = vmatpush2.xpose.msra.mxu0 0.0
        %712 = vmatprep.subr.mxu0 0.0
        %713 = vmatpush2.xpose.msra.mxu0 0.0
        %714 = vmatprep.subr.mxu0 0.0
        %715 = vmatpush2.xpose.msra.mxu0 0.0
        %716 = vmatprep.subr.mxu0 0.0
        %717 = vmatpush2.xpose.msra.mxu0 0.0
        %718 = vmatprep.subr.mxu0 0.0
        %719 = vmatpush2.xpose.msra.mxu0 0.0
        %720 = vmatprep.mubr.f32.mxu0 0.0
        %721 = vmatmul.mubr.f32.gmra.mxu0 %v624
        %v722 = vpop.f32.mrf.mxu0
        %v723 = vadd.f32 %v575, %v722
        %v724 = vpop.f32.mrf.mxu0
        %725 = vmatprep.mubr.f32.mxu0 0.0
        %726 = vmatmul.mubr.f32.gmra.mxu0 %v627
        %v727 = vpop.f32.mrf.mxu0
        %v728 = vadd.f32 %v580, %v727
        %v729 = vpop.f32.mrf.mxu0
        %730 = vmatprep.mubr.f32.mxu0 0.0
        %731 = vmatmul.mubr.f32.gmra.mxu0 %v630
        %v732 = vpop.f32.mrf.mxu0
        %v733 = vadd.f32 %v585, %v732
        %v734 = vpop.f32.mrf.mxu0
        %735 = vmatprep.mubr.f32.mxu0 0.0
        %736 = vmatmul.mubr.f32.gmra.mxu0 %v633
        %v737 = vpop.f32.mrf.mxu0
        %v738 = vadd.f32 %v590, %v737
        %v739 = vpop.f32.mrf.mxu0
        %740 = vmatprep.mubr.f32.mxu0 0.0
        %741 = vmatmul.mubr.f32.gmra.mxu0 %v636
        %v742 = vpop.f32.mrf.mxu0
        %v743 = vadd.f32 %v595, %v742
        %v744 = vpop.f32.mrf.mxu0
        %745 = vmatprep.mubr.f32.mxu0 0.0
        %746 = vmatmul.mubr.f32.gmra.mxu0 %v639
        %v747 = vpop.f32.mrf.mxu0
        %v748 = vadd.f32 %v600, %v747
        %v749 = vpop.f32.mrf.mxu0
        %750 = vmatprep.mubr.f32.mxu0 0.0
        %751 = vmatmul.mubr.f32.gmra.mxu0 %v642
        %v752 = vpop.f32.mrf.mxu0
        %v753 = vadd.f32 %v605, %v752
        %v754 = vpop.f32.mrf.mxu0
        %755 = vmatprep.mubr.f32.mxu0 0.0
        %756 = vmatmul.mubr.f32.gmra.mxu0 %v645
        %v757 = vpop.f32.mrf.mxu0
        %v758 = vadd.f32 %v610, %v757
        %v759 = vpop.f32.mrf.mxu0
        %760 = vmatprep.mubr.f32.mxu0 0.0
        %761 = vmatmul.mubr.f32.gmra.mxu0 %v648
        %v762 = vpop.f32.mrf.mxu0
        %v763 = vadd.f32 %v615, %v762
        %v764 = vpop.f32.mrf.mxu0
        %765 = vmatprep.mubr.f32.mxu0 0.0
        %766 = vmatmul.mubr.f32.gmra.mxu0 %v651
        %v767 = vpop.f32.mrf.mxu0
        %v768 = vadd.f32 %v620, %v767
        %v769 = vpop.f32.mrf.mxu0
        %770 = vdwg.mxu0
        %v771 = vmax.f32 %v723, 0.0
        %v772 = vmax.f32 %v728, 0.0
        %v773 = vmax.f32 %v733, 0.0
        %v774 = vmax.f32 %v738, 0.0
        %v775 = vmax.f32 %v743, 0.0
        %v776 = vmax.f32 %v748, 0.0
        %v777 = vmax.f32 %v753, 0.0
        %v778 = vmax.f32 %v758, 0.0
        %v779 = vmax.f32 %v763, 0.0
        %v780 = vmax.f32 %v768, 0.0
        %p781 = scmp.eq.s32.totalorder %s36, 0
        %p782 = scmp.eq.s32.totalorder %s37, 0
        %p783 = pnand %p781, %p782
        %p784 = pneg %p783
        // Predicated region
        $region85: #{tpu_custom_call.1} parent=83 // pred_check
          _
        $region86: #{tpu_custom_call.1} parent=83 // pred_check_branch
          %786 = sbr.rel (%p783) target = $region88
        $region87: #{tpu_custom_call.1} parent=83 // pred_region
          %vm787 = vcmask 7168
          %788 = vst.msk [vmem:[#allocation2] sm:$0xff] %vm787, 0.0
          %789 = vst.msk [vmem:[#allocation2 + $0x8] sm:$0xff] %vm787, 0.0
          %790 = vst.msk [vmem:[#allocation2 + $0x10] sm:$0xff] %vm787, 0.0
          %791 = vst.msk [vmem:[#allocation2 + $0x18] sm:$0xff] %vm787, 0.0
          %792 = vst.msk [vmem:[#allocation2 + $0x20] sm:$0xff] %vm787, 0.0
          %793 = vst.msk [vmem:[#allocation2 + $0x28] sm:$0xff] %vm787, 0.0
          %794 = vst.msk [vmem:[#allocation2 + $0x30] sm:$0xff] %vm787, 0.0
          %795 = vst.msk [vmem:[#allocation2 + $0x38] sm:$0xff] %vm787, 0.0
          %796 = vst.msk [vmem:[#allocation2 + $0x40] sm:$0xff] %vm787, 0.0
          %797 = vst.msk [vmem:[#allocation2 + $0x48] sm:$0xff] %vm787, 0.0
          %798 = vst.msk [vmem:[#allocation3] sm:$0xff] %vm787, 0.0
          %799 = vst.msk [vmem:[#allocation3 + $0x8] sm:$0xff] %vm787, 0.0
          %800 = vst.msk [vmem:[#allocation3 + $0x10] sm:$0xff] %vm787, 0.0
          %801 = vst.msk [vmem:[#allocation3 + $0x18] sm:$0xff] %vm787, 0.0
          %802 = vst.msk [vmem:[#allocation3 + $0x20] sm:$0xff] %vm787, 0.0
          %803 = vst.msk [vmem:[#allocation3 + $0x28] sm:$0xff] %vm787, 0.0
          %804 = vst.msk [vmem:[#allocation3 + $0x30] sm:$0xff] %vm787, 0.0
          %805 = vst.msk [vmem:[#allocation3 + $0x38] sm:$0xff] %vm787, 0.0
          %806 = vst.msk [vmem:[#allocation3 + $0x40] sm:$0xff] %vm787, 0.0
          %807 = vst.msk [vmem:[#allocation3 + $0x48] sm:$0xff] %vm787, 0.0
        $region88: #{tpu_custom_call.1} parent=83 // pred_fallthru
          _
        // Predicated region
        $region89: #{tpu_custom_call.1} parent=83 // pred_check
          %p808 = pneg %p781
        $region90: #{tpu_custom_call.1} parent=83 // pred_check_branch
          %810 = sbr.rel (%p808) target = $region92
        $region91: #{tpu_custom_call.1} parent=83 // pred_region
          %v811 = vlaneseq
          %v812 = vand.u32 %v811, 127
          %s813 = smul.u32 %s37, 8
          %v814 = vstv %s813
          %v815 = vadd.s32 %v812, %v814
          %vm816 = vcmp.lt.s32.totalorder %v815, 2
          %v817 = vsel %vm816, 1, 0
          %vm818 = vcmp.eq.s32.totalorder %v817, 1
          %v819 = vsel %vm818, %v771, 0.0
          %v820 = vsel %vm818, %v772, 0.0
          %v821 = vsel %vm818, %v773, 0.0
          %v822 = vsel %vm818, %v774, 0.0
          %v823 = vsel %vm818, %v775, 0.0
          %v824 = vsel %vm818, %v776, 0.0
          %v825 = vsel %vm818, %v777, 0.0
          %v826 = vsel %vm818, %v778, 0.0
          %v827 = vsel %vm818, %v779, 0.0
          %v828 = vsel %vm818, %v780, 0.0
          %v829 = vld [vmem:[#allocation2] sm:$0xff]
          %v830 = vld [vmem:[#allocation2 + $0x8] sm:$0xff]
          %v831 = vld [vmem:[#allocation2 + $0x10] sm:$0xff]
          %v832 = vld [vmem:[#allocation2 + $0x18] sm:$0xff]
          %v833 = vld [vmem:[#allocation2 + $0x20] sm:$0xff]
          %v834 = vld [vmem:[#allocation2 + $0x28] sm:$0xff]
          %v835 = vld [vmem:[#allocation2 + $0x30] sm:$0xff]
          %v836 = vld [vmem:[#allocation2 + $0x38] sm:$0xff]
          %v837 = vld [vmem:[#allocation2 + $0x40] sm:$0xff]
          %v838 = vld [vmem:[#allocation2 + $0x48] sm:$0xff]
          %vm839 = vcmask 64512
          %v840 = vsel %vm839, %v819, 0.0
          %841 = vadd.xlane.f32.xlu0 %v840
          %v842 = vpop.xlane.xlu0 %841
          %v843 = vsel %vm839, %v820, 0.0
          %844 = vadd.xlane.f32.xlu0 %v843
          %v845 = vpop.xlane.xlu0 %844
          %v846 = vsel %vm839, %v821, 0.0
          %847 = vadd.xlane.f32.xlu0 %v846
          %v848 = vpop.xlane.xlu0 %847
          %v849 = vsel %vm839, %v822, 0.0
          %850 = vadd.xlane.f32.xlu0 %v849
          %v851 = vpop.xlane.xlu0 %850
          %v852 = vsel %vm839, %v823, 0.0
          %853 = vadd.xlane.f32.xlu0 %v852
          %v854 = vpop.xlane.xlu0 %853
          %v855 = vsel %vm839, %v824, 0.0
          %856 = vadd.xlane.f32.xlu0 %v855
          %v857 = vpop.xlane.xlu0 %856
          %v858 = vsel %vm839, %v825, 0.0
          %859 = vadd.xlane.f32.xlu0 %v858
          %v860 = vpop.xlane.xlu0 %859
          %v861 = vsel %vm839, %v826, 0.0
          %862 = vadd.xlane.f32.xlu0 %v861
          %v863 = vpop.xlane.xlu0 %862
          %v864 = vsel %vm839, %v827, 0.0
          %865 = vadd.xlane.f32.xlu0 %v864
          %v866 = vpop.xlane.xlu0 %865
          %v867 = vsel %vm839, %v828, 0.0
          %868 = vadd.xlane.f32.xlu0 %v867
          %v869 = vpop.xlane.xlu0 %868
          %v870 = vadd.f32 %v829, %v842
          %v871 = vadd.f32 %v830, %v845
          %v872 = vadd.f32 %v831, %v848
          %v873 = vadd.f32 %v832, %v851
          %v874 = vadd.f32 %v833, %v854
          %v875 = vadd.f32 %v834, %v857
          %v876 = vadd.f32 %v835, %v860
          %v877 = vadd.f32 %v836, %v863
          %v878 = vadd.f32 %v837, %v866
          %v879 = vadd.f32 %v838, %v869
          %vm880 = vcmask 7168
          %881 = vst.msk [vmem:[#allocation2] sm:$0xff] %vm880, %v870
          %882 = vst.msk [vmem:[#allocation2 + $0x8] sm:$0xff] %vm880, %v871
          %883 = vst.msk [vmem:[#allocation2 + $0x10] sm:$0xff] %vm880, %v872
          %884 = vst.msk [vmem:[#allocation2 + $0x18] sm:$0xff] %vm880, %v873
          %885 = vst.msk [vmem:[#allocation2 + $0x20] sm:$0xff] %vm880, %v874
          %886 = vst.msk [vmem:[#allocation2 + $0x28] sm:$0xff] %vm880, %v875
          %887 = vst.msk [vmem:[#allocation2 + $0x30] sm:$0xff] %vm880, %v876
          %888 = vst.msk [vmem:[#allocation2 + $0x38] sm:$0xff] %vm880, %v877
          %889 = vst.msk [vmem:[#allocation2 + $0x40] sm:$0xff] %vm880, %v878
          %890 = vst.msk [vmem:[#allocation2 + $0x48] sm:$0xff] %vm880, %v879
          %v891 = vld [vmem:[#allocation3] sm:$0xff]
          %v892 = vld [vmem:[#allocation3 + $0x8] sm:$0xff]
          %v893 = vld [vmem:[#allocation3 + $0x10] sm:$0xff]
          %v894 = vld [vmem:[#allocation3 + $0x18] sm:$0xff]
          %v895 = vld [vmem:[#allocation3 + $0x20] sm:$0xff]
          %v896 = vld [vmem:[#allocation3 + $0x28] sm:$0xff]
          %v897 = vld [vmem:[#allocation3 + $0x30] sm:$0xff]
          %v898 = vld [vmem:[#allocation3 + $0x38] sm:$0xff]
          %v899 = vld [vmem:[#allocation3 + $0x40] sm:$0xff]
          %v900 = vld [vmem:[#allocation3 + $0x48] sm:$0xff]
          %v901 = vmul.f32 %v819, %v819
          %v902 = vmul.f32 %v820, %v820
          %v903 = vmul.f32 %v821, %v821
          %v904 = vmul.f32 %v822, %v822
          %v905 = vmul.f32 %v823, %v823
          %v906 = vmul.f32 %v824, %v824
          %v907 = vmul.f32 %v825, %v825
          %v908 = vmul.f32 %v826, %v826
          %v909 = vmul.f32 %v827, %v827
          %v910 = vmul.f32 %v828, %v828
          %v911 = vsel %vm839, %v901, 0.0
          %912 = vadd.xlane.f32.xlu0 %v911
          %v913 = vpop.xlane.xlu0 %912
          %v914 = vsel %vm839, %v902, 0.0
          %915 = vadd.xlane.f32.xlu0 %v914
          %v916 = vpop.xlane.xlu0 %915
          %v917 = vsel %vm839, %v903, 0.0
          %918 = vadd.xlane.f32.xlu0 %v917
          %v919 = vpop.xlane.xlu0 %918
          %v920 = vsel %vm839, %v904, 0.0
          %921 = vadd.xlane.f32.xlu0 %v920
          %v922 = vpop.xlane.xlu0 %921
          %v923 = vsel %vm839, %v905, 0.0
          %924 = vadd.xlane.f32.xlu0 %v923
          %v925 = vpop.xlane.xlu0 %924
          %v926 = vsel %vm839, %v906, 0.0
          %927 = vadd.xlane.f32.xlu0 %v926
          %v928 = vpop.xlane.xlu0 %927
          %v929 = vsel %vm839, %v907, 0.0
          %930 = vadd.xlane.f32.xlu0 %v929
          %v931 = vpop.xlane.xlu0 %930
          %v932 = vsel %vm839, %v908, 0.0
          %933 = vadd.xlane.f32.xlu0 %v932
          %v934 = vpop.xlane.xlu0 %933
          %v935 = vsel %vm839, %v909, 0.0
          %936 = vadd.xlane.f32.xlu0 %v935
          %v937 = vpop.xlane.xlu0 %936
          %v938 = vsel %vm839, %v910, 0.0
          %939 = vadd.xlane.f32.xlu0 %v938
          %v940 = vpop.xlane.xlu0 %939
          %v941 = vadd.f32 %v891, %v913
          %v942 = vadd.f32 %v892, %v916
          %v943 = vadd.f32 %v893, %v919
          %v944 = vadd.f32 %v894, %v922
          %v945 = vadd.f32 %v895, %v925
          %v946 = vadd.f32 %v896, %v928
          %v947 = vadd.f32 %v897, %v931
          %v948 = vadd.f32 %v898, %v934
          %v949 = vadd.f32 %v899, %v937
          %v950 = vadd.f32 %v900, %v940
          %951 = vst.msk [vmem:[#allocation3] sm:$0xff] %vm880, %v941
          %952 = vst.msk [vmem:[#allocation3 + $0x8] sm:$0xff] %vm880, %v942
          %953 = vst.msk [vmem:[#allocation3 + $0x10] sm:$0xff] %vm880, %v943
          %954 = vst.msk [vmem:[#allocation3 + $0x18] sm:$0xff] %vm880, %v944
          %955 = vst.msk [vmem:[#allocation3 + $0x20] sm:$0xff] %vm880, %v945
          %956 = vst.msk [vmem:[#allocation3 + $0x28] sm:$0xff] %vm880, %v946
          %957 = vst.msk [vmem:[#allocation3 + $0x30] sm:$0xff] %vm880, %v947
          %958 = vst.msk [vmem:[#allocation3 + $0x38] sm:$0xff] %vm880, %v948
          %959 = vst.msk [vmem:[#allocation3 + $0x40] sm:$0xff] %vm880, %v949
          %960 = vst.msk [vmem:[#allocation3 + $0x48] sm:$0xff] %vm880, %v950
          %vm961 = vcmask 57344
          %962 = vst.msk [vmem:[%s540] sm:$0x1] %vm961, 0.0
        $region92: #{tpu_custom_call.1} parent=83 // pred_fallthru
          _
        %p963 = scmp.eq.s32.totalorder %s36, 1
        // Predicated region
        $region93: #{tpu_custom_call.1} parent=83 // pred_check
          %p964 = pneg %p963
        $region94: #{tpu_custom_call.1} parent=83 // pred_check_branch
          %966 = sbr.rel (%p964) target = $region96
        $region95: #{tpu_custom_call.1} parent=83 // pred_region
          %v967 = vld [vmem:[%s7] sm:$0xf]
          %v968 = vld [vmem:[#allocation2] sm:$0xff]
          %v969 = vld [vmem:[#allocation2 + $0x8] sm:$0xff]
          %v970 = vld [vmem:[#allocation2 + $0x10] sm:$0xff]
          %v971 = vld [vmem:[#allocation2 + $0x18] sm:$0xff]
          %v972 = vld [vmem:[#allocation2 + $0x20] sm:$0xff]
          %v973 = vld [vmem:[#allocation2 + $0x28] sm:$0xff]
          %v974 = vld [vmem:[#allocation2 + $0x30] sm:$0xff]
          %v975 = vld [vmem:[#allocation2 + $0x38] sm:$0xff]
          %v976 = vld [vmem:[#allocation2 + $0x40] sm:$0xff]
          %v977 = vld [vmem:[#allocation2 + $0x48] sm:$0xff]
          %vm978 = vcmask 654336
          %v980 = vsel %vm978, %v967, 0
          %982 = vmatprep.subr.mxu0 0.0
          %983 = vmatpush1.msra.mxu0 0.0
          %984 = vmatprep.subr.mxu0 0.0
          %985 = vmatpush1.msra.mxu0 0.0
          %986 = vmatprep.subr.mxu0 0.0
          %987 = vmatpush1.msra.mxu0 0.0
          %988 = vmatprep.subr.mxu0 0.0
          %989 = vmatpush1.msra.mxu0 0.0
          %990 = vmatprep.subr.mxu0 0.0
          %991 = vmatpush1.msra.mxu0 0.0
          %992 = vmatprep.subr.mxu0 0.0
          %993 = vmatpush1.msra.mxu0 0.0
          %994 = vmatprep.subr.mxu0 0.0
          %995 = vmatpush1.msra.mxu0 %v977
          %996 = vmatprep.subr.mxu0 0.0
          %997 = vmatpush1.msra.mxu0 %v976
          %998 = vmatprep.subr.mxu0 0.0
          %999 = vmatpush1.msra.mxu0 %v975
          %1000 = vmatprep.subr.mxu0 0.0
          %1001 = vmatpush1.msra.mxu0 %v974
          %1002 = vmatprep.subr.mxu0 0.0
          %1003 = vmatpush1.msra.mxu0 %v973
          %1004 = vmatprep.subr.mxu0 0.0
          %1005 = vmatpush1.msra.mxu0 %v972
          %1006 = vmatprep.subr.mxu0 0.0
          %1007 = vmatpush1.msra.mxu0 %v971
          %1008 = vmatprep.subr.mxu0 0.0
          %1009 = vmatpush1.msra.mxu0 %v970
          %1010 = vmatprep.subr.mxu0 0.0
          %1011 = vmatpush1.msra.mxu0 %v969
          %1012 = vmatprep.subr.mxu0 0.0
          %1013 = vmatpush1.msra.mxu0 %v968
          %1014 = vmatprep.subr.mxu0 0.0
          %1015 = vmatpush2.msra.mxu0 0.0
          %1016 = vmatprep.subr.mxu0 0.0
          %1017 = vmatpush2.msra.mxu0 0.0
          %1018 = vmatprep.subr.mxu0 0.0
          %1019 = vmatpush2.msra.mxu0 0.0
          %1020 = vmatprep.subr.mxu0 0.0
          %1021 = vmatpush2.msra.mxu0 0.0
          %1022 = vmatprep.subr.mxu0 0.0
          %1023 = vmatpush2.msra.mxu0 0.0
          %1024 = vmatprep.subr.mxu0 0.0
          %1025 = vmatpush2.msra.mxu0 0.0
          %1026 = vmatprep.subr.mxu0 0.0
          %1027 = vmatpush2.msra.mxu0 0.0
          %1028 = vmatprep.subr.mxu0 0.0
          %1029 = vmatpush2.msra.mxu0 0.0
          %1030 = vmatprep.subr.mxu0 0.0
          %1031 = vmatpush2.msra.mxu0 0.0
          %1032 = vmatprep.subr.mxu0 0.0
          %1033 = vmatpush2.msra.mxu0 0.0
          %1034 = vmatprep.subr.mxu0 0.0
          %1035 = vmatpush2.msra.mxu0 0.0
          %1036 = vmatprep.subr.mxu0 0.0
          %1037 = vmatpush2.msra.mxu0 0.0
          %1038 = vmatprep.subr.mxu0 0.0
          %1039 = vmatpush2.msra.mxu0 0.0
          %1040 = vmatprep.subr.mxu0 0.0
          %1041 = vmatpush2.msra.mxu0 0.0
          %1042 = vmatprep.subr.mxu0 0.0
          %1043 = vmatpush2.msra.mxu0 0.0
          %1044 = vmatprep.subr.mxu0 0.0
          %1045 = vmatpush2.msra.mxu0 0.0
          %1046 = vmatprep.mubr.f32.mxu0 0.0
          %1047 = vmatmul.mubr.f32.gmra.mxu0 %v980
          %v1048 = vpop.f32.mrf.mxu0
          %v1049 = vadd.f32 0.0, %v1048
          %v1050 = vpop.f32.mrf.mxu0
          %1051 = vdwg.mxu0
          %v1052 = vld [vmem:[#allocation3] sm:$0xff]
          %v1053 = vld [vmem:[#allocation3 + $0x8] sm:$0xff]
          %v1054 = vld [vmem:[#allocation3 + $0x10] sm:$0xff]
          %v1055 = vld [vmem:[#allocation3 + $0x18] sm:$0xff]
          %v1056 = vld [vmem:[#allocation3 + $0x20] sm:$0xff]
          %v1057 = vld [vmem:[#allocation3 + $0x28] sm:$0xff]
          %v1058 = vld [vmem:[#allocation3 + $0x30] sm:$0xff]
          %v1059 = vld [vmem:[#allocation3 + $0x38] sm:$0xff]
          %v1060 = vld [vmem:[#allocation3 + $0x40] sm:$0xff]
          %v1061 = vld [vmem:[#allocation3 + $0x48] sm:$0xff]
          %1062 = vmatprep.subr.mxu0 0.0
          %1063 = vmatpush1.msra.mxu0 0.0
          %1064 = vmatprep.subr.mxu0 0.0
          %1065 = vmatpush1.msra.mxu0 0.0
          %1066 = vmatprep.subr.mxu0 0.0
          %1067 = vmatpush1.msra.mxu0 0.0
          %1068 = vmatprep.subr.mxu0 0.0
          %1069 = vmatpush1.msra.mxu0 0.0
          %1070 = vmatprep.subr.mxu0 0.0
          %1071 = vmatpush1.msra.mxu0 0.0
          %1072 = vmatprep.subr.mxu0 0.0
          %1073 = vmatpush1.msra.mxu0 0.0
          %1074 = vmatprep.subr.mxu0 0.0
          %1075 = vmatpush1.msra.mxu0 %v1061
          %1076 = vmatprep.subr.mxu0 0.0
          %1077 = vmatpush1.msra.mxu0 %v1060
          %1078 = vmatprep.subr.mxu0 0.0
          %1079 = vmatpush1.msra.mxu0 %v1059
          %1080 = vmatprep.subr.mxu0 0.0
          %1081 = vmatpush1.msra.mxu0 %v1058
          %1082 = vmatprep.subr.mxu0 0.0
          %1083 = vmatpush1.msra.mxu0 %v1057
          %1084 = vmatprep.subr.mxu0 0.0
          %1085 = vmatpush1.msra.mxu0 %v1056
          %1086 = vmatprep.subr.mxu0 0.0
          %1087 = vmatpush1.msra.mxu0 %v1055
          %1088 = vmatprep.subr.mxu0 0.0
          %1089 = vmatpush1.msra.mxu0 %v1054
          %1090 = vmatprep.subr.mxu0 0.0
          %1091 = vmatpush1.msra.mxu0 %v1053
          %1092 = vmatprep.subr.mxu0 0.0
          %1093 = vmatpush1.msra.mxu0 %v1052
          %1094 = vmatprep.subr.mxu0 0.0
          %1095 = vmatpush2.msra.mxu0 0.0
          %1096 = vmatprep.subr.mxu0 0.0
          %1097 = vmatpush2.msra.mxu0 0.0
          %1098 = vmatprep.subr.mxu0 0.0
          %1099 = vmatpush2.msra.mxu0 0.0
          %1100 = vmatprep.subr.mxu0 0.0
          %1101 = vmatpush2.msra.mxu0 0.0
          %1102 = vmatprep.subr.mxu0 0.0
          %1103 = vmatpush2.msra.mxu0 0.0
          %1104 = vmatprep.subr.mxu0 0.0
          %1105 = vmatpush2.msra.mxu0 0.0
          %1106 = vmatprep.subr.mxu0 0.0
          %1107 = vmatpush2.msra.mxu0 0.0
          %1108 = vmatprep.subr.mxu0 0.0
          %1109 = vmatpush2.msra.mxu0 0.0
          %1110 = vmatprep.subr.mxu0 0.0
          %1111 = vmatpush2.msra.mxu0 0.0
          %1112 = vmatprep.subr.mxu0 0.0
          %1113 = vmatpush2.msra.mxu0 0.0
          %1114 = vmatprep.subr.mxu0 0.0
          %1115 = vmatpush2.msra.mxu0 0.0
          %1116 = vmatprep.subr.mxu0 0.0
          %1117 = vmatpush2.msra.mxu0 0.0
          %1118 = vmatprep.subr.mxu0 0.0
          %1119 = vmatpush2.msra.mxu0 0.0
          %1120 = vmatprep.subr.mxu0 0.0
          %1121 = vmatpush2.msra.mxu0 0.0
          %1122 = vmatprep.subr.mxu0 0.0
          %1123 = vmatpush2.msra.mxu0 0.0
          %1124 = vmatprep.subr.mxu0 0.0
          %1125 = vmatpush2.msra.mxu0 0.0
          %1126 = vmatprep.mubr.f32.mxu0 0.0
          %1127 = vmatmul.mubr.f32.gmra.mxu0 %v980
          %v1128 = vpop.f32.mrf.mxu0
          %v1129 = vadd.f32 0.0, %v1128
          %v1130 = vpop.f32.mrf.mxu0
          %1131 = vdwg.mxu0
          %v1132 = vmul.f32 %v1049, 0.025
          %v1133 = vmul.f32 %v1129, 0.025
          %v1134 = vmul.f32 %v1132, %v1132
          %v1135 = vsub.f32 %v1133, %v1134
          %v1136 = vmax.f32 %v1135, 0.0
          %v1137 = vld [vmem:[%s4] sm:$0xf]
          %v1138 = vadd.f32 %v1136, 1e-05
          %v1139 = vrsqrt.pop %v1138
          %v1140 = vmul.f32 %v1137, %v1139
          %v1141 = vld [vmem:[%s5] sm:$0xf]
          %v1142 = vmul.f32 %v1132, %v1140
          %v1143 = vsub.f32 %v1141, %v1142
          %v1144 = vld [vmem:[%s6] sm:$0xff]
          %v1145 = vld [vmem:[%s6 + $0x8] sm:$0xff]
          %v1146 = vld [vmem:[%s6 + $0x10] sm:$0xff]
          %v1147 = vld [vmem:[%s6 + $0x18] sm:$0xff]
          %v1148 = vld [vmem:[%s6 + $0x20] sm:$0xff]
          %v1149 = vld [vmem:[%s6 + $0x28] sm:$0xff]
          %v1150 = vld [vmem:[%s6 + $0x30] sm:$0xff]
          %v1151 = vld [vmem:[%s6 + $0x38] sm:$0xff]
          %v1152 = vld [vmem:[%s6 + $0x40] sm:$0xff]
          %v1153 = vld [vmem:[%s6 + $0x48] sm:$0xff]
          %vm1154 = vcmask 31744
          %v1156 = vsel %vm1154, %v1144, 0
          %v1159 = vsel %vm1154, %v1145, 0
          %v1162 = vsel %vm1154, %v1146, 0
          %v1165 = vsel %vm1154, %v1147, 0
          %v1168 = vsel %vm1154, %v1148, 0
          %v1171 = vsel %vm1154, %v1149, 0
          %v1174 = vsel %vm1154, %v1150, 0
          %v1177 = vsel %vm1154, %v1151, 0
          %v1180 = vsel %vm1154, %v1152, 0
          %v1183 = vsel %vm1154, %v1153, 0
          %vm1185 = vcmask 1043456
          %v1187 = vsel %vm1185, %v1140, 0
          %1189 = vmatprep.subr.mxu0 0.0
          %1190 = vmatpush1.msra.mxu0 0.0
          %1191 = vmatprep.subr.mxu0 0.0
          %1192 = vmatpush1.msra.mxu0 0.0
          %1193 = vmatprep.subr.mxu0 0.0
          %1194 = vmatpush1.msra.mxu0 0.0
          %1195 = vmatprep.subr.mxu0 0.0
          %1196 = vmatpush1.msra.mxu0 0.0
          %1197 = vmatprep.subr.mxu0 0.0
          %1198 = vmatpush1.msra.mxu0 0.0
          %1199 = vmatprep.subr.mxu0 0.0
          %1200 = vmatpush1.msra.mxu0 0.0
          %1201 = vmatprep.subr.mxu0 0.0
          %1202 = vmatpush1.msra.mxu0 0.0
          %1203 = vmatprep.subr.mxu0 0.0
          %1204 = vmatpush1.msra.mxu0 0.0
          %1205 = vmatprep.subr.mxu0 0.0
          %1206 = vmatpush1.msra.mxu0 0.0
          %1207 = vmatprep.subr.mxu0 0.0
          %1208 = vmatpush1.msra.mxu0 0.0
          %1209 = vmatprep.subr.mxu0 0.0
          %1210 = vmatpush1.msra.mxu0 0.0
          %1211 = vmatprep.subr.mxu0 0.0
          %1212 = vmatpush1.msra.mxu0 0.0
          %1213 = vmatprep.subr.mxu0 0.0
          %1214 = vmatpush1.msra.mxu0 0.0
          %1215 = vmatprep.subr.mxu0 0.0
          %1216 = vmatpush1.msra.mxu0 0.0
          %1217 = vmatprep.subr.mxu0 0.0
          %1218 = vmatpush1.msra.mxu0 0.0
          %1219 = vmatprep.subr.mxu0 0.0
          %1220 = vmatpush1.msra.mxu0 %v1187
          %1221 = vmatprep.subr.mxu0 0.0
          %1222 = vmatpush2.msra.mxu0 0.0
          %1223 = vmatprep.subr.mxu0 0.0
          %1224 = vmatpush2.msra.mxu0 0.0
          %1225 = vmatprep.subr.mxu0 0.0
          %1226 = vmatpush2.msra.mxu0 0.0
          %1227 = vmatprep.subr.mxu0 0.0
          %1228 = vmatpush2.msra.mxu0 0.0
          %1229 = vmatprep.subr.mxu0 0.0
          %1230 = vmatpush2.msra.mxu0 0.0
          %1231 = vmatprep.subr.mxu0 0.0
          %1232 = vmatpush2.msra.mxu0 0.0
          %1233 = vmatprep.subr.mxu0 0.0
          %1234 = vmatpush2.msra.mxu0 0.0
          %1235 = vmatprep.subr.mxu0 0.0
          %1236 = vmatpush2.msra.mxu0 0.0
          %1237 = vmatprep.subr.mxu0 0.0
          %1238 = vmatpush2.msra.mxu0 0.0
          %1239 = vmatprep.subr.mxu0 0.0
          %1240 = vmatpush2.msra.mxu0 0.0
          %1241 = vmatprep.subr.mxu0 0.0
          %1242 = vmatpush2.msra.mxu0 0.0
          %1243 = vmatprep.subr.mxu0 0.0
          %1244 = vmatpush2.msra.mxu0 0.0
          %1245 = vmatprep.subr.mxu0 0.0
          %1246 = vmatpush2.msra.mxu0 0.0
          %1247 = vmatprep.subr.mxu0 0.0
          %1248 = vmatpush2.msra.mxu0 0.0
          %1249 = vmatprep.subr.mxu0 0.0
          %1250 = vmatpush2.msra.mxu0 0.0
          %1251 = vmatprep.subr.mxu0 0.0
          %1252 = vmatpush2.msra.mxu0 0.0
          %1253 = vmatprep.mubr.f32.mxu0 0.0
          %1254 = vmatmul.mubr.f32.gmra.mxu0 %v1156
          %v1255 = vpop.f32.mrf.mxu0
          %v1256 = vadd.f32 0.0, %v1255
          %v1257 = vpop.f32.mrf.mxu0
          %1258 = vmatprep.mubr.f32.mxu0 0.0
          %1259 = vmatmul.mubr.f32.gmra.mxu0 %v1159
          %v1260 = vpop.f32.mrf.mxu0
          %v1261 = vadd.f32 0.0, %v1260
          %v1262 = vpop.f32.mrf.mxu0
          %1263 = vmatprep.mubr.f32.mxu0 0.0
          %1264 = vmatmul.mubr.f32.gmra.mxu0 %v1162
          %v1265 = vpop.f32.mrf.mxu0
          %v1266 = vadd.f32 0.0, %v1265
          %v1267 = vpop.f32.mrf.mxu0
          %1268 = vmatprep.mubr.f32.mxu0 0.0
          %1269 = vmatmul.mubr.f32.gmra.mxu0 %v1165
          %v1270 = vpop.f32.mrf.mxu0
          %v1271 = vadd.f32 0.0, %v1270
          %v1272 = vpop.f32.mrf.mxu0
          %1273 = vmatprep.mubr.f32.mxu0 0.0
          %1274 = vmatmul.mubr.f32.gmra.mxu0 %v1168
          %v1275 = vpop.f32.mrf.mxu0
          %v1276 = vadd.f32 0.0, %v1275
          %v1277 = vpop.f32.mrf.mxu0
          %1278 = vmatprep.mubr.f32.mxu0 0.0
          %1279 = vmatmul.mubr.f32.gmra.mxu0 %v1171
          %v1280 = vpop.f32.mrf.mxu0
          %v1281 = vadd.f32 0.0, %v1280
          %v1282 = vpop.f32.mrf.mxu0
          %1283 = vmatprep.mubr.f32.mxu0 0.0
          %1284 = vmatmul.mubr.f32.gmra.mxu0 %v1174
          %v1285 = vpop.f32.mrf.mxu0
          %v1286 = vadd.f32 0.0, %v1285
          %v1287 = vpop.f32.mrf.mxu0
          %1288 = vmatprep.mubr.f32.mxu0 0.0
          %1289 = vmatmul.mubr.f32.gmra.mxu0 %v1177
          %v1290 = vpop.f32.mrf.mxu0
          %v1291 = vadd.f32 0.0, %v1290
          %v1292 = vpop.f32.mrf.mxu0
          %1293 = vmatprep.mubr.f32.mxu0 0.0
          %1294 = vmatmul.mubr.f32.gmra.mxu0 %v1180
          %v1295 = vpop.f32.mrf.mxu0
          %v1296 = vadd.f32 0.0, %v1295
          %v1297 = vpop.f32.mrf.mxu0
          %1298 = vmatprep.mubr.f32.mxu0 0.0
          %1299 = vmatmul.mubr.f32.gmra.mxu0 %v1183
          %v1300 = vpop.f32.mrf.mxu0
          %v1301 = vadd.f32 0.0, %v1300
          %v1302 = vpop.f32.mrf.mxu0
          %1303 = vdwg.mxu0
          %v1305 = vsel %vm1185, %v1143, 0
          %1307 = vmatprep.subr.mxu0 0.0
          %1308 = vmatpush1.msra.mxu0 0.0
          %1309 = vmatprep.subr.mxu0 0.0
          %1310 = vmatpush1.msra.mxu0 0.0
          %1311 = vmatprep.subr.mxu0 0.0
          %1312 = vmatpush1.msra.mxu0 0.0
          %1313 = vmatprep.subr.mxu0 0.0
          %1314 = vmatpush1.msra.mxu0 0.0
          %1315 = vmatprep.subr.mxu0 0.0
          %1316 = vmatpush1.msra.mxu0 0.0
          %1317 = vmatprep.subr.mxu0 0.0
          %1318 = vmatpush1.msra.mxu0 0.0
          %1319 = vmatprep.subr.mxu0 0.0
          %1320 = vmatpush1.msra.mxu0 0.0
          %1321 = vmatprep.subr.mxu0 0.0
          %1322 = vmatpush1.msra.mxu0 0.0
          %1323 = vmatprep.subr.mxu0 0.0
          %1324 = vmatpush1.msra.mxu0 0.0
          %1325 = vmatprep.subr.mxu0 0.0
          %1326 = vmatpush1.msra.mxu0 0.0
          %1327 = vmatprep.subr.mxu0 0.0
          %1328 = vmatpush1.msra.mxu0 0.0
          %1329 = vmatprep.subr.mxu0 0.0
          %1330 = vmatpush1.msra.mxu0 0.0
          %1331 = vmatprep.subr.mxu0 0.0
          %1332 = vmatpush1.msra.mxu0 0.0
          %1333 = vmatprep.subr.mxu0 0.0
          %1334 = vmatpush1.msra.mxu0 0.0
          %1335 = vmatprep.subr.mxu0 0.0
          %1336 = vmatpush1.msra.mxu0 0.0
          %1337 = vmatprep.subr.mxu0 0.0
          %1338 = vmatpush1.msra.mxu0 %v1305
          %1339 = vmatprep.subr.mxu0 0.0
          %1340 = vmatpush2.msra.mxu0 0.0
          %1341 = vmatprep.subr.mxu0 0.0
          %1342 = vmatpush2.msra.mxu0 0.0
          %1343 = vmatprep.subr.mxu0 0.0
          %1344 = vmatpush2.msra.mxu0 0.0
          %1345 = vmatprep.subr.mxu0 0.0
          %1346 = vmatpush2.msra.mxu0 0.0
          %1347 = vmatprep.subr.mxu0 0.0
          %1348 = vmatpush2.msra.mxu0 0.0
          %1349 = vmatprep.subr.mxu0 0.0
          %1350 = vmatpush2.msra.mxu0 0.0
          %1351 = vmatprep.subr.mxu0 0.0
          %1352 = vmatpush2.msra.mxu0 0.0
          %1353 = vmatprep.subr.mxu0 0.0
          %1354 = vmatpush2.msra.mxu0 0.0
          %1355 = vmatprep.subr.mxu0 0.0
          %1356 = vmatpush2.msra.mxu0 0.0
          %1357 = vmatprep.subr.mxu0 0.0
          %1358 = vmatpush2.msra.mxu0 0.0
          %1359 = vmatprep.subr.mxu0 0.0
          %1360 = vmatpush2.msra.mxu0 0.0
          %1361 = vmatprep.subr.mxu0 0.0
          %1362 = vmatpush2.msra.mxu0 0.0
          %1363 = vmatprep.subr.mxu0 0.0
          %1364 = vmatpush2.msra.mxu0 0.0
          %1365 = vmatprep.subr.mxu0 0.0
          %1366 = vmatpush2.msra.mxu0 0.0
          %1367 = vmatprep.subr.mxu0 0.0
          %1368 = vmatpush2.msra.mxu0 0.0
          %1369 = vmatprep.subr.mxu0 0.0
          %1370 = vmatpush2.msra.mxu0 0.0
          %1371 = vmatprep.mubr.f32.mxu0 0.0
          %1372 = vmatmul.mubr.f32.gmra.mxu0 %v1156
          %v1373 = vpop.f32.mrf.mxu0
          %v1374 = vadd.f32 0.0, %v1373
          %v1375 = vpop.f32.mrf.mxu0
          %1376 = vmatprep.mubr.f32.mxu0 0.0
          %1377 = vmatmul.mubr.f32.gmra.mxu0 %v1159
          %v1378 = vpop.f32.mrf.mxu0
          %v1379 = vadd.f32 0.0, %v1378
          %v1380 = vpop.f32.mrf.mxu0
          %1381 = vmatprep.mubr.f32.mxu0 0.0
          %1382 = vmatmul.mubr.f32.gmra.mxu0 %v1162
          %v1383 = vpop.f32.mrf.mxu0
          %v1384 = vadd.f32 0.0, %v1383
          %v1385 = vpop.f32.mrf.mxu0
          %1386 = vmatprep.mubr.f32.mxu0 0.0
          %1387 = vmatmul.mubr.f32.gmra.mxu0 %v1165
          %v1388 = vpop.f32.mrf.mxu0
          %v1389 = vadd.f32 0.0, %v1388
          %v1390 = vpop.f32.mrf.mxu0
          %1391 = vmatprep.mubr.f32.mxu0 0.0
          %1392 = vmatmul.mubr.f32.gmra.mxu0 %v1168
          %v1393 = vpop.f32.mrf.mxu0
          %v1394 = vadd.f32 0.0, %v1393
          %v1395 = vpop.f32.mrf.mxu0
          %1396 = vmatprep.mubr.f32.mxu0 0.0
          %1397 = vmatmul.mubr.f32.gmra.mxu0 %v1171
          %v1398 = vpop.f32.mrf.mxu0
          %v1399 = vadd.f32 0.0, %v1398
          %v1400 = vpop.f32.mrf.mxu0
          %1401 = vmatprep.mubr.f32.mxu0 0.0
          %1402 = vmatmul.mubr.f32.gmra.mxu0 %v1174
          %v1403 = vpop.f32.mrf.mxu0
          %v1404 = vadd.f32 0.0, %v1403
          %v1405 = vpop.f32.mrf.mxu0
          %1406 = vmatprep.mubr.f32.mxu0 0.0
          %1407 = vmatmul.mubr.f32.gmra.mxu0 %v1177
          %v1408 = vpop.f32.mrf.mxu0
          %v1409 = vadd.f32 0.0, %v1408
          %v1410 = vpop.f32.mrf.mxu0
          %1411 = vmatprep.mubr.f32.mxu0 0.0
          %1412 = vmatmul.mubr.f32.gmra.mxu0 %v1180
          %v1413 = vpop.f32.mrf.mxu0
          %v1414 = vadd.f32 0.0, %v1413
          %v1415 = vpop.f32.mrf.mxu0
          %1416 = vmatprep.mubr.f32.mxu0 0.0
          %1417 = vmatmul.mubr.f32.gmra.mxu0 %v1183
          %v1418 = vpop.f32.mrf.mxu0
          %v1419 = vadd.f32 0.0, %v1418
          %v1420 = vpop.f32.mrf.mxu0
          %1421 = vdwg.mxu0
          %1423 = vset.pattern.permute.xlu0 0
          %1424 = vperm.xlu0 %1423, %v1256
          %v1425 = vpop.permute.xlu0 %1424
          %1428 = vset.pattern.permute.xlu0 0
          %1429 = vperm.xlu0 %1428, %v1261
          %v1430 = vpop.permute.xlu0 %1429
          %1433 = vset.pattern.permute.xlu0 0
          %1434 = vperm.xlu0 %1433, %v1266
          %v1435 = vpop.permute.xlu0 %1434
          %1438 = vset.pattern.permute.xlu0 0
          %1439 = vperm.xlu0 %1438, %v1271
          %v1440 = vpop.permute.xlu0 %1439
          %1443 = vset.pattern.permute.xlu0 0
          %1444 = vperm.xlu0 %1443, %v1276
          %v1445 = vpop.permute.xlu0 %1444
          %1448 = vset.pattern.permute.xlu0 0
          %1449 = vperm.xlu0 %1448, %v1281
          %v1450 = vpop.permute.xlu0 %1449
          %1453 = vset.pattern.permute.xlu0 0
          %1454 = vperm.xlu0 %1453, %v1286
          %v1455 = vpop.permute.xlu0 %1454
          %1458 = vset.pattern.permute.xlu0 0
          %1459 = vperm.xlu0 %1458, %v1291
          %v1460 = vpop.permute.xlu0 %1459
          %1463 = vset.pattern.permute.xlu0 0
          %1464 = vperm.xlu0 %1463, %v1296
          %v1465 = vpop.permute.xlu0 %1464
          %1468 = vset.pattern.permute.xlu0 0
          %1469 = vperm.xlu0 %1468, %v1301
          %v1470 = vpop.permute.xlu0 %1469
          %v1472 = vmul.f32 %v771, %v1425
          %v1473 = vmul.f32 %v772, %v1430
          %v1474 = vmul.f32 %v773, %v1435
          %v1475 = vmul.f32 %v774, %v1440
          %v1476 = vmul.f32 %v775, %v1445
          %v1477 = vmul.f32 %v776, %v1450
          %v1478 = vmul.f32 %v777, %v1455
          %v1479 = vmul.f32 %v778, %v1460
          %v1480 = vmul.f32 %v779, %v1465
          %v1481 = vmul.f32 %v780, %v1470
          %1483 = vset.pattern.permute.xlu0 0
          %1484 = vperm.xlu0 %1483, %v1374
          %v1485 = vpop.permute.xlu0 %1484
          %1488 = vset.pattern.permute.xlu0 0
          %1489 = vperm.xlu0 %1488, %v1379
          %v1490 = vpop.permute.xlu0 %1489
          %1493 = vset.pattern.permute.xlu0 0
          %1494 = vperm.xlu0 %1493, %v1384
          %v1495 = vpop.permute.xlu0 %1494
          %1498 = vset.pattern.permute.xlu0 0
          %1499 = vperm.xlu0 %1498, %v1389
          %v1500 = vpop.permute.xlu0 %1499
          %1503 = vset.pattern.permute.xlu0 0
          %1504 = vperm.xlu0 %1503, %v1394
          %v1505 = vpop.permute.xlu0 %1504
          %1508 = vset.pattern.permute.xlu0 0
          %1509 = vperm.xlu0 %1508, %v1399
          %v1510 = vpop.permute.xlu0 %1509
          %1513 = vset.pattern.permute.xlu0 0
          %1514 = vperm.xlu0 %1513, %v1404
          %v1515 = vpop.permute.xlu0 %1514
          %1518 = vset.pattern.permute.xlu0 0
          %1519 = vperm.xlu0 %1518, %v1409
          %v1520 = vpop.permute.xlu0 %1519
          %1523 = vset.pattern.permute.xlu0 0
          %1524 = vperm.xlu0 %1523, %v1414
          %v1525 = vpop.permute.xlu0 %1524
          %1528 = vset.pattern.permute.xlu0 0
          %1529 = vperm.xlu0 %1528, %v1419
          %v1530 = vpop.permute.xlu0 %1529
          %v1532 = vadd.f32 %v1472, %v1485
          %v1533 = vadd.f32 %v1473, %v1490
          %v1534 = vadd.f32 %v1474, %v1495
          %v1535 = vadd.f32 %v1475, %v1500
          %v1536 = vadd.f32 %v1476, %v1505
          %v1537 = vadd.f32 %v1477, %v1510
          %v1538 = vadd.f32 %v1478, %v1515
          %v1539 = vadd.f32 %v1479, %v1520
          %v1540 = vadd.f32 %v1480, %v1525
          %v1541 = vadd.f32 %v1481, %v1530
          %v1542 = vld [vmem:[%s8] sm:$0xff]
          %v1543 = vld [vmem:[%s8 + $0x8] sm:$0xff]
          %v1544 = vld [vmem:[%s8 + $0x10] sm:$0xff]
          %v1545 = vld [vmem:[%s8 + $0x18] sm:$0xff]
          %v1546 = vld [vmem:[%s9] sm:$0xff]
          %v1547 = vld [vmem:[%s9 + $0x8] sm:$0xff]
          %v1548 = vld [vmem:[%s9 + $0x10] sm:$0xff]
          %v1549 = vld [vmem:[%s9 + $0x18] sm:$0xff]
          %1551 = vset.pattern.permute.xlu0 0
          %1552 = vperm.xlu0 %1551, %v1546
          %v1553 = vpop.permute.xlu0 %1552
          %1556 = vset.pattern.permute.xlu0 0
          %1557 = vperm.xlu0 %1556, %v1547
          %v1558 = vpop.permute.xlu0 %1557
          %1561 = vset.pattern.permute.xlu0 0
          %1562 = vperm.xlu0 %1561, %v1548
          %v1563 = vpop.permute.xlu0 %1562
          %1566 = vset.pattern.permute.xlu0 0
          %1567 = vperm.xlu0 %1566, %v1549
          %v1568 = vpop.permute.xlu0 %1567
          %v1571 = vsel %vm978, %v1542, 0
          %v1574 = vsel %vm978, %v1543, 0
          %v1577 = vsel %vm978, %v1544, 0
          %v1580 = vsel %vm978, %v1545, 0
          %1582 = vmatprep.subr.mxu0 0.0
          %1583 = vmatpush1.msra.mxu0 0.0
          %1584 = vmatprep.subr.mxu0 0.0
          %1585 = vmatpush1.msra.mxu0 0.0
          %1586 = vmatprep.subr.mxu0 0.0
          %1587 = vmatpush1.msra.mxu0 0.0
          %1588 = vmatprep.subr.mxu0 0.0
          %1589 = vmatpush1.msra.mxu0 0.0
          %1590 = vmatprep.subr.mxu0 0.0
          %1591 = vmatpush1.msra.mxu0 0.0
          %1592 = vmatprep.subr.mxu0 0.0
          %1593 = vmatpush1.msra.mxu0 0.0
          %1594 = vmatprep.subr.mxu0 0.0
          %1595 = vmatpush1.msra.mxu0 %v1541
          %1596 = vmatprep.subr.mxu0 0.0
          %1597 = vmatpush1.msra.mxu0 %v1540
          %1598 = vmatprep.subr.mxu0 0.0
          %1599 = vmatpush1.msra.mxu0 %v1539
          %1600 = vmatprep.subr.mxu0 0.0
          %1601 = vmatpush1.msra.mxu0 %v1538
          %1602 = vmatprep.subr.mxu0 0.0
          %1603 = vmatpush1.msra.mxu0 %v1537
          %1604 = vmatprep.subr.mxu0 0.0
          %1605 = vmatpush1.msra.mxu0 %v1536
          %1606 = vmatprep.subr.mxu0 0.0
          %1607 = vmatpush1.msra.mxu0 %v1535
          %1608 = vmatprep.subr.mxu0 0.0
          %1609 = vmatpush1.msra.mxu0 %v1534
          %1610 = vmatprep.subr.mxu0 0.0
          %1611 = vmatpush1.msra.mxu0 %v1533
          %1612 = vmatprep.subr.mxu0 0.0
          %1613 = vmatpush1.msra.mxu0 %v1532
          %1614 = vmatprep.subr.mxu0 0.0
          %1615 = vmatpush2.msra.mxu0 0.0
          %1616 = vmatprep.subr.mxu0 0.0
          %1617 = vmatpush2.msra.mxu0 0.0
          %1618 = vmatprep.subr.mxu0 0.0
          %1619 = vmatpush2.msra.mxu0 0.0
          %1620 = vmatprep.subr.mxu0 0.0
          %1621 = vmatpush2.msra.mxu0 0.0
          %1622 = vmatprep.subr.mxu0 0.0
          %1623 = vmatpush2.msra.mxu0 0.0
          %1624 = vmatprep.subr.mxu0 0.0
          %1625 = vmatpush2.msra.mxu0 0.0
          %1626 = vmatprep.subr.mxu0 0.0
          %1627 = vmatpush2.msra.mxu0 0.0
          %1628 = vmatprep.subr.mxu0 0.0
          %1629 = vmatpush2.msra.mxu0 0.0
          %1630 = vmatprep.subr.mxu0 0.0
          %1631 = vmatpush2.msra.mxu0 0.0
          %1632 = vmatprep.subr.mxu0 0.0
          %1633 = vmatpush2.msra.mxu0 0.0
          %1634 = vmatprep.subr.mxu0 0.0
          %1635 = vmatpush2.msra.mxu0 0.0
          %1636 = vmatprep.subr.mxu0 0.0
          %1637 = vmatpush2.msra.mxu0 0.0
          %1638 = vmatprep.subr.mxu0 0.0
          %1639 = vmatpush2.msra.mxu0 0.0
          %1640 = vmatprep.subr.mxu0 0.0
          %1641 = vmatpush2.msra.mxu0 0.0
          %1642 = vmatprep.subr.mxu0 0.0
          %1643 = vmatpush2.msra.mxu0 0.0
          %1644 = vmatprep.subr.mxu0 0.0
          %1645 = vmatpush2.msra.mxu0 0.0
          %1646 = vmatprep.mubr.f32.mxu0 0.0
          %1647 = vmatmul.mubr.f32.gmra.mxu0 %v1571
          %v1648 = vpop.f32.mrf.mxu0
          %v1649 = vadd.f32 %v1553, %v1648
          %v1650 = vpop.f32.mrf.mxu0
          %1651 = vmatprep.mubr.f32.mxu0 0.0
          %1652 = vmatmul.mubr.f32.gmra.mxu0 %v1574
          %v1653 = vpop.f32.mrf.mxu0
          %v1654 = vadd.f32 %v1558, %v1653
          %v1655 = vpop.f32.mrf.mxu0
          %1656 = vmatprep.mubr.f32.mxu0 0.0
          %1657 = vmatmul.mubr.f32.gmra.mxu0 %v1577
          %v1658 = vpop.f32.mrf.mxu0
          %v1659 = vadd.f32 %v1563, %v1658
          %v1660 = vpop.f32.mrf.mxu0
          %1661 = vmatprep.mubr.f32.mxu0 0.0
          %1662 = vmatmul.mubr.f32.gmra.mxu0 %v1580
          %v1663 = vpop.f32.mrf.mxu0
          %v1664 = vadd.f32 %v1568, %v1663
          %v1665 = vpop.f32.mrf.mxu0
          %1666 = vdwg.mxu0
          %v1667 = vmax.f32 %v1649, 0.0
          %v1668 = vmax.f32 %v1654, 0.0
          %v1669 = vmax.f32 %v1659, 0.0
          %v1670 = vmax.f32 %v1664, 0.0
          %v1671 = vld [vmem:[%s10] sm:$0xff]
          %v1672 = vld [vmem:[%s10 + $0x8] sm:$0xff]
          %v1673 = vld [vmem:[%s10 + $0x10] sm:$0xff]
          %v1674 = vld [vmem:[%s10 + $0x18] sm:$0xff]
          %v1675 = vld [vmem:[%s10 + $0x20] sm:$0xff]
          %v1676 = vld [vmem:[%s10 + $0x28] sm:$0xff]
          %v1677 = vld [vmem:[%s10 + $0x30] sm:$0xff]
          %v1678 = vld [vmem:[%s10 + $0x38] sm:$0xff]
          %v1679 = vld [vmem:[%s10 + $0x40] sm:$0xff]
          %v1680 = vld [vmem:[%s10 + $0x48] sm:$0xff]
          %v1681 = vld [vmem:[%s10 + $0x50] sm:$0xff]
          %v1682 = vld [vmem:[%s10 + $0x58] sm:$0xff]
          %v1683 = vld [vmem:[%s10 + $0x60] sm:$0xff]
          %v1684 = vld [vmem:[%s10 + $0x68] sm:$0xff]
          %v1685 = vld [vmem:[%s10 + $0x70] sm:$0xff]
          %v1686 = vld [vmem:[%s10 + $0x78] sm:$0xff]
          %v1687 = vld [vmem:[%s10 + $0x80] sm:$0xff]
          %v1688 = vld [vmem:[%s10 + $0x88] sm:$0xff]
          %v1689 = vld [vmem:[%s10 + $0x90] sm:$0xff]
          %v1690 = vld [vmem:[%s10 + $0x98] sm:$0xff]
          %v1691 = vld [vmem:[%s11] sm:$0xff]
          %v1692 = vld [vmem:[%s11 + $0x8] sm:$0xff]
          %v1693 = vld [vmem:[%s11 + $0x10] sm:$0xff]
          %v1694 = vld [vmem:[%s11 + $0x18] sm:$0xff]
          %v1695 = vld [vmem:[%s11 + $0x20] sm:$0xff]
          %v1696 = vld [vmem:[%s11 + $0x28] sm:$0xff]
          %v1697 = vld [vmem:[%s11 + $0x30] sm:$0xff]
          %v1698 = vld [vmem:[%s11 + $0x38] sm:$0xff]
          %v1699 = vld [vmem:[%s11 + $0x40] sm:$0xff]
          %v1700 = vld [vmem:[%s11 + $0x48] sm:$0xff]
          %v1701 = vld [vmem:[%s11 + $0x50] sm:$0xff]
          %v1702 = vld [vmem:[%s11 + $0x58] sm:$0xff]
          %v1703 = vld [vmem:[%s11 + $0x60] sm:$0xff]
          %v1704 = vld [vmem:[%s11 + $0x68] sm:$0xff]
          %v1705 = vld [vmem:[%s11 + $0x70] sm:$0xff]
          %v1706 = vld [vmem:[%s11 + $0x78] sm:$0xff]
          %v1707 = vld [vmem:[%s11 + $0x80] sm:$0xff]
          %v1708 = vld [vmem:[%s11 + $0x88] sm:$0xff]
          %v1709 = vld [vmem:[%s11 + $0x90] sm:$0xff]
          %v1710 = vld [vmem:[%s11 + $0x98] sm:$0xff]
          %1712 = vset.pattern.permute.xlu0 0
          %1713 = vperm.xlu0 %1712, %v1691
          %v1714 = vpop.permute.xlu0 %1713
          %1717 = vset.pattern.permute.xlu0 0
          %1718 = vperm.xlu0 %1717, %v1692
          %v1719 = vpop.permute.xlu0 %1718
          %1722 = vset.pattern.permute.xlu0 0
          %1723 = vperm.xlu0 %1722, %v1693
          %v1724 = vpop.permute.xlu0 %1723
          %1727 = vset.pattern.permute.xlu0 0
          %1728 = vperm.xlu0 %1727, %v1694
          %v1729 = vpop.permute.xlu0 %1728
          %1732 = vset.pattern.permute.xlu0 0
          %1733 = vperm.xlu0 %1732, %v1695
          %v1734 = vpop.permute.xlu0 %1733
          %1737 = vset.pattern.permute.xlu0 0
          %1738 = vperm.xlu0 %1737, %v1696
          %v1739 = vpop.permute.xlu0 %1738
          %1742 = vset.pattern.permute.xlu0 0
          %1743 = vperm.xlu0 %1742, %v1697
          %v1744 = vpop.permute.xlu0 %1743
          %1747 = vset.pattern.permute.xlu0 0
          %1748 = vperm.xlu0 %1747, %v1698
          %v1749 = vpop.permute.xlu0 %1748
          %1752 = vset.pattern.permute.xlu0 0
          %1753 = vperm.xlu0 %1752, %v1699
          %v1754 = vpop.permute.xlu0 %1753
          %1757 = vset.pattern.permute.xlu0 0
          %1758 = vperm.xlu0 %1757, %v1700
          %v1759 = vpop.permute.xlu0 %1758
          %1762 = vset.pattern.permute.xlu0 0
          %1763 = vperm.xlu0 %1762, %v1701
          %v1764 = vpop.permute.xlu0 %1763
          %1767 = vset.pattern.permute.xlu0 0
          %1768 = vperm.xlu0 %1767, %v1702
          %v1769 = vpop.permute.xlu0 %1768
          %1772 = vset.pattern.permute.xlu0 0
          %1773 = vperm.xlu0 %1772, %v1703
          %v1774 = vpop.permute.xlu0 %1773
          %1777 = vset.pattern.permute.xlu0 0
          %1778 = vperm.xlu0 %1777, %v1704
          %v1779 = vpop.permute.xlu0 %1778
          %1782 = vset.pattern.permute.xlu0 0
          %1783 = vperm.xlu0 %1782, %v1705
          %v1784 = vpop.permute.xlu0 %1783
          %1787 = vset.pattern.permute.xlu0 0
          %1788 = vperm.xlu0 %1787, %v1706
          %v1789 = vpop.permute.xlu0 %1788
          %1792 = vset.pattern.permute.xlu0 0
          %1793 = vperm.xlu0 %1792, %v1707
          %v1794 = vpop.permute.xlu0 %1793
          %1797 = vset.pattern.permute.xlu0 0
          %1798 = vperm.xlu0 %1797, %v1708
          %v1799 = vpop.permute.xlu0 %1798
          %1801 = vset.pattern.permute.xlu0 0
          %1802 = vperm.xlu0 %1801, %v1709
          %v1803 = vpop.permute.xlu0 %1802
          %1806 = vset.pattern.permute.xlu0 0
          %1807 = vperm.xlu0 %1806, %v1710
          %v1808 = vpop.permute.xlu0 %1807
          %vm1810 = vcmask 261120
          %v1812 = vsel %vm1810, %v1671, 0
          %v1815 = vsel %vm1810, %v1672, 0
          %v1818 = vsel %vm1810, %v1673, 0
          %v1821 = vsel %vm1810, %v1674, 0
          %v1824 = vsel %vm1810, %v1675, 0
          %v1827 = vsel %vm1810, %v1676, 0
          %v1830 = vsel %vm1810, %v1677, 0
          %v1833 = vsel %vm1810, %v1678, 0
          %v1836 = vsel %vm1810, %v1679, 0
          %v1839 = vsel %vm1810, %v1680, 0
          %v1842 = vsel %vm1810, %v1681, 0
          %v1845 = vsel %vm1810, %v1682, 0
          %v1848 = vsel %vm1810, %v1683, 0
          %v1851 = vsel %vm1810, %v1684, 0
          %v1854 = vsel %vm1810, %v1685, 0
          %v1857 = vsel %vm1810, %v1686, 0
          %v1860 = vsel %vm1810, %v1687, 0
          %v1863 = vsel %vm1810, %v1688, 0
          %v1866 = vsel %vm1810, %v1689, 0
          %v1869 = vsel %vm1810, %v1690, 0
          %1871 = vmatprep.subr.mxu0 0.0
          %1872 = vmatpush1.msra.mxu0 0.0
          %1873 = vmatprep.subr.mxu0 0.0
          %1874 = vmatpush1.msra.mxu0 0.0
          %1875 = vmatprep.subr.mxu0 0.0
          %1876 = vmatpush1.msra.mxu0 0.0
          %1877 = vmatprep.subr.mxu0 0.0
          %1878 = vmatpush1.msra.mxu0 0.0
          %1879 = vmatprep.subr.mxu0 0.0
          %1880 = vmatpush1.msra.mxu0 0.0
          %1881 = vmatprep.subr.mxu0 0.0
          %1882 = vmatpush1.msra.mxu0 0.0
          %1883 = vmatprep.subr.mxu0 0.0
          %1884 = vmatpush1.msra.mxu0 0.0
          %1885 = vmatprep.subr.mxu0 0.0
          %1886 = vmatpush1.msra.mxu0 0.0
          %1887 = vmatprep.subr.mxu0 0.0
          %1888 = vmatpush1.msra.mxu0 0.0
          %1889 = vmatprep.subr.mxu0 0.0
          %1890 = vmatpush1.msra.mxu0 0.0
          %1891 = vmatprep.subr.mxu0 0.0
          %1892 = vmatpush1.msra.mxu0 0.0
          %1893 = vmatprep.subr.mxu0 0.0
          %1894 = vmatpush1.msra.mxu0 0.0
          %1895 = vmatprep.subr.mxu0 0.0
          %1896 = vmatpush1.msra.mxu0 %v1670
          %1897 = vmatprep.subr.mxu0 0.0
          %1898 = vmatpush1.msra.mxu0 %v1669
          %1899 = vmatprep.subr.mxu0 0.0
          %1900 = vmatpush1.msra.mxu0 %v1668
          %1901 = vmatprep.subr.mxu0 0.0
          %1902 = vmatpush1.msra.mxu0 %v1667
          %1903 = vmatprep.subr.mxu0 0.0
          %1904 = vmatpush2.msra.mxu0 0.0
          %1905 = vmatprep.subr.mxu0 0.0
          %1906 = vmatpush2.msra.mxu0 0.0
          %1907 = vmatprep.subr.mxu0 0.0
          %1908 = vmatpush2.msra.mxu0 0.0
          %1909 = vmatprep.subr.mxu0 0.0
          %1910 = vmatpush2.msra.mxu0 0.0
          %1911 = vmatprep.subr.mxu0 0.0
          %1912 = vmatpush2.msra.mxu0 0.0
          %1913 = vmatprep.subr.mxu0 0.0
          %1914 = vmatpush2.msra.mxu0 0.0
          %1915 = vmatprep.subr.mxu0 0.0
          %1916 = vmatpush2.msra.mxu0 0.0
          %1917 = vmatprep.subr.mxu0 0.0
          %1918 = vmatpush2.msra.mxu0 0.0
          %1919 = vmatprep.subr.mxu0 0.0
          %1920 = vmatpush2.msra.mxu0 0.0
          %1921 = vmatprep.subr.mxu0 0.0
          %1922 = vmatpush2.msra.mxu0 0.0
          %1923 = vmatprep.subr.mxu0 0.0
          %1924 = vmatpush2.msra.mxu0 0.0
          %1925 = vmatprep.subr.mxu0 0.0
          %1926 = vmatpush2.msra.mxu0 0.0
          %1927 = vmatprep.subr.mxu0 0.0
          %1928 = vmatpush2.msra.mxu0 0.0
          %1929 = vmatprep.subr.mxu0 0.0
          %1930 = vmatpush2.msra.mxu0 0.0
          %1931 = vmatprep.subr.mxu0 0.0
          %1932 = vmatpush2.msra.mxu0 0.0
          %1933 = vmatprep.subr.mxu0 0.0
          %1934 = vmatpush2.msra.mxu0 0.0
          %1935 = vmatprep.mubr.f32.mxu0 0.0
          %1936 = vmatmul.mubr.f32.gmra.mxu0 %v1812
          %v1937 = vpop.f32.mrf.mxu0
          %v1938 = vadd.f32 %v1714, %v1937
          %v1939 = vpop.f32.mrf.mxu0
          %1940 = vmatprep.mubr.f32.mxu0 0.0
          %1941 = vmatmul.mubr.f32.gmra.mxu0 %v1815
          %v1942 = vpop.f32.mrf.mxu0
          %v1943 = vadd.f32 %v1719, %v1942
          %v1944 = vpop.f32.mrf.mxu0
          %1945 = vmatprep.mubr.f32.mxu0 0.0
          %1946 = vmatmul.mubr.f32.gmra.mxu0 %v1818
          %v1947 = vpop.f32.mrf.mxu0
          %v1948 = vadd.f32 %v1724, %v1947
          %v1949 = vpop.f32.mrf.mxu0
          %1950 = vmatprep.mubr.f32.mxu0 0.0
          %1951 = vmatmul.mubr.f32.gmra.mxu0 %v1821
          %v1952 = vpop.f32.mrf.mxu0
          %v1953 = vadd.f32 %v1729, %v1952
          %v1954 = vpop.f32.mrf.mxu0
          %1955 = vmatprep.mubr.f32.mxu0 0.0
          %1956 = vmatmul.mubr.f32.gmra.mxu0 %v1824
          %v1957 = vpop.f32.mrf.mxu0
          %v1958 = vadd.f32 %v1734, %v1957
          %v1959 = vpop.f32.mrf.mxu0
          %1960 = vmatprep.mubr.f32.mxu0 0.0
          %1961 = vmatmul.mubr.f32.gmra.mxu0 %v1827
          %v1962 = vpop.f32.mrf.mxu0
          %v1963 = vadd.f32 %v1739, %v1962
          %v1964 = vpop.f32.mrf.mxu0
          %1965 = vmatprep.mubr.f32.mxu0 0.0
          %1966 = vmatmul.mubr.f32.gmra.mxu0 %v1830
          %v1967 = vpop.f32.mrf.mxu0
          %v1968 = vadd.f32 %v1744, %v1967
          %v1969 = vpop.f32.mrf.mxu0
          %1970 = vmatprep.mubr.f32.mxu0 0.0
          %1971 = vmatmul.mubr.f32.gmra.mxu0 %v1833
          %v1972 = vpop.f32.mrf.mxu0
          %v1973 = vadd.f32 %v1749, %v1972
          %v1974 = vpop.f32.mrf.mxu0
          %1975 = vmatprep.mubr.f32.mxu0 0.0
          %1976 = vmatmul.mubr.f32.gmra.mxu0 %v1836
          %v1977 = vpop.f32.mrf.mxu0
          %v1978 = vadd.f32 %v1754, %v1977
          %v1979 = vpop.f32.mrf.mxu0
          %1980 = vmatprep.mubr.f32.mxu0 0.0
          %1981 = vmatmul.mubr.f32.gmra.mxu0 %v1839
          %v1982 = vpop.f32.mrf.mxu0
          %v1983 = vadd.f32 %v1759, %v1982
          %v1984 = vpop.f32.mrf.mxu0
          %1985 = vmatprep.mubr.f32.mxu0 0.0
          %1986 = vmatmul.mubr.f32.gmra.mxu0 %v1842
          %v1987 = vpop.f32.mrf.mxu0
          %v1988 = vadd.f32 %v1764, %v1987
          %v1989 = vpop.f32.mrf.mxu0
          %1990 = vmatprep.mubr.f32.mxu0 0.0
          %1991 = vmatmul.mubr.f32.gmra.mxu0 %v1845
          %v1992 = vpop.f32.mrf.mxu0
          %v1993 = vadd.f32 %v1769, %v1992
          %v1994 = vpop.f32.mrf.mxu0
          %1995 = vmatprep.mubr.f32.mxu0 0.0
          %1996 = vmatmul.mubr.f32.gmra.mxu0 %v1848
          %v1997 = vpop.f32.mrf.mxu0
          %v1998 = vadd.f32 %v1774, %v1997
          %v1999 = vpop.f32.mrf.mxu0
          %2000 = vmatprep.mubr.f32.mxu0 0.0
          %2001 = vmatmul.mubr.f32.gmra.mxu0 %v1851
          %v2002 = vpop.f32.mrf.mxu0
          %v2003 = vadd.f32 %v1779, %v2002
          %v2004 = vpop.f32.mrf.mxu0
          %2005 = vmatprep.mubr.f32.mxu0 0.0
          %2006 = vmatmul.mubr.f32.gmra.mxu0 %v1854
          %v2007 = vpop.f32.mrf.mxu0
          %v2008 = vadd.f32 %v1784, %v2007
          %v2009 = vpop.f32.mrf.mxu0
          %2010 = vmatprep.mubr.f32.mxu0 0.0
          %2011 = vmatmul.mubr.f32.gmra.mxu0 %v1857
          %v2012 = vpop.f32.mrf.mxu0
          %v2013 = vadd.f32 %v1789, %v2012
          %v2014 = vpop.f32.mrf.mxu0
          %2015 = vmatprep.mubr.f32.mxu0 0.0
          %2016 = vmatmul.mubr.f32.gmra.mxu0 %v1860
          %v2017 = vpop.f32.mrf.mxu0
          %v2018 = vadd.f32 %v1794, %v2017
          %v2019 = vpop.f32.mrf.mxu0
          %2020 = vmatprep.mubr.f32.mxu0 0.0
          %2021 = vmatmul.mubr.f32.gmra.mxu0 %v1863
          %v2022 = vpop.f32.mrf.mxu0
          %v2023 = vpop.f32.mrf.mxu0
          %2024 = vmatprep.mubr.f32.mxu0 0.0
          %2025 = vmatmul.mubr.f32.gmra.mxu0 %v1866
          %v2026 = vpop.f32.mrf.mxu0
          %v2027 = vadd.f32 %v1803, %v2026
          %v2028 = vpop.f32.mrf.mxu0
          %2029 = vmatprep.mubr.f32.mxu0 0.0
          %2030 = vmatmul.mubr.f32.gmra.mxu0 %v1869
          %v2031 = vpop.f32.mrf.mxu0
          %v2032 = vadd.f32 %v1808, %v2031
          %v2033 = vpop.f32.mrf.mxu0
          %2034 = vdwg.mxu0
          %v2035 = vld [vmem:[%s12] sm:$0xff]
          %v2036 = vld [vmem:[%s12 + $0x8] sm:$0xff]
          %v2037 = vld [vmem:[%s12 + $0x10] sm:$0xff]
          %v2038 = vld [vmem:[%s12 + $0x18] sm:$0xff]
          %vm2039 = vcmask 64512
          %v2041 = vsel %vm2039, %v2035, 0
          %v2044 = vsel %vm2039, %v2036, 0
          %v2047 = vsel %vm2039, %v2037, 0
          %v2050 = vsel %vm2039, %v2038, 0
          %2052 = vmatprep.subr.mxu0 0.0
          %2053 = vmatpush1.msra.mxu0 0.0
          %2054 = vmatprep.subr.mxu0 0.0
          %2055 = vmatpush1.msra.mxu0 0.0
          %2056 = vmatprep.subr.mxu0 0.0
          %2057 = vmatpush1.msra.mxu0 0.0
          %2058 = vmatprep.subr.mxu0 0.0
          %2059 = vmatpush1.msra.mxu0 0.0
          %2060 = vmatprep.subr.mxu0 0.0
          %2061 = vmatpush1.msra.mxu0 0.0
          %2062 = vmatprep.subr.mxu0 0.0
          %2063 = vmatpush1.msra.mxu0 0.0
          %2064 = vmatprep.subr.mxu0 0.0
          %2065 = vmatpush1.msra.mxu0 0.0
          %2066 = vmatprep.subr.mxu0 0.0
          %2067 = vmatpush1.msra.mxu0 0.0
          %2068 = vmatprep.subr.mxu0 0.0
          %2069 = vmatpush1.msra.mxu0 0.0
          %2070 = vmatprep.subr.mxu0 0.0
          %2071 = vmatpush1.msra.mxu0 0.0
          %2072 = vmatprep.subr.mxu0 0.0
          %2073 = vmatpush1.msra.mxu0 0.0
          %2074 = vmatprep.subr.mxu0 0.0
          %2075 = vmatpush1.msra.mxu0 0.0
          %2076 = vmatprep.subr.mxu0 0.0
          %2077 = vmatpush1.msra.mxu0 0.0
          %2078 = vmatprep.subr.mxu0 0.0
          %2079 = vmatpush1.msra.mxu0 0.0
          %2080 = vmatprep.subr.mxu0 0.0
          %2081 = vmatpush1.msra.mxu0 0.0
          %2082 = vmatprep.subr.mxu0 0.0
          %2083 = vmatpush1.msra.mxu0 0.0
          %2084 = vmatprep.subr.mxu0 0.0
          %2085 = vmatpush2.msra.mxu0 0.0
          %2086 = vmatprep.subr.mxu0 0.0
          %2087 = vmatpush2.msra.mxu0 0.0
          %2088 = vmatprep.subr.mxu0 0.0
          %2089 = vmatpush2.msra.mxu0 0.0
          %2090 = vmatprep.subr.mxu0 0.0
          %2091 = vmatpush2.msra.mxu0 0.0
          %2092 = vmatprep.subr.mxu0 0.0
          %2093 = vmatpush2.msra.mxu0 0.0
          %2094 = vmatprep.subr.mxu0 0.0
          %2095 = vmatpush2.msra.mxu0 0.0
          %2096 = vmatprep.subr.mxu0 0.0
          %2097 = vmatpush2.msra.mxu0 0.0
          %2098 = vmatprep.subr.mxu0 0.0
          %2099 = vmatpush2.msra.mxu0 0.0
          %2100 = vmatprep.subr.mxu0 0.0
          %2101 = vmatpush2.msra.mxu0 0.0
          %2102 = vmatprep.subr.mxu0 0.0
          %2103 = vmatpush2.msra.mxu0 0.0
          %2104 = vmatprep.subr.mxu0 0.0
          %2105 = vmatpush2.msra.mxu0 0.0
          %2106 = vmatprep.subr.mxu0 0.0
          %2107 = vmatpush2.msra.mxu0 0.0
          %2108 = vmatprep.subr.mxu0 0.0
          %2109 = vmatpush2.msra.mxu0 0.0
          %2110 = vmatprep.subr.mxu0 0.0
          %2111 = vmatpush2.msra.mxu0 0.0
          %2112 = vmatprep.subr.mxu0 0.0
          %2113 = vmatpush2.msra.mxu0 0.0
          %2114 = vmatprep.subr.mxu0 0.0
          %2115 = vmatpush2.msra.mxu0 0.0
          %2116 = vmatprep.mubr.f32.mxu0 0.0
          %2117 = vmatmul.mubr.f32.gmra.mxu0 %v2041
          %v2118 = vpop.f32.mrf.mxu0
          %v2119 = vadd.f32 0.0, %v2118
          %v2120 = vpop.f32.mrf.mxu0
          %2121 = vmatprep.mubr.f32.mxu0 0.0
          %2122 = vmatmul.mubr.f32.gmra.mxu0 %v2044
          %v2123 = vpop.f32.mrf.mxu0
          %v2124 = vadd.f32 0.0, %v2123
          %v2125 = vpop.f32.mrf.mxu0
          %2126 = vmatprep.mubr.f32.mxu0 0.0
          %2127 = vmatmul.mubr.f32.gmra.mxu0 %v2047
          %v2128 = vpop.f32.mrf.mxu0
          %v2129 = vadd.f32 0.0, %v2128
          %v2130 = vpop.f32.mrf.mxu0
          %2131 = vmatprep.mubr.f32.mxu0 0.0
          %2132 = vmatmul.mubr.f32.gmra.mxu0 %v2050
          %v2133 = vpop.f32.mrf.mxu0
          %v2134 = vadd.f32 0.0, %v2133
          %v2135 = vpop.f32.mrf.mxu0
          %2136 = vdwg.mxu0
          %v2137 = vadd.f32 %v1938, %v2119
          %v2138 = vadd.f32 %v1943, %v2124
          %v2139 = vadd.f32 %v1948, %v2129
          %v2140 = vadd.f32 %v1953, %v2134
          %v2141 = vmul.f32 %v2137, 0.5
          %v2142 = vtanh.pop %v2141
          %v2143 = vadd.f32 %v2142, 1.0
          %v2144 = vmul.f32 %v2143, 0.5
          %v2145 = vmul.f32 %v2138, 0.5
          %v2146 = vtanh.pop %v2145
          %v2147 = vadd.f32 %v2146, 1.0
          %v2148 = vmul.f32 %v2147, 0.5
          %v2149 = vtanh.pop %v2139
          %v2150 = vmul.f32 %v2140, 0.5
          %v2151 = vtanh.pop %v2150
          %v2152 = vadd.f32 %v2151, 1.0
          %v2153 = vmul.f32 %v2152, 0.5
          %v2154 = vmul.f32 %v2148, 0.0
          %v2155 = vmul.f32 %v2144, %v2149
          %v2156 = vadd.f32 %v2154, %v2155
          %v2157 = vtanh.pop %v2156
          %v2158 = vmul.f32 %v2153, %v2157
          %2159 = vmatprep.subr.mxu0 0.0
          %2160 = vmatpush1.msra.mxu0 0.0
          %2161 = vmatprep.subr.mxu0 0.0
          %2162 = vmatpush1.msra.mxu0 0.0
          %2163 = vmatprep.subr.mxu0 0.0
          %2164 = vmatpush1.msra.mxu0 0.0
          %2165 = vmatprep.subr.mxu0 0.0
          %2166 = vmatpush1.msra.mxu0 0.0
          %2167 = vmatprep.subr.mxu0 0.0
          %2168 = vmatpush1.msra.mxu0 0.0
          %2169 = vmatprep.subr.mxu0 0.0
          %2170 = vmatpush1.msra.mxu0 0.0
          %2171 = vmatprep.subr.mxu0 0.0
          %2172 = vmatpush1.msra.mxu0 0.0
          %2173 = vmatprep.subr.mxu0 0.0
          %2174 = vmatpush1.msra.mxu0 0.0
          %2175 = vmatprep.subr.mxu0 0.0
          %2176 = vmatpush1.msra.mxu0 0.0
          %2177 = vmatprep.subr.mxu0 0.0
          %2178 = vmatpush1.msra.mxu0 0.0
          %2179 = vmatprep.subr.mxu0 0.0
          %2180 = vmatpush1.msra.mxu0 0.0
          %2181 = vmatprep.subr.mxu0 0.0
          %2182 = vmatpush1.msra.mxu0 0.0
          %2183 = vmatprep.subr.mxu0 0.0
          %2184 = vmatpush1.msra.mxu0 0.0
          %2185 = vmatprep.subr.mxu0 0.0
          %2186 = vmatpush1.msra.mxu0 0.0
          %2187 = vmatprep.subr.mxu0 0.0
          %2188 = vmatpush1.msra.mxu0 0.0
          %2189 = vmatprep.subr.mxu0 0.0
          %2190 = vmatpush1.msra.mxu0 %v2158
          %2191 = vmatprep.subr.mxu0 0.0
          %2192 = vmatpush2.msra.mxu0 0.0
          %2193 = vmatprep.subr.mxu0 0.0
          %2194 = vmatpush2.msra.mxu0 0.0
          %2195 = vmatprep.subr.mxu0 0.0
          %2196 = vmatpush2.msra.mxu0 0.0
          %2197 = vmatprep.subr.mxu0 0.0
          %2198 = vmatpush2.msra.mxu0 0.0
          %2199 = vmatprep.subr.mxu0 0.0
          %2200 = vmatpush2.msra.mxu0 0.0
          %2201 = vmatprep.subr.mxu0 0.0
          %2202 = vmatpush2.msra.mxu0 0.0
          %2203 = vmatprep.subr.mxu0 0.0
          %2204 = vmatpush2.msra.mxu0 0.0
          %2205 = vmatprep.subr.mxu0 0.0
          %2206 = vmatpush2.msra.mxu0 0.0
          %2207 = vmatprep.subr.mxu0 0.0
          %2208 = vmatpush2.msra.mxu0 0.0
          %2209 = vmatprep.subr.mxu0 0.0
          %2210 = vmatpush2.msra.mxu0 0.0
          %2211 = vmatprep.subr.mxu0 0.0
          %2212 = vmatpush2.msra.mxu0 0.0
          %2213 = vmatprep.subr.mxu0 0.0
          %2214 = vmatpush2.msra.mxu0 0.0
          %2215 = vmatprep.subr.mxu0 0.0
          %2216 = vmatpush2.msra.mxu0 0.0
          %2217 = vmatprep.subr.mxu0 0.0
          %2218 = vmatpush2.msra.mxu0 0.0
          %2219 = vmatprep.subr.mxu0 0.0
          %2220 = vmatpush2.msra.mxu0 0.0
          %2221 = vmatprep.subr.mxu0 0.0
          %2222 = vmatpush2.msra.mxu0 0.0
          %2223 = vmatprep.mubr.f32.mxu0 0.0
          %2224 = vmatmul.mubr.f32.gmra.mxu0 %v2041
          %v2225 = vpop.f32.mrf.mxu0
          %v2226 = vadd.f32 0.0, %v2225
          %v2227 = vpop.f32.mrf.mxu0
          %2228 = vmatprep.mubr.f32.mxu0 0.0
          %2229 = vmatmul.mubr.f32.gmra.mxu0 %v2044
          %v2230 = vpop.f32.mrf.mxu0
          %v2231 = vadd.f32 0.0, %v2230
          %v2232 = vpop.f32.mrf.mxu0
          %2233 = vmatprep.mubr.f32.mxu0 0.0
          %2234 = vmatmul.mubr.f32.gmra.mxu0 %v2047
          %v2235 = vpop.f32.mrf.mxu0
          %v2236 = vadd.f32 0.0, %v2235
          %v2237 = vpop.f32.mrf.mxu0
          %2238 = vmatprep.mubr.f32.mxu0 0.0
          %2239 = vmatmul.mubr.f32.gmra.mxu0 %v2050
          %v2240 = vpop.f32.mrf.mxu0
          %v2241 = vadd.f32 0.0, %v2240
          %v2242 = vpop.f32.mrf.mxu0
          %2243 = vdwg.mxu0
          %v2244 = vadd.f32 %v1958, %v2226
          %v2245 = vadd.f32 %v1963, %v2231
          %v2246 = vadd.f32 %v1968, %v2236
          %v2247 = vadd.f32 %v1973, %v2241
          %v2248 = vmul.f32 %v2244, 0.5
          %v2249 = vtanh.pop %v2248
          %v2250 = vadd.f32 %v2249, 1.0
          %v2251 = vmul.f32 %v2250, 0.5
          %v2252 = vmul.f32 %v2245, 0.5
          %v2253 = vtanh.pop %v2252
          %v2254 = vadd.f32 %v2253, 1.0
          %v2255 = vmul.f32 %v2254, 0.5
          %v2256 = vtanh.pop %v2246
          %v2257 = vmul.f32 %v2247, 0.5
          %v2258 = vtanh.pop %v2257
          %v2259 = vadd.f32 %v2258, 1.0
          %v2260 = vmul.f32 %v2259, 0.5
          %v2261 = vmul.f32 %v2255, %v2156
          %v2262 = vmul.f32 %v2251, %v2256
          %v2263 = vadd.f32 %v2261, %v2262
          %v2264 = vtanh.pop %v2263
          %v2265 = vmul.f32 %v2260, %v2264
          %2266 = vmatprep.subr.mxu0 0.0
          %2267 = vmatpush1.msra.mxu0 0.0
          %2268 = vmatprep.subr.mxu0 0.0
          %2269 = vmatpush1.msra.mxu0 0.0
          %2270 = vmatprep.subr.mxu0 0.0
          %2271 = vmatpush1.msra.mxu0 0.0
          %2272 = vmatprep.subr.mxu0 0.0
          %2273 = vmatpush1.msra.mxu0 0.0
          %2274 = vmatprep.subr.mxu0 0.0
          %2275 = vmatpush1.msra.mxu0 0.0
          %2276 = vmatprep.subr.mxu0 0.0
          %2277 = vmatpush1.msra.mxu0 0.0
          %2278 = vmatprep.subr.mxu0 0.0
          %2279 = vmatpush1.msra.mxu0 0.0
          %2280 = vmatprep.subr.mxu0 0.0
          %2281 = vmatpush1.msra.mxu0 0.0
          %2282 = vmatprep.subr.mxu0 0.0
          %2283 = vmatpush1.msra.mxu0 0.0
          %2284 = vmatprep.subr.mxu0 0.0
          %2285 = vmatpush1.msra.mxu0 0.0
          %2286 = vmatprep.subr.mxu0 0.0
          %2287 = vmatpush1.msra.mxu0 0.0
          %2288 = vmatprep.subr.mxu0 0.0
          %2289 = vmatpush1.msra.mxu0 0.0
          %2290 = vmatprep.subr.mxu0 0.0
          %2291 = vmatpush1.msra.mxu0 0.0
          %2292 = vmatprep.subr.mxu0 0.0
          %2293 = vmatpush1.msra.mxu0 0.0
          %2294 = vmatprep.subr.mxu0 0.0
          %2295 = vmatpush1.msra.mxu0 0.0
          %2296 = vmatprep.subr.mxu0 0.0
          %2297 = vmatpush1.msra.mxu0 %v2265
          %2298 = vmatprep.subr.mxu0 0.0
          %2299 = vmatpush2.msra.mxu0 0.0
          %2300 = vmatprep.subr.mxu0 0.0
          %2301 = vmatpush2.msra.mxu0 0.0
          %2302 = vmatprep.subr.mxu0 0.0
          %2303 = vmatpush2.msra.mxu0 0.0
          %2304 = vmatprep.subr.mxu0 0.0
          %2305 = vmatpush2.msra.mxu0 0.0
          %2306 = vmatprep.subr.mxu0 0.0
          %2307 = vmatpush2.msra.mxu0 0.0
          %2308 = vmatprep.subr.mxu0 0.0
          %2309 = vmatpush2.msra.mxu0 0.0
          %2310 = vmatprep.subr.mxu0 0.0
          %2311 = vmatpush2.msra.mxu0 0.0
          %2312 = vmatprep.subr.mxu0 0.0
          %2313 = vmatpush2.msra.mxu0 0.0
          %2314 = vmatprep.subr.mxu0 0.0
          %2315 = vmatpush2.msra.mxu0 0.0
          %2316 = vmatprep.subr.mxu0 0.0
          %2317 = vmatpush2.msra.mxu0 0.0
          %2318 = vmatprep.subr.mxu0 0.0
          %2319 = vmatpush2.msra.mxu0 0.0
          %2320 = vmatprep.subr.mxu0 0.0
          %2321 = vmatpush2.msra.mxu0 0.0
          %2322 = vmatprep.subr.mxu0 0.0
          %2323 = vmatpush2.msra.mxu0 0.0
          %2324 = vmatprep.subr.mxu0 0.0
          %2325 = vmatpush2.msra.mxu0 0.0
          %2326 = vmatprep.subr.mxu0 0.0
          %2327 = vmatpush2.msra.mxu0 0.0
          %2328 = vmatprep.subr.mxu0 0.0
          %2329 = vmatpush2.msra.mxu0 0.0
          %2330 = vmatprep.mubr.f32.mxu0 0.0
          %2331 = vmatmul.mubr.f32.gmra.mxu0 %v2041
          %v2332 = vpop.f32.mrf.mxu0
          %v2333 = vadd.f32 0.0, %v2332
          %v2334 = vpop.f32.mrf.mxu0
          %2335 = vmatprep.mubr.f32.mxu0 0.0
          %2336 = vmatmul.mubr.f32.gmra.mxu0 %v2044
          %v2337 = vpop.f32.mrf.mxu0
          %v2338 = vadd.f32 0.0, %v2337
          %v2339 = vpop.f32.mrf.mxu0
          %2340 = vmatprep.mubr.f32.mxu0 0.0
          %2341 = vmatmul.mubr.f32.gmra.mxu0 %v2047
          %v2342 = vpop.f32.mrf.mxu0
          %v2343 = vadd.f32 0.0, %v2342
          %v2344 = vpop.f32.mrf.mxu0
          %2345 = vmatprep.mubr.f32.mxu0 0.0
          %2346 = vmatmul.mubr.f32.gmra.mxu0 %v2050
          %v2347 = vpop.f32.mrf.mxu0
          %v2348 = vadd.f32 0.0, %v2347
          %v2349 = vpop.f32.mrf.mxu0
          %2350 = vdwg.mxu0
          %v2351 = vadd.f32 %v1978, %v2333
          %v2352 = vadd.f32 %v1983, %v2338
          %v2353 = vadd.f32 %v1988, %v2343
          %v2354 = vadd.f32 %v1993, %v2348
          %v2355 = vmul.f32 %v2351, 0.5
          %v2356 = vtanh.pop %v2355
          %v2357 = vadd.f32 %v2356, 1.0
          %v2358 = vmul.f32 %v2357, 0.5
          %v2359 = vmul.f32 %v2352, 0.5
          %v2360 = vtanh.pop %v2359
          %v2361 = vadd.f32 %v2360, 1.0
          %v2362 = vmul.f32 %v2361, 0.5
          %v2363 = vtanh.pop %v2353
          %v2364 = vmul.f32 %v2354, 0.5
          %v2365 = vtanh.pop %v2364
          %v2366 = vadd.f32 %v2365, 1.0
          %v2367 = vmul.f32 %v2366, 0.5
          %v2368 = vmul.f32 %v2362, %v2263
          %v2369 = vmul.f32 %v2358, %v2363
          %v2370 = vadd.f32 %v2368, %v2369
          %v2371 = vtanh.pop %v2370
          %v2372 = vmul.f32 %v2367, %v2371
          %2373 = vmatprep.subr.mxu0 0.0
          %2374 = vmatpush1.msra.mxu0 0.0
          %2375 = vmatprep.subr.mxu0 0.0
          %2376 = vmatpush1.msra.mxu0 0.0
          %2377 = vmatprep.subr.mxu0 0.0
          %2378 = vmatpush1.msra.mxu0 0.0
          %2379 = vmatprep.subr.mxu0 0.0
          %2380 = vmatpush1.msra.mxu0 0.0
          %2381 = vmatprep.subr.mxu0 0.0
          %2382 = vmatpush1.msra.mxu0 0.0
          %2383 = vmatprep.subr.mxu0 0.0
          %2384 = vmatpush1.msra.mxu0 0.0
          %2385 = vmatprep.subr.mxu0 0.0
          %2386 = vmatpush1.msra.mxu0 0.0
          %2387 = vmatprep.subr.mxu0 0.0
          %2388 = vmatpush1.msra.mxu0 0.0
          %2389 = vmatprep.subr.mxu0 0.0
          %2390 = vmatpush1.msra.mxu0 0.0
          %2391 = vmatprep.subr.mxu0 0.0
          %2392 = vmatpush1.msra.mxu0 0.0
          %2393 = vmatprep.subr.mxu0 0.0
          %2394 = vmatpush1.msra.mxu0 0.0
          %2395 = vmatprep.subr.mxu0 0.0
          %2396 = vmatpush1.msra.mxu0 0.0
          %2397 = vmatprep.subr.mxu0 0.0
          %2398 = vmatpush1.msra.mxu0 0.0
          %2399 = vmatprep.subr.mxu0 0.0
          %2400 = vmatpush1.msra.mxu0 0.0
          %2401 = vmatprep.subr.mxu0 0.0
          %2402 = vmatpush1.msra.mxu0 0.0
          %2403 = vmatprep.subr.mxu0 0.0
          %2404 = vmatpush1.msra.mxu0 %v2372
          %2405 = vmatprep.subr.mxu0 0.0
          %2406 = vmatpush2.msra.mxu0 0.0
          %2407 = vmatprep.subr.mxu0 0.0
          %2408 = vmatpush2.msra.mxu0 0.0
          %2409 = vmatprep.subr.mxu0 0.0
          %2410 = vmatpush2.msra.mxu0 0.0
          %2411 = vmatprep.subr.mxu0 0.0
          %2412 = vmatpush2.msra.mxu0 0.0
          %2413 = vmatprep.subr.mxu0 0.0
          %2414 = vmatpush2.msra.mxu0 0.0
          %2415 = vmatprep.subr.mxu0 0.0
          %2416 = vmatpush2.msra.mxu0 0.0
          %2417 = vmatprep.subr.mxu0 0.0
          %2418 = vmatpush2.msra.mxu0 0.0
          %2419 = vmatprep.subr.mxu0 0.0
          %2420 = vmatpush2.msra.mxu0 0.0
          %2421 = vmatprep.subr.mxu0 0.0
          %2422 = vmatpush2.msra.mxu0 0.0
          %2423 = vmatprep.subr.mxu0 0.0
          %2424 = vmatpush2.msra.mxu0 0.0
          %2425 = vmatprep.subr.mxu0 0.0
          %2426 = vmatpush2.msra.mxu0 0.0
          %2427 = vmatprep.subr.mxu0 0.0
          %2428 = vmatpush2.msra.mxu0 0.0
          %2429 = vmatprep.subr.mxu0 0.0
          %2430 = vmatpush2.msra.mxu0 0.0
          %2431 = vmatprep.subr.mxu0 0.0
          %2432 = vmatpush2.msra.mxu0 0.0
          %2433 = vmatprep.subr.mxu0 0.0
          %2434 = vmatpush2.msra.mxu0 0.0
          %2435 = vmatprep.subr.mxu0 0.0
          %2436 = vmatpush2.msra.mxu0 0.0
          %2437 = vmatprep.mubr.f32.mxu0 0.0
          %2438 = vmatmul.mubr.f32.gmra.mxu0 %v2041
          %v2439 = vpop.f32.mrf.mxu0
          %v2440 = vadd.f32 0.0, %v2439
          %v2441 = vpop.f32.mrf.mxu0
          %2442 = vmatprep.mubr.f32.mxu0 0.0
          %2443 = vmatmul.mubr.f32.gmra.mxu0 %v2044
          %v2444 = vpop.f32.mrf.mxu0
          %v2445 = vadd.f32 0.0, %v2444
          %v2446 = vpop.f32.mrf.mxu0
          %2447 = vmatprep.mubr.f32.mxu0 0.0
          %2448 = vmatmul.mubr.f32.gmra.mxu0 %v2047
          %v2449 = vpop.f32.mrf.mxu0
          %v2450 = vadd.f32 0.0, %v2449
          %v2451 = vpop.f32.mrf.mxu0
          %2452 = vmatprep.mubr.f32.mxu0 0.0
          %2453 = vmatmul.mubr.f32.gmra.mxu0 %v2050
          %v2454 = vpop.f32.mrf.mxu0
          %v2455 = vadd.f32 0.0, %v2454
          %v2456 = vpop.f32.mrf.mxu0
          %2457 = vdwg.mxu0
          %v2458 = vadd.f32 %v1998, %v2440
          %v2459 = vadd.f32 %v2003, %v2445
          %v2460 = vadd.f32 %v2008, %v2450
          %v2461 = vadd.f32 %v2013, %v2455
          %v2462 = vmul.f32 %v2458, 0.5
          %v2463 = vtanh.pop %v2462
          %v2464 = vadd.f32 %v2463, 1.0
          %v2465 = vmul.f32 %v2464, 0.5
          %v2466 = vmul.f32 %v2459, 0.5
          %v2467 = vtanh.pop %v2466
          %v2468 = vadd.f32 %v2467, 1.0
          %v2469 = vmul.f32 %v2468, 0.5
          %v2470 = vtanh.pop %v2460
          %v2471 = vmul.f32 %v2461, 0.5
          %v2472 = vtanh.pop %v2471
          %v2473 = vadd.f32 %v2472, 1.0
          %v2474 = vmul.f32 %v2473, 0.5
          %v2475 = vmul.f32 %v2469, %v2370
          %v2476 = vmul.f32 %v2465, %v2470
          %v2477 = vadd.f32 %v2475, %v2476
          %v2478 = vtanh.pop %v2477
          %v2479 = vmul.f32 %v2474, %v2478
          %v2480 = vmul.f32 %v2018, 0.5
          %v2481 = vtanh.pop %v2480
          %v2482 = vadd.f32 %v2481, 1.0
          %v2483 = vmul.f32 %v2482, 0.5
          %v2484 = vtanh.pop %v2027
          %v2485 = vmul.f32 %v2032, 0.5
          %v2486 = vtanh.pop %v2485
          %v2487 = vadd.f32 %v2486, 1.0
          %v2488 = vmul.f32 %v2487, 0.5
          %v2489 = vmul.f32 %v2483, %v2484
          %v2490 = vtanh.pop %v2489
          %v2491 = vmul.f32 %v2488, %v2490
          %v2492 = vld [vmem:[%s13] sm:$0x1]
          %v2493 = vld [vmem:[%s14] sm:$0x1]
          %v2495 = vsel %vm2039, %v2493, 0
          %2497 = vmatprep.subr.mxu0 0.0
          %2498 = vmatpush1.msra.mxu0 0.0
          %2499 = vmatprep.subr.mxu0 0.0
          %2500 = vmatpush1.msra.mxu0 0.0
          %2501 = vmatprep.subr.mxu0 0.0
          %2502 = vmatpush1.msra.mxu0 0.0
          %2503 = vmatprep.subr.mxu0 0.0
          %2504 = vmatpush1.msra.mxu0 0.0
          %2505 = vmatprep.subr.mxu0 0.0
          %2506 = vmatpush1.msra.mxu0 0.0
          %2507 = vmatprep.subr.mxu0 0.0
          %2508 = vmatpush1.msra.mxu0 0.0
          %2509 = vmatprep.subr.mxu0 0.0
          %2510 = vmatpush1.msra.mxu0 0.0
          %2511 = vmatprep.subr.mxu0 0.0
          %2512 = vmatpush1.msra.mxu0 0.0
          %2513 = vmatprep.subr.mxu0 0.0
          %2514 = vmatpush1.msra.mxu0 0.0
          %2515 = vmatprep.subr.mxu0 0.0
          %2516 = vmatpush1.msra.mxu0 0.0
          %2517 = vmatprep.subr.mxu0 0.0
          %2518 = vmatpush1.msra.mxu0 0.0
          %2519 = vmatprep.subr.mxu0 0.0
          %2520 = vmatpush1.msra.mxu0 0.0
          %2521 = vmatprep.subr.mxu0 0.0
          %2522 = vmatpush1.msra.mxu0 0.0
          %2523 = vmatprep.subr.mxu0 0.0
          %2524 = vmatpush1.msra.mxu0 0.0
          %2525 = vmatprep.subr.mxu0 0.0
          %2526 = vmatpush1.msra.mxu0 0.0
          %2527 = vmatprep.subr.mxu0 0.0
          %2528 = vmatpush1.msra.mxu0 %v2491
          %2529 = vmatprep.subr.mxu0 0.0
          %2530 = vmatpush2.msra.mxu0 0.0
          %2531 = vmatprep.subr.mxu0 0.0
          %2532 = vmatpush2.msra.mxu0 0.0
          %2533 = vmatprep.subr.mxu0 0.0
          %2534 = vmatpush2.msra.mxu0 0.0
          %2535 = vmatprep.subr.mxu0 0.0
          %2536 = vmatpush2.msra.mxu0 0.0
          %2537 = vmatprep.subr.mxu0 0.0
          %2538 = vmatpush2.msra.mxu0 0.0
          %2539 = vmatprep.subr.mxu0 0.0
          %2540 = vmatpush2.msra.mxu0 0.0
          %2541 = vmatprep.subr.mxu0 0.0
          %2542 = vmatpush2.msra.mxu0 0.0
          %2543 = vmatprep.subr.mxu0 0.0
          %2544 = vmatpush2.msra.mxu0 0.0
          %2545 = vmatprep.subr.mxu0 0.0
          %2546 = vmatpush2.msra.mxu0 0.0
          %2547 = vmatprep.subr.mxu0 0.0
          %2548 = vmatpush2.msra.mxu0 0.0
          %2549 = vmatprep.subr.mxu0 0.0
          %2550 = vmatpush2.msra.mxu0 0.0
          %2551 = vmatprep.subr.mxu0 0.0
          %2552 = vmatpush2.msra.mxu0 0.0
          %2553 = vmatprep.subr.mxu0 0.0
          %2554 = vmatpush2.msra.mxu0 0.0
          %2555 = vmatprep.subr.mxu0 0.0
          %2556 = vmatpush2.msra.mxu0 0.0
          %2557 = vmatprep.subr.mxu0 0.0
          %2558 = vmatpush2.msra.mxu0 0.0
          %2559 = vmatprep.subr.mxu0 0.0
          %2560 = vmatpush2.msra.mxu0 0.0
          %2561 = vmatprep.mubr.f32.mxu0 0.0
          %2562 = vmatmul.mubr.f32.gmra.mxu0 %v2495
          %v2563 = vpop.f32.mrf.mxu0
          %v2564 = vadd.f32 0.0, %v2563
          %v2565 = vpop.f32.mrf.mxu0
          %2566 = vdwg.mxu0
          %v2568 = vsel %vm2039, %v2492, 0
          %2570 = vmatprep.subr.mxu0 0.0
          %2571 = vmatpush1.msra.mxu0 0.0
          %2572 = vmatprep.subr.mxu0 0.0
          %2573 = vmatpush1.msra.mxu0 0.0
          %2574 = vmatprep.subr.mxu0 0.0
          %2575 = vmatpush1.msra.mxu0 0.0
          %2576 = vmatprep.subr.mxu0 0.0
          %2577 = vmatpush1.msra.mxu0 0.0
          %2578 = vmatprep.subr.mxu0 0.0
          %2579 = vmatpush1.msra.mxu0 0.0
          %2580 = vmatprep.subr.mxu0 0.0
          %2581 = vmatpush1.msra.mxu0 0.0
          %2582 = vmatprep.subr.mxu0 0.0
          %2583 = vmatpush1.msra.mxu0 0.0
          %2584 = vmatprep.subr.mxu0 0.0
          %2585 = vmatpush1.msra.mxu0 0.0
          %2586 = vmatprep.subr.mxu0 0.0
          %2587 = vmatpush1.msra.mxu0 0.0
          %2588 = vmatprep.subr.mxu0 0.0
          %2589 = vmatpush1.msra.mxu0 0.0
          %2590 = vmatprep.subr.mxu0 0.0
          %2591 = vmatpush1.msra.mxu0 0.0
          %2592 = vmatprep.subr.mxu0 0.0
          %2593 = vmatpush1.msra.mxu0 0.0
          %2594 = vmatprep.subr.mxu0 0.0
          %2595 = vmatpush1.msra.mxu0 0.0
          %2596 = vmatprep.subr.mxu0 0.0
          %2597 = vmatpush1.msra.mxu0 0.0
          %2598 = vmatprep.subr.mxu0 0.0
          %2599 = vmatpush1.msra.mxu0 0.0
          %2600 = vmatprep.subr.mxu0 0.0
          %2601 = vmatpush1.msra.mxu0 %v2479
          %2602 = vmatprep.subr.mxu0 0.0
          %2603 = vmatpush2.msra.mxu0 0.0
          %2604 = vmatprep.subr.mxu0 0.0
          %2605 = vmatpush2.msra.mxu0 0.0
          %2606 = vmatprep.subr.mxu0 0.0
          %2607 = vmatpush2.msra.mxu0 0.0
          %2608 = vmatprep.subr.mxu0 0.0
          %2609 = vmatpush2.msra.mxu0 0.0
          %2610 = vmatprep.subr.mxu0 0.0
          %2611 = vmatpush2.msra.mxu0 0.0
          %2612 = vmatprep.subr.mxu0 0.0
          %2613 = vmatpush2.msra.mxu0 0.0
          %2614 = vmatprep.subr.mxu0 0.0
          %2615 = vmatpush2.msra.mxu0 0.0
          %2616 = vmatprep.subr.mxu0 0.0
          %2617 = vmatpush2.msra.mxu0 0.0
          %2618 = vmatprep.subr.mxu0 0.0
          %2619 = vmatpush2.msra.mxu0 0.0
          %2620 = vmatprep.subr.mxu0 0.0
          %2621 = vmatpush2.msra.mxu0 0.0
          %2622 = vmatprep.subr.mxu0 0.0
          %2623 = vmatpush2.msra.mxu0 0.0
          %2624 = vmatprep.subr.mxu0 0.0
          %2625 = vmatpush2.msra.mxu0 0.0
          %2626 = vmatprep.subr.mxu0 0.0
          %2627 = vmatpush2.msra.mxu0 0.0
          %2628 = vmatprep.subr.mxu0 0.0
          %2629 = vmatpush2.msra.mxu0 0.0
          %2630 = vmatprep.subr.mxu0 0.0
          %2631 = vmatpush2.msra.mxu0 0.0
          %2632 = vmatprep.subr.mxu0 0.0
          %2633 = vmatpush2.msra.mxu0 0.0
          %2634 = vmatprep.mubr.f32.mxu0 0.0
          %2635 = vmatmul.mubr.f32.gmra.mxu0 %v2568
          %v2636 = vpop.f32.mrf.mxu0
          %v2637 = vadd.f32 %v2564, %v2636
          %v2638 = vpop.f32.mrf.mxu0
          %2639 = vdwg.mxu0
          %v2640 = vld [vmem:[#allocation4] sm:$0x1]
          %2642 = vset.pattern.permute.xlu0 0
          %2643 = vperm.xlu0 %2642, %v2640
          %v2644 = vpop.permute.xlu0 %2643
          %v2646 = vlaneseq
          %v2647 = vshrl.u32 %v2646, 7
          %v2648 = vsub.s32 0, %v2647
          %v2649 = vrot.slane %v2644, %v2648
          %v2650 = vadd.f32 %v2637, %v2649
          %v2651 = vmul.f32 %v2650, 0.5
          %v2652 = vtanh.pop %v2651
          %v2653 = vadd.f32 %v2652, 1.0
          %v2654 = vmul.f32 %v2653, 0.5
          %vm2655 = vcmask 57344
          %2656 = vst.msk [vmem:[%s540] sm:$0x1] %vm2655, %v2654
        $region96: #{tpu_custom_call.1} parent=83 // pred_fallthru
          _
        %s2657 = sand.u32 %s400, 1
        %s2658 = scalar_lea.sflag [#allocation6], %s2657
        %s2659 = sand.u32 %s400, 1
        %s2660 = scalar_lea.vmem [#allocation5], %s2659
        // Predicated region
        $region97: #{tpu_custom_call.1} parent=83 // pred_check
          %p2661 = pneg %p410
        $region98: #{tpu_custom_call.1} parent=83 // pred_check_branch
          %2663 = sbr.rel (%p2661) target = $region100
        $region99: #{tpu_custom_call.1} parent=83 // pred_region
          %s2665 = ssub.s32 16, 16
          %2666 = vsyncadd %s2658, %s2665
          %s2667 = sadd.s32 %s37, %s36
          %s2668 = smul.addr %s2667, 16
          %s2669 = scalar_lea.hbm %s16, %s2668
          %s2671 = sshll.u32 %s2660, 4
          %s2672 = int_to_ptr.vmem [resolvable:$true] %s2671
          %2674 = dma.vmem_to_hbm [thread:$0]  %s2672, 16, %s2669, %s2658
        $region100: #{tpu_custom_call.1} parent=83 // pred_fallthru
          _
      $region84: #{tpu_custom_call.1} parent=5 // pred_fallthru
        _
      %p2675 = scmp.le.s32.totalorder 2, %s27
      // Predicated region
      $region101: #{tpu_custom_call.1} parent=5 // pred_check
        %p2676 = pneg %p2675
      $region102: #{tpu_custom_call.1} parent=5 // pred_check_branch
        %2678 = sbr.rel (%p2676) target = $region104
      $region103: #{tpu_custom_call.1} parent=5 // pred_region
        %s2679 = ssub.s32 %s27, 2
        // Predicated region
        $region105: #{tpu_custom_call.1} parent=103 // pred_check
          %p2680 = pneg %p416
        $region106: #{tpu_custom_call.1} parent=103 // pred_check_branch
          %2682 = sbr.rel (%p2680) target = $region108
        $region107: #{tpu_custom_call.1} parent=103 // pred_region
          %s2683 = sand.u32 %s401, 1
          %s2684 = scalar_lea.sflag [#allocation6], %s2683
          %s2685 = sand.u32 %s401, 1
          %s2686 = scalar_lea.vmem [#allocation5], %s2685
          %2687 = dma.done %s2684, 16
        $region108: #{tpu_custom_call.1} parent=103 // pred_fallthru
          _
      $region104: #{tpu_custom_call.1} parent=5 // pred_fallthru
        _
    $region6: #{tpu_custom_call.1} parent=1 // loop_footer
      %s31 = sadd.s32 1, %s27
    $region7: #{tpu_custom_call.1} parent=1 // loop_footer_branch
      %26 = sbr.rel target = $region3
    $region8: #{tpu_custom_call.1} parent=1 // loop_exit
      _
    %2688 = vsyncpa [#allocation6], 1
    %s2689 = scalar_lea.sflag [#allocation6], 1
    %2690 = vsyncpa %s2689, 1

</llo_original>
